<compile_context>
chip_gen: v6e
topology: v6e:2x2x1
jax: 0.10.0
libtpu: 0.0.40
codegen_flags: <defaults>
</compile_context>

<pallas_src>
import numpy as np
import jax
import jax.numpy as jnp
from jax.experimental import pallas as pl
from jax.experimental.pallas import tpu as pltpu

LEAKY_SLOPE = 0.01   # nn.LeakyReLU() default
BN_EPS = 1e-5        # nn.BatchNorm2d default
N_STAGES = 5         # five PixelShuffle(2) stages: 4x4 -> 128x128


def _stage_offsets(k):
    """Lane-XOR offsets BN stage k reduces over (d-bit layout: bits 9..5 = i1..i5,
    bits 4..0 = j1..j5, bits >= 10 = final output channel)."""
    return [1 << (9 - t) for t in range(k)] + [1 << (4 - t) for t in range(k)]


# ----------------------------------------------------------------- kernel ----

def _fused_generator_kernel(lhs_ref, w_ref, gamma_ref, beta_ref, o_ref):
    M, C = o_ref.shape                      # (16*N, 16*ngf)

    # ConvTranspose2d == one MXU matmul (bf16 in, f32 accumulate).  The block-diagonal
    # LHS / pre-packed RHS make it emit the working slab directly: rows = (h0, w0, n),
    # cols = lane-dense permuted channel axis d.
    x = jnp.dot(lhs_ref[...], w_ref[...], preferred_element_type=jnp.float32)

    # Roll-direction-agnostic partner masks for the segmented XOR butterflies.
    lane = jax.lax.broadcasted_iota(jnp.int32, (1, C), 1)
    all_offsets = sorted({o for k in range(N_STAGES) for o in _stage_offsets(k)})
    fwd_is_partner = {
        o: (pltpu.roll(lane, o, 1) ^ lane) == o for o in all_offsets
    }

    def group_sum(row, offsets):
        # After processing all offsets, every lane holds the sum of `row` over its
        # XOR-group (the lanes sharing this BN stage's channel).
        out = row
        for o in offsets:
            fwd = pltpu.roll(out, o, 1)
            bwd = pltpu.roll(out, C - o, 1)
            out = out + jnp.where(fwd_is_partner[o], fwd, bwd)
        return out

    # Five fused (BatchNorm2d -> LeakyReLU) stages.  PixelShuffle never moves data:
    # it only changes which lanes share a BN channel (group size 4**k).
    for k in range(N_STAGES):
        offs = _stage_offsets(k)
        count = M * (4 ** k)                           # N * H_k * W_k per channel
        mean = group_sum(jnp.sum(x, axis=0, keepdims=True), offs) * (1.0 / count)
        xc = x - mean
        var = group_sum(jnp.sum(xc * xc, axis=0, keepdims=True), offs) * (1.0 / count)
        inv = jax.lax.rsqrt(var + BN_EPS)
        y = xc * (inv * gamma_ref[k:k + 1, :]) + beta_ref[k:k + 1, :]
        x = jnp.where(y >= 0.0, y, LEAKY_SLOPE * y)    # LeakyReLU(0.01)

    o_ref[...] = jnp.tanh(x)                           # fused nn.Tanh


# ------------------------------------------------------------ host packing ---

def _d_to_c0(C0):
    """Map kernel lane index d -> ConvTranspose output channel c0.

    d  bits (MSB..LSB): [c_out | i1 i2 i3 i4 i5 | j1 j2 j3 j4 j5]
    c0 bits            : [c_out | i5 j5 i4 j4 i3 j3 i2 j2 i1 j1]
    (i_s, j_s) are the sub-pixel offsets introduced by the s-th PixelShuffle(2).
    """
    d = np.arange(C0)
    c0 = (d >> 10) << 10
    dl = d & 1023
    for s in range(1, 6):
        i_s = (dl >> (10 - s)) & 1
        j_s = (dl >> (5 - s)) & 1
        c0 = c0 + (i_s << (2 * s - 1)) + (j_s << (2 * s - 2))
    return c0


def pack_params(params, *, nz, ngf, nc):
    """One-time packing of the PyTorch-layout parameters for the fused kernel."""
    C0 = 16 * ngf
    assert ngf == 64 * nc, "PixelShuffle(2)x5 chain requires ngf == 64 * nc"
    d_to_c0 = _d_to_c0(C0)

    # RHS of the ConvT matmul: rows = (spatial position p = kh*4 + kw, nz), cols = d.
    w = params["w_convt"]                                     # (nz, C0, 4, 4)
    w3 = jnp.transpose(w, (2, 3, 0, 1)).reshape(16, nz, C0)   # [p, i, c0]
    w3 = w3[:, :, d_to_c0].reshape(16 * nz, C0).astype(jnp.bfloat16)

    # gamma/beta pre-broadcast to lane-dense rows: stage-k channel of lane d is c0(d) >> 2k.
    grows, brows = [], []
    for k in range(N_STAGES):
        idx = d_to_c0 >> (2 * k)
        grows.append(params[f"g{k}"][idx])
        brows.append(params[f"b{k}"][idx])
    return {
        "w3": w3,                                             # (16*nz, C0) bf16
        "gamma": jnp.stack(grows).astype(jnp.float32),        # (5, C0)
        "beta": jnp.stack(brows).astype(jnp.float32),         # (5, C0)
    }


# ---------------------------------------------------------------- forward ----

def ps_generator_forward(z, packed):
    """z: (N, nz, 1, 1) -> (N, nc, 128, 128); forward of PSGenerator."""
    n, nz = z.shape[0], z.shape[1]
    w3 = packed["w3"]
    C0 = w3.shape[1]
    nc = C0 // 1024
    M = 16 * n

    # Block-diagonal LHS: one matmul emits all 16 ConvT spatial positions as rows.
    z2 = z.reshape(n, nz).astype(jnp.bfloat16)
    lhs = jnp.kron(jnp.eye(16, dtype=jnp.bfloat16), z2)        # (16*N, 16*nz)

    slab = pl.pallas_call(
        _fused_generator_kernel,
        out_shape=jax.ShapeDtypeStruct((M, C0), jnp.float32),
        in_specs=[
            pl.BlockSpec((M, 16 * nz), lambda: (0, 0)),
            pl.BlockSpec((16 * nz, C0), lambda: (0, 0)),
            pl.BlockSpec((N_STAGES, C0), lambda: (0, 0)),
            pl.BlockSpec((N_STAGES, C0), lambda: (0, 0)),
        ],
        out_specs=pl.BlockSpec((M, C0), lambda: (0, 0)),
    )(lhs, w3, packed["gamma"], packed["beta"])

    # Undo the bit-permutation: rows = (h0, w0, n), cols = (c_out, i-block, j-block).
    out = slab.reshape(4, 4, n, nc, 32, 32).transpose(2, 3, 0, 4, 1, 5)
    return out.reshape(n, nc, 128, 128)


# --------------------------------------------------------------- reference ---

def reference_forward(z, params):
    """Pure-JAX mirror of the PyTorch graph (training-mode BN), using the same
    bf16-rounded z / weight as the kernel so the comparison is apples-to-apples."""
    n, nz = z.shape[0], z.shape[1]
    w = params["w_convt"].astype(jnp.bfloat16).astype(jnp.float32)
    z2 = z.reshape(n, nz).astype(jnp.bfloat16).astype(jnp.float32)
    x = jnp.einsum("ni,iokl->nokl", z2, w)       # ConvTranspose2d on a 1x1 input

    def bn_lrelu(x, g, b):
        m = jnp.mean(x, axis=(0, 2, 3), keepdims=True)
        v = jnp.mean((x - m) ** 2, axis=(0, 2, 3), keepdims=True)
        y = (x - m) * jax.lax.rsqrt(v + BN_EPS)
        y = y * g.reshape(1, -1, 1, 1) + b.reshape(1, -1, 1, 1)
        return jnp.where(y >= 0, y, LEAKY_SLOPE * y)

    def pixel_shuffle(x, r=2):
        nn_, c, h, w_ = x.shape
        x = x.reshape(nn_, c // (r * r), r, r, h, w_)
        x = x.transpose(0, 1, 4, 2, 5, 3)
        return x.reshape(nn_, c // (r * r), h * r, w_ * r)

    for k in range(N_STAGES):
        x = bn_lrelu(x, params[f"g{k}"], params[f"b{k}"])
        x = pixel_shuffle(x)
    return jnp.tanh(x)


# --------------------------------------------------------------------- main --

if __name__ == "__main__":
    # L is unused in forward(); the PixelShuffle chain requires ngf == 64 * nc,
    # so the smallest consistent config is ngf=64, nc=1.
    L, nz, ngf, nc = 10, 8, 64, 1
    N = 2

    key = jax.random.PRNGKey(0)
    ks = jax.random.split(key, 12)
    z = jax.random.normal(ks[0], (N, nz, 1, 1), jnp.float32)

    params = {
        "w_convt": 0.02 * jax.random.normal(ks[1], (nz, ngf * 16, 4, 4), jnp.float32),
    }
    bn_channels = [ngf * 16, ngf * 4, ngf, ngf // 4, ngf // 16]
    for i, c in enumerate(bn_channels):
        params[f"g{i}"] = 1.0 + 0.1 * jax.random.normal(ks[2 + 2 * i], (c,), jnp.float32)
        params[f"b{i}"] = 0.1 * jax.random.normal(ks[3 + 2 * i], (c,), jnp.float32)

    packed = pack_params(params, nz=nz, ngf=ngf, nc=nc)     # one-time weight prep
    fwd = jax.jit(ps_generator_forward)

    out = jax.block_until_ready(fwd(z, packed))
    assert out.shape == (N, nc, 128, 128), out.shape
    assert bool(jnp.all(jnp.isfinite(out)))

    # Correctness check against a pure-JAX mirror of the PyTorch module.
    ref = jax.block_until_ready(jax.jit(reference_forward)(z, params))
    max_err = float(jnp.max(jnp.abs(out - ref)))
    assert max_err < 2e-2, f"mismatch vs reference: max |err| = {max_err}"

    print("KERNEL_OK")
</pallas_src>

<mosaic_0001>
module attributes {stable_mosaic.version = 11 : i64} {
  func.func @_fused_generator_kernel(%arg0: memref<32x128xbf16, #tpu.memory_space<vmem>>, %arg1: memref<128x1024xbf16, #tpu.memory_space<vmem>>, %arg2: memref<5x1024xf32, #tpu.memory_space<vmem>>, %arg3: memref<5x1024xf32, #tpu.memory_space<vmem>>, %arg4: memref<32x1024xf32, #tpu.memory_space<vmem>>) attributes {dimension_semantics = [], scalar_prefetch = 0 : i64, scratch_operands = 0 : i64, tpu.core_type = #tpu.core_type<tc>} {
    %c0 = arith.constant 0 : index
    %c0_0 = arith.constant 0 : index
    %0 = vector.load %arg0[%c0, %c0_0] : memref<32x128xbf16, #tpu.memory_space<vmem>>, vector<32x128xbf16>
    %c0_1 = arith.constant 0 : index
    %c0_2 = arith.constant 0 : index
    %1 = vector.load %arg1[%c0_1, %c0_2] : memref<128x1024xbf16, #tpu.memory_space<vmem>>, vector<128x1024xbf16>
    %cst = arith.constant dense<0.000000e+00> : vector<32x1024xf32>
    %2 = tpu.matmul %0, %1, %cst {dimension_numbers = #tpu.dot_dimension_numbers<[1], [0], [0], [1], [0, 0, 1, 1], [], []>} : vector<32x128xbf16>, vector<128x1024xbf16>, vector<32x1024xf32> -> vector<32x1024xf32>
    %3 = tpu.iota {dimensions = array<i32: 1>} : vector<1x1024xi32>
    %c2_i32 = arith.constant 2 : i32
    %4 = tpu.dynamic_rotate %3 by %c2_i32 dim 1 : vector<1x1024xi32>, i32 -> vector<1x1024xi32>
    %5 = arith.xori %4, %3 : vector<1x1024xi32>
    %c2_i32_3 = arith.constant 2 : i32
    %6 = vector.broadcast %c2_i32_3 : i32 to vector<1x1024xi32>
    %7 = arith.cmpi eq, %5, %6 : vector<1x1024xi32>
    %c4_i32 = arith.constant 4 : i32
    %8 = tpu.dynamic_rotate %3 by %c4_i32 dim 1 : vector<1x1024xi32>, i32 -> vector<1x1024xi32>
    %9 = arith.xori %8, %3 : vector<1x1024xi32>
    %c4_i32_4 = arith.constant 4 : i32
    %10 = vector.broadcast %c4_i32_4 : i32 to vector<1x1024xi32>
    %11 = arith.cmpi eq, %9, %10 : vector<1x1024xi32>
    %c8_i32 = arith.constant 8 : i32
    %12 = tpu.dynamic_rotate %3 by %c8_i32 dim 1 : vector<1x1024xi32>, i32 -> vector<1x1024xi32>
    %13 = arith.xori %12, %3 : vector<1x1024xi32>
    %c8_i32_5 = arith.constant 8 : i32
    %14 = vector.broadcast %c8_i32_5 : i32 to vector<1x1024xi32>
    %15 = arith.cmpi eq, %13, %14 : vector<1x1024xi32>
    %c16_i32 = arith.constant 16 : i32
    %16 = tpu.dynamic_rotate %3 by %c16_i32 dim 1 : vector<1x1024xi32>, i32 -> vector<1x1024xi32>
    %17 = arith.xori %16, %3 : vector<1x1024xi32>
    %c16_i32_6 = arith.constant 16 : i32
    %18 = vector.broadcast %c16_i32_6 : i32 to vector<1x1024xi32>
    %19 = arith.cmpi eq, %17, %18 : vector<1x1024xi32>
    %c64_i32 = arith.constant 64 : i32
    %20 = tpu.dynamic_rotate %3 by %c64_i32 dim 1 : vector<1x1024xi32>, i32 -> vector<1x1024xi32>
    %21 = arith.xori %20, %3 : vector<1x1024xi32>
    %c64_i32_7 = arith.constant 64 : i32
    %22 = vector.broadcast %c64_i32_7 : i32 to vector<1x1024xi32>
    %23 = arith.cmpi eq, %21, %22 : vector<1x1024xi32>
    %c128_i32 = arith.constant 128 : i32
    %24 = tpu.dynamic_rotate %3 by %c128_i32 dim 1 : vector<1x1024xi32>, i32 -> vector<1x1024xi32>
    %25 = arith.xori %24, %3 : vector<1x1024xi32>
    %c128_i32_8 = arith.constant 128 : i32
    %26 = vector.broadcast %c128_i32_8 : i32 to vector<1x1024xi32>
    %27 = arith.cmpi eq, %25, %26 : vector<1x1024xi32>
    %c256_i32 = arith.constant 256 : i32
    %28 = tpu.dynamic_rotate %3 by %c256_i32 dim 1 : vector<1x1024xi32>, i32 -> vector<1x1024xi32>
    %29 = arith.xori %28, %3 : vector<1x1024xi32>
    %c256_i32_9 = arith.constant 256 : i32
    %30 = vector.broadcast %c256_i32_9 : i32 to vector<1x1024xi32>
    %31 = arith.cmpi eq, %29, %30 : vector<1x1024xi32>
    %c512_i32 = arith.constant 512 : i32
    %32 = tpu.dynamic_rotate %3 by %c512_i32 dim 1 : vector<1x1024xi32>, i32 -> vector<1x1024xi32>
    %33 = arith.xori %32, %3 : vector<1x1024xi32>
    %c512_i32_10 = arith.constant 512 : i32
    %34 = vector.broadcast %c512_i32_10 : i32 to vector<1x1024xi32>
    %35 = arith.cmpi eq, %33, %34 : vector<1x1024xi32>
    %cst_11 = arith.constant dense<0.000000e+00> : vector<1024xf32>
    %36 = vector.multi_reduction <add>, %2, %cst_11 [0] : vector<32x1024xf32> to vector<1024xf32>
    %37 = vector.shape_cast %36 : vector<1024xf32> to vector<1x1024xf32>
    %cst_12 = arith.constant 3.125000e-02 : f32
    %38 = vector.broadcast %cst_12 : f32 to vector<1x1024xf32>
    %39 = arith.mulf %37, %38 : vector<1x1024xf32>
    %40 = vector.broadcast %39 : vector<1x1024xf32> to vector<32x1024xf32>
    %41 = arith.subf %2, %40 : vector<32x1024xf32>
    %42 = arith.mulf %41, %41 : vector<32x1024xf32>
    %cst_13 = arith.constant dense<0.000000e+00> : vector<1024xf32>
    %43 = vector.multi_reduction <add>, %42, %cst_13 [0] : vector<32x1024xf32> to vector<1024xf32>
    %44 = vector.shape_cast %43 : vector<1024xf32> to vector<1x1024xf32>
    %cst_14 = arith.constant 3.125000e-02 : f32
    %45 = vector.broadcast %cst_14 : f32 to vector<1x1024xf32>
    %46 = arith.mulf %44, %45 : vector<1x1024xf32>
    %cst_15 = arith.constant 9.99999974E-6 : f32
    %47 = vector.broadcast %cst_15 : f32 to vector<1x1024xf32>
    %48 = arith.addf %46, %47 : vector<1x1024xf32>
    %49 = math.rsqrt %48 : vector<1x1024xf32>
    %c0_16 = arith.constant 0 : index
    %c0_17 = arith.constant 0 : index
    %50 = vector.load %arg2[%c0_16, %c0_17] : memref<5x1024xf32, #tpu.memory_space<vmem>>, vector<1x1024xf32>
    %51 = arith.mulf %49, %50 : vector<1x1024xf32>
    %52 = vector.broadcast %51 : vector<1x1024xf32> to vector<32x1024xf32>
    %53 = arith.mulf %41, %52 : vector<32x1024xf32>
    %c0_18 = arith.constant 0 : index
    %c0_19 = arith.constant 0 : index
    %54 = vector.load %arg3[%c0_18, %c0_19] : memref<5x1024xf32, #tpu.memory_space<vmem>>, vector<1x1024xf32>
    %55 = vector.broadcast %54 : vector<1x1024xf32> to vector<32x1024xf32>
    %56 = arith.addf %53, %55 : vector<32x1024xf32>
    %cst_20 = arith.constant 0.000000e+00 : f32
    %57 = vector.broadcast %cst_20 : f32 to vector<32x1024xf32>
    %58 = arith.cmpf oge, %56, %57 : vector<32x1024xf32>
    %cst_21 = arith.constant 0.00999999977 : f32
    %59 = vector.broadcast %cst_21 : f32 to vector<32x1024xf32>
    %60 = arith.mulf %59, %56 : vector<32x1024xf32>
    %61 = arith.select %58, %56, %60 : vector<32x1024xi1>, vector<32x1024xf32>
    %cst_22 = arith.constant dense<0.000000e+00> : vector<1024xf32>
    %62 = vector.multi_reduction <add>, %61, %cst_22 [0] : vector<32x1024xf32> to vector<1024xf32>
    %63 = vector.shape_cast %62 : vector<1024xf32> to vector<1x1024xf32>
    %c512_i32_23 = arith.constant 512 : i32
    %64 = tpu.dynamic_rotate %63 by %c512_i32_23 dim 1 : vector<1x1024xf32>, i32 -> vector<1x1024xf32>
    %c512_i32_24 = arith.constant 512 : i32
    %65 = tpu.dynamic_rotate %63 by %c512_i32_24 dim 1 : vector<1x1024xf32>, i32 -> vector<1x1024xf32>
    %66 = arith.select %35, %64, %65 : vector<1x1024xi1>, vector<1x1024xf32>
    %67 = arith.addf %63, %66 : vector<1x1024xf32>
    %c16_i32_25 = arith.constant 16 : i32
    %68 = tpu.dynamic_rotate %67 by %c16_i32_25 dim 1 : vector<1x1024xf32>, i32 -> vector<1x1024xf32>
    %c1008_i32 = arith.constant 1008 : i32
    %69 = tpu.dynamic_rotate %67 by %c1008_i32 dim 1 : vector<1x1024xf32>, i32 -> vector<1x1024xf32>
    %70 = arith.select %19, %68, %69 : vector<1x1024xi1>, vector<1x1024xf32>
    %71 = arith.addf %67, %70 : vector<1x1024xf32>
    %cst_26 = arith.constant 7.812500e-03 : f32
    %72 = vector.broadcast %cst_26 : f32 to vector<1x1024xf32>
    %73 = arith.mulf %71, %72 : vector<1x1024xf32>
    %74 = vector.broadcast %73 : vector<1x1024xf32> to vector<32x1024xf32>
    %75 = arith.subf %61, %74 : vector<32x1024xf32>
    %76 = arith.mulf %75, %75 : vector<32x1024xf32>
    %cst_27 = arith.constant dense<0.000000e+00> : vector<1024xf32>
    %77 = vector.multi_reduction <add>, %76, %cst_27 [0] : vector<32x1024xf32> to vector<1024xf32>
    %78 = vector.shape_cast %77 : vector<1024xf32> to vector<1x1024xf32>
    %c512_i32_28 = arith.constant 512 : i32
    %79 = tpu.dynamic_rotate %78 by %c512_i32_28 dim 1 : vector<1x1024xf32>, i32 -> vector<1x1024xf32>
    %c512_i32_29 = arith.constant 512 : i32
    %80 = tpu.dynamic_rotate %78 by %c512_i32_29 dim 1 : vector<1x1024xf32>, i32 -> vector<1x1024xf32>
    %81 = arith.select %35, %79, %80 : vector<1x1024xi1>, vector<1x1024xf32>
    %82 = arith.addf %78, %81 : vector<1x1024xf32>
    %c16_i32_30 = arith.constant 16 : i32
    %83 = tpu.dynamic_rotate %82 by %c16_i32_30 dim 1 : vector<1x1024xf32>, i32 -> vector<1x1024xf32>
    %c1008_i32_31 = arith.constant 1008 : i32
    %84 = tpu.dynamic_rotate %82 by %c1008_i32_31 dim 1 : vector<1x1024xf32>, i32 -> vector<1x1024xf32>
    %85 = arith.select %19, %83, %84 : vector<1x1024xi1>, vector<1x1024xf32>
    %86 = arith.addf %82, %85 : vector<1x1024xf32>
    %cst_32 = arith.constant 7.812500e-03 : f32
    %87 = vector.broadcast %cst_32 : f32 to vector<1x1024xf32>
    %88 = arith.mulf %86, %87 : vector<1x1024xf32>
    %cst_33 = arith.constant 9.99999974E-6 : f32
    %89 = vector.broadcast %cst_33 : f32 to vector<1x1024xf32>
    %90 = arith.addf %88, %89 : vector<1x1024xf32>
    %91 = math.rsqrt %90 : vector<1x1024xf32>
    %c1 = arith.constant 1 : index
    %c0_34 = arith.constant 0 : index
    %92 = vector.load %arg2[%c1, %c0_34] : memref<5x1024xf32, #tpu.memory_space<vmem>>, vector<1x1024xf32>
    %93 = arith.mulf %91, %92 : vector<1x1024xf32>
    %94 = vector.broadcast %93 : vector<1x1024xf32> to vector<32x1024xf32>
    %95 = arith.mulf %75, %94 : vector<32x1024xf32>
    %c1_35 = arith.constant 1 : index
    %c0_36 = arith.constant 0 : index
    %96 = vector.load %arg3[%c1_35, %c0_36] : memref<5x1024xf32, #tpu.memory_space<vmem>>, vector<1x1024xf32>
    %97 = vector.broadcast %96 : vector<1x1024xf32> to vector<32x1024xf32>
    %98 = arith.addf %95, %97 : vector<32x1024xf32>
    %cst_37 = arith.constant 0.000000e+00 : f32
    %99 = vector.broadcast %cst_37 : f32 to vector<32x1024xf32>
    %100 = arith.cmpf oge, %98, %99 : vector<32x1024xf32>
    %cst_38 = arith.constant 0.00999999977 : f32
    %101 = vector.broadcast %cst_38 : f32 to vector<32x1024xf32>
    %102 = arith.mulf %101, %98 : vector<32x1024xf32>
    %103 = arith.select %100, %98, %102 : vector<32x1024xi1>, vector<32x1024xf32>
    %cst_39 = arith.constant dense<0.000000e+00> : vector<1024xf32>
    %104 = vector.multi_reduction <add>, %103, %cst_39 [0] : vector<32x1024xf32> to vector<1024xf32>
    %105 = vector.shape_cast %104 : vector<1024xf32> to vector<1x1024xf32>
    %c512_i32_40 = arith.constant 512 : i32
    %106 = tpu.dynamic_rotate %105 by %c512_i32_40 dim 1 : vector<1x1024xf32>, i32 -> vector<1x1024xf32>
    %c512_i32_41 = arith.constant 512 : i32
    %107 = tpu.dynamic_rotate %105 by %c512_i32_41 dim 1 : vector<1x1024xf32>, i32 -> vector<1x1024xf32>
    %108 = arith.select %35, %106, %107 : vector<1x1024xi1>, vector<1x1024xf32>
    %109 = arith.addf %105, %108 : vector<1x1024xf32>
    %c256_i32_42 = arith.constant 256 : i32
    %110 = tpu.dynamic_rotate %109 by %c256_i32_42 dim 1 : vector<1x1024xf32>, i32 -> vector<1x1024xf32>
    %c768_i32 = arith.constant 768 : i32
    %111 = tpu.dynamic_rotate %109 by %c768_i32 dim 1 : vector<1x1024xf32>, i32 -> vector<1x1024xf32>
    %112 = arith.select %31, %110, %111 : vector<1x1024xi1>, vector<1x1024xf32>
    %113 = arith.addf %109, %112 : vector<1x1024xf32>
    %c16_i32_43 = arith.constant 16 : i32
    %114 = tpu.dynamic_rotate %113 by %c16_i32_43 dim 1 : vector<1x1024xf32>, i32 -> vector<1x1024xf32>
    %c1008_i32_44 = arith.constant 1008 : i32
    %115 = tpu.dynamic_rotate %113 by %c1008_i32_44 dim 1 : vector<1x1024xf32>, i32 -> vector<1x1024xf32>
    %116 = arith.select %19, %114, %115 : vector<1x1024xi1>, vector<1x1024xf32>
    %117 = arith.addf %113, %116 : vector<1x1024xf32>
    %c8_i32_45 = arith.constant 8 : i32
    %118 = tpu.dynamic_rotate %117 by %c8_i32_45 dim 1 : vector<1x1024xf32>, i32 -> vector<1x1024xf32>
    %c1016_i32 = arith.constant 1016 : i32
    %119 = tpu.dynamic_rotate %117 by %c1016_i32 dim 1 : vector<1x1024xf32>, i32 -> vector<1x1024xf32>
    %120 = arith.select %15, %118, %119 : vector<1x1024xi1>, vector<1x1024xf32>
    %121 = arith.addf %117, %120 : vector<1x1024xf32>
    %cst_46 = arith.constant 0.001953125 : f32
    %122 = vector.broadcast %cst_46 : f32 to vector<1x1024xf32>
    %123 = arith.mulf %121, %122 : vector<1x1024xf32>
    %124 = vector.broadcast %123 : vector<1x1024xf32> to vector<32x1024xf32>
    %125 = arith.subf %103, %124 : vector<32x1024xf32>
    %126 = arith.mulf %125, %125 : vector<32x1024xf32>
    %cst_47 = arith.constant dense<0.000000e+00> : vector<1024xf32>
    %127 = vector.multi_reduction <add>, %126, %cst_47 [0] : vector<32x1024xf32> to vector<1024xf32>
    %128 = vector.shape_cast %127 : vector<1024xf32> to vector<1x1024xf32>
    %c512_i32_48 = arith.constant 512 : i32
    %129 = tpu.dynamic_rotate %128 by %c512_i32_48 dim 1 : vector<1x1024xf32>, i32 -> vector<1x1024xf32>
    %c512_i32_49 = arith.constant 512 : i32
    %130 = tpu.dynamic_rotate %128 by %c512_i32_49 dim 1 : vector<1x1024xf32>, i32 -> vector<1x1024xf32>
    %131 = arith.select %35, %129, %130 : vector<1x1024xi1>, vector<1x1024xf32>
    %132 = arith.addf %128, %131 : vector<1x1024xf32>
    %c256_i32_50 = arith.constant 256 : i32
    %133 = tpu.dynamic_rotate %132 by %c256_i32_50 dim 1 : vector<1x1024xf32>, i32 -> vector<1x1024xf32>
    %c768_i32_51 = arith.constant 768 : i32
    %134 = tpu.dynamic_rotate %132 by %c768_i32_51 dim 1 : vector<1x1024xf32>, i32 -> vector<1x1024xf32>
    %135 = arith.select %31, %133, %134 : vector<1x1024xi1>, vector<1x1024xf32>
    %136 = arith.addf %132, %135 : vector<1x1024xf32>
    %c16_i32_52 = arith.constant 16 : i32
    %137 = tpu.dynamic_rotate %136 by %c16_i32_52 dim 1 : vector<1x1024xf32>, i32 -> vector<1x1024xf32>
    %c1008_i32_53 = arith.constant 1008 : i32
    %138 = tpu.dynamic_rotate %136 by %c1008_i32_53 dim 1 : vector<1x1024xf32>, i32 -> vector<1x1024xf32>
    %139 = arith.select %19, %137, %138 : vector<1x1024xi1>, vector<1x1024xf32>
    %140 = arith.addf %136, %139 : vector<1x1024xf32>
    %c8_i32_54 = arith.constant 8 : i32
    %141 = tpu.dynamic_rotate %140 by %c8_i32_54 dim 1 : vector<1x1024xf32>, i32 -> vector<1x1024xf32>
    %c1016_i32_55 = arith.constant 1016 : i32
    %142 = tpu.dynamic_rotate %140 by %c1016_i32_55 dim 1 : vector<1x1024xf32>, i32 -> vector<1x1024xf32>
    %143 = arith.select %15, %141, %142 : vector<1x1024xi1>, vector<1x1024xf32>
    %144 = arith.addf %140, %143 : vector<1x1024xf32>
    %cst_56 = arith.constant 0.001953125 : f32
    %145 = vector.broadcast %cst_56 : f32 to vector<1x1024xf32>
    %146 = arith.mulf %144, %145 : vector<1x1024xf32>
    %cst_57 = arith.constant 9.99999974E-6 : f32
    %147 = vector.broadcast %cst_57 : f32 to vector<1x1024xf32>
    %148 = arith.addf %146, %147 : vector<1x1024xf32>
    %149 = math.rsqrt %148 : vector<1x1024xf32>
    %c2 = arith.constant 2 : index
    %c0_58 = arith.constant 0 : index
    %150 = vector.load %arg2[%c2, %c0_58] : memref<5x1024xf32, #tpu.memory_space<vmem>>, vector<1x1024xf32>
    %151 = arith.mulf %149, %150 : vector<1x1024xf32>
    %152 = vector.broadcast %151 : vector<1x1024xf32> to vector<32x1024xf32>
    %153 = arith.mulf %125, %152 : vector<32x1024xf32>
    %c2_59 = arith.constant 2 : index
    %c0_60 = arith.constant 0 : index
    %154 = vector.load %arg3[%c2_59, %c0_60] : memref<5x1024xf32, #tpu.memory_space<vmem>>, vector<1x1024xf32>
    %155 = vector.broadcast %154 : vector<1x1024xf32> to vector<32x1024xf32>
    %156 = arith.addf %153, %155 : vector<32x1024xf32>
    %cst_61 = arith.constant 0.000000e+00 : f32
    %157 = vector.broadcast %cst_61 : f32 to vector<32x1024xf32>
    %158 = arith.cmpf oge, %156, %157 : vector<32x1024xf32>
    %cst_62 = arith.constant 0.00999999977 : f32
    %159 = vector.broadcast %cst_62 : f32 to vector<32x1024xf32>
    %160 = arith.mulf %159, %156 : vector<32x1024xf32>
    %161 = arith.select %158, %156, %160 : vector<32x1024xi1>, vector<32x1024xf32>
    %cst_63 = arith.constant dense<0.000000e+00> : vector<1024xf32>
    %162 = vector.multi_reduction <add>, %161, %cst_63 [0] : vector<32x1024xf32> to vector<1024xf32>
    %163 = vector.shape_cast %162 : vector<1024xf32> to vector<1x1024xf32>
    %c512_i32_64 = arith.constant 512 : i32
    %164 = tpu.dynamic_rotate %163 by %c512_i32_64 dim 1 : vector<1x1024xf32>, i32 -> vector<1x1024xf32>
    %c512_i32_65 = arith.constant 512 : i32
    %165 = tpu.dynamic_rotate %163 by %c512_i32_65 dim 1 : vector<1x1024xf32>, i32 -> vector<1x1024xf32>
    %166 = arith.select %35, %164, %165 : vector<1x1024xi1>, vector<1x1024xf32>
    %167 = arith.addf %163, %166 : vector<1x1024xf32>
    %c256_i32_66 = arith.constant 256 : i32
    %168 = tpu.dynamic_rotate %167 by %c256_i32_66 dim 1 : vector<1x1024xf32>, i32 -> vector<1x1024xf32>
    %c768_i32_67 = arith.constant 768 : i32
    %169 = tpu.dynamic_rotate %167 by %c768_i32_67 dim 1 : vector<1x1024xf32>, i32 -> vector<1x1024xf32>
    %170 = arith.select %31, %168, %169 : vector<1x1024xi1>, vector<1x1024xf32>
    %171 = arith.addf %167, %170 : vector<1x1024xf32>
    %c128_i32_68 = arith.constant 128 : i32
    %172 = tpu.dynamic_rotate %171 by %c128_i32_68 dim 1 : vector<1x1024xf32>, i32 -> vector<1x1024xf32>
    %c896_i32 = arith.constant 896 : i32
    %173 = tpu.dynamic_rotate %171 by %c896_i32 dim 1 : vector<1x1024xf32>, i32 -> vector<1x1024xf32>
    %174 = arith.select %27, %172, %173 : vector<1x1024xi1>, vector<1x1024xf32>
    %175 = arith.addf %171, %174 : vector<1x1024xf32>
    %c16_i32_69 = arith.constant 16 : i32
    %176 = tpu.dynamic_rotate %175 by %c16_i32_69 dim 1 : vector<1x1024xf32>, i32 -> vector<1x1024xf32>
    %c1008_i32_70 = arith.constant 1008 : i32
    %177 = tpu.dynamic_rotate %175 by %c1008_i32_70 dim 1 : vector<1x1024xf32>, i32 -> vector<1x1024xf32>
    %178 = arith.select %19, %176, %177 : vector<1x1024xi1>, vector<1x1024xf32>
    %179 = arith.addf %175, %178 : vector<1x1024xf32>
    %c8_i32_71 = arith.constant 8 : i32
    %180 = tpu.dynamic_rotate %179 by %c8_i32_71 dim 1 : vector<1x1024xf32>, i32 -> vector<1x1024xf32>
    %c1016_i32_72 = arith.constant 1016 : i32
    %181 = tpu.dynamic_rotate %179 by %c1016_i32_72 dim 1 : vector<1x1024xf32>, i32 -> vector<1x1024xf32>
    %182 = arith.select %15, %180, %181 : vector<1x1024xi1>, vector<1x1024xf32>
    %183 = arith.addf %179, %182 : vector<1x1024xf32>
    %c4_i32_73 = arith.constant 4 : i32
    %184 = tpu.dynamic_rotate %183 by %c4_i32_73 dim 1 : vector<1x1024xf32>, i32 -> vector<1x1024xf32>
    %c1020_i32 = arith.constant 1020 : i32
    %185 = tpu.dynamic_rotate %183 by %c1020_i32 dim 1 : vector<1x1024xf32>, i32 -> vector<1x1024xf32>
    %186 = arith.select %11, %184, %185 : vector<1x1024xi1>, vector<1x1024xf32>
    %187 = arith.addf %183, %186 : vector<1x1024xf32>
    %cst_74 = arith.constant 4.8828125E-4 : f32
    %188 = vector.broadcast %cst_74 : f32 to vector<1x1024xf32>
    %189 = arith.mulf %187, %188 : vector<1x1024xf32>
    %190 = vector.broadcast %189 : vector<1x1024xf32> to vector<32x1024xf32>
    %191 = arith.subf %161, %190 : vector<32x1024xf32>
    %192 = arith.mulf %191, %191 : vector<32x1024xf32>
    %cst_75 = arith.constant dense<0.000000e+00> : vector<1024xf32>
    %193 = vector.multi_reduction <add>, %192, %cst_75 [0] : vector<32x1024xf32> to vector<1024xf32>
    %194 = vector.shape_cast %193 : vector<1024xf32> to vector<1x1024xf32>
    %c512_i32_76 = arith.constant 512 : i32
    %195 = tpu.dynamic_rotate %194 by %c512_i32_76 dim 1 : vector<1x1024xf32>, i32 -> vector<1x1024xf32>
    %c512_i32_77 = arith.constant 512 : i32
    %196 = tpu.dynamic_rotate %194 by %c512_i32_77 dim 1 : vector<1x1024xf32>, i32 -> vector<1x1024xf32>
    %197 = arith.select %35, %195, %196 : vector<1x1024xi1>, vector<1x1024xf32>
    %198 = arith.addf %194, %197 : vector<1x1024xf32>
    %c256_i32_78 = arith.constant 256 : i32
    %199 = tpu.dynamic_rotate %198 by %c256_i32_78 dim 1 : vector<1x1024xf32>, i32 -> vector<1x1024xf32>
    %c768_i32_79 = arith.constant 768 : i32
    %200 = tpu.dynamic_rotate %198 by %c768_i32_79 dim 1 : vector<1x1024xf32>, i32 -> vector<1x1024xf32>
    %201 = arith.select %31, %199, %200 : vector<1x1024xi1>, vector<1x1024xf32>
    %202 = arith.addf %198, %201 : vector<1x1024xf32>
    %c128_i32_80 = arith.constant 128 : i32
    %203 = tpu.dynamic_rotate %202 by %c128_i32_80 dim 1 : vector<1x1024xf32>, i32 -> vector<1x1024xf32>
    %c896_i32_81 = arith.constant 896 : i32
    %204 = tpu.dynamic_rotate %202 by %c896_i32_81 dim 1 : vector<1x1024xf32>, i32 -> vector<1x1024xf32>
    %205 = arith.select %27, %203, %204 : vector<1x1024xi1>, vector<1x1024xf32>
    %206 = arith.addf %202, %205 : vector<1x1024xf32>
    %c16_i32_82 = arith.constant 16 : i32
    %207 = tpu.dynamic_rotate %206 by %c16_i32_82 dim 1 : vector<1x1024xf32>, i32 -> vector<1x1024xf32>
    %c1008_i32_83 = arith.constant 1008 : i32
    %208 = tpu.dynamic_rotate %206 by %c1008_i32_83 dim 1 : vector<1x1024xf32>, i32 -> vector<1x1024xf32>
    %209 = arith.select %19, %207, %208 : vector<1x1024xi1>, vector<1x1024xf32>
    %210 = arith.addf %206, %209 : vector<1x1024xf32>
    %c8_i32_84 = arith.constant 8 : i32
    %211 = tpu.dynamic_rotate %210 by %c8_i32_84 dim 1 : vector<1x1024xf32>, i32 -> vector<1x1024xf32>
    %c1016_i32_85 = arith.constant 1016 : i32
    %212 = tpu.dynamic_rotate %210 by %c1016_i32_85 dim 1 : vector<1x1024xf32>, i32 -> vector<1x1024xf32>
    %213 = arith.select %15, %211, %212 : vector<1x1024xi1>, vector<1x1024xf32>
    %214 = arith.addf %210, %213 : vector<1x1024xf32>
    %c4_i32_86 = arith.constant 4 : i32
    %215 = tpu.dynamic_rotate %214 by %c4_i32_86 dim 1 : vector<1x1024xf32>, i32 -> vector<1x1024xf32>
    %c1020_i32_87 = arith.constant 1020 : i32
    %216 = tpu.dynamic_rotate %214 by %c1020_i32_87 dim 1 : vector<1x1024xf32>, i32 -> vector<1x1024xf32>
    %217 = arith.select %11, %215, %216 : vector<1x1024xi1>, vector<1x1024xf32>
    %218 = arith.addf %214, %217 : vector<1x1024xf32>
    %cst_88 = arith.constant 4.8828125E-4 : f32
    %219 = vector.broadcast %cst_88 : f32 to vector<1x1024xf32>
    %220 = arith.mulf %218, %219 : vector<1x1024xf32>
    %cst_89 = arith.constant 9.99999974E-6 : f32
    %221 = vector.broadcast %cst_89 : f32 to vector<1x1024xf32>
    %222 = arith.addf %220, %221 : vector<1x1024xf32>
    %223 = math.rsqrt %222 : vector<1x1024xf32>
    %c3 = arith.constant 3 : index
    %c0_90 = arith.constant 0 : index
    %224 = vector.load %arg2[%c3, %c0_90] : memref<5x1024xf32, #tpu.memory_space<vmem>>, vector<1x1024xf32>
    %225 = arith.mulf %223, %224 : vector<1x1024xf32>
    %226 = vector.broadcast %225 : vector<1x1024xf32> to vector<32x1024xf32>
    %227 = arith.mulf %191, %226 : vector<32x1024xf32>
    %c3_91 = arith.constant 3 : index
    %c0_92 = arith.constant 0 : index
    %228 = vector.load %arg3[%c3_91, %c0_92] : memref<5x1024xf32, #tpu.memory_space<vmem>>, vector<1x1024xf32>
    %229 = vector.broadcast %228 : vector<1x1024xf32> to vector<32x1024xf32>
    %230 = arith.addf %227, %229 : vector<32x1024xf32>
    %cst_93 = arith.constant 0.000000e+00 : f32
    %231 = vector.broadcast %cst_93 : f32 to vector<32x1024xf32>
    %232 = arith.cmpf oge, %230, %231 : vector<32x1024xf32>
    %cst_94 = arith.constant 0.00999999977 : f32
    %233 = vector.broadcast %cst_94 : f32 to vector<32x1024xf32>
    %234 = arith.mulf %233, %230 : vector<32x1024xf32>
    %235 = arith.select %232, %230, %234 : vector<32x1024xi1>, vector<32x1024xf32>
    %cst_95 = arith.constant dense<0.000000e+00> : vector<1024xf32>
    %236 = vector.multi_reduction <add>, %235, %cst_95 [0] : vector<32x1024xf32> to vector<1024xf32>
    %237 = vector.shape_cast %236 : vector<1024xf32> to vector<1x1024xf32>
    %c512_i32_96 = arith.constant 512 : i32
    %238 = tpu.dynamic_rotate %237 by %c512_i32_96 dim 1 : vector<1x1024xf32>, i32 -> vector<1x1024xf32>
    %c512_i32_97 = arith.constant 512 : i32
    %239 = tpu.dynamic_rotate %237 by %c512_i32_97 dim 1 : vector<1x1024xf32>, i32 -> vector<1x1024xf32>
    %240 = arith.select %35, %238, %239 : vector<1x1024xi1>, vector<1x1024xf32>
    %241 = arith.addf %237, %240 : vector<1x1024xf32>
    %c256_i32_98 = arith.constant 256 : i32
    %242 = tpu.dynamic_rotate %241 by %c256_i32_98 dim 1 : vector<1x1024xf32>, i32 -> vector<1x1024xf32>
    %c768_i32_99 = arith.constant 768 : i32
    %243 = tpu.dynamic_rotate %241 by %c768_i32_99 dim 1 : vector<1x1024xf32>, i32 -> vector<1x1024xf32>
    %244 = arith.select %31, %242, %243 : vector<1x1024xi1>, vector<1x1024xf32>
    %245 = arith.addf %241, %244 : vector<1x1024xf32>
    %c128_i32_100 = arith.constant 128 : i32
    %246 = tpu.dynamic_rotate %245 by %c128_i32_100 dim 1 : vector<1x1024xf32>, i32 -> vector<1x1024xf32>
    %c896_i32_101 = arith.constant 896 : i32
    %247 = tpu.dynamic_rotate %245 by %c896_i32_101 dim 1 : vector<1x1024xf32>, i32 -> vector<1x1024xf32>
    %248 = arith.select %27, %246, %247 : vector<1x1024xi1>, vector<1x1024xf32>
    %249 = arith.addf %245, %248 : vector<1x1024xf32>
    %c64_i32_102 = arith.constant 64 : i32
    %250 = tpu.dynamic_rotate %249 by %c64_i32_102 dim 1 : vector<1x1024xf32>, i32 -> vector<1x1024xf32>
    %c960_i32 = arith.constant 960 : i32
    %251 = tpu.dynamic_rotate %249 by %c960_i32 dim 1 : vector<1x1024xf32>, i32 -> vector<1x1024xf32>
    %252 = arith.select %23, %250, %251 : vector<1x1024xi1>, vector<1x1024xf32>
    %253 = arith.addf %249, %252 : vector<1x1024xf32>
    %c16_i32_103 = arith.constant 16 : i32
    %254 = tpu.dynamic_rotate %253 by %c16_i32_103 dim 1 : vector<1x1024xf32>, i32 -> vector<1x1024xf32>
    %c1008_i32_104 = arith.constant 1008 : i32
    %255 = tpu.dynamic_rotate %253 by %c1008_i32_104 dim 1 : vector<1x1024xf32>, i32 -> vector<1x1024xf32>
    %256 = arith.select %19, %254, %255 : vector<1x1024xi1>, vector<1x1024xf32>
    %257 = arith.addf %253, %256 : vector<1x1024xf32>
    %c8_i32_105 = arith.constant 8 : i32
    %258 = tpu.dynamic_rotate %257 by %c8_i32_105 dim 1 : vector<1x1024xf32>, i32 -> vector<1x1024xf32>
    %c1016_i32_106 = arith.constant 1016 : i32
    %259 = tpu.dynamic_rotate %257 by %c1016_i32_106 dim 1 : vector<1x1024xf32>, i32 -> vector<1x1024xf32>
    %260 = arith.select %15, %258, %259 : vector<1x1024xi1>, vector<1x1024xf32>
    %261 = arith.addf %257, %260 : vector<1x1024xf32>
    %c4_i32_107 = arith.constant 4 : i32
    %262 = tpu.dynamic_rotate %261 by %c4_i32_107 dim 1 : vector<1x1024xf32>, i32 -> vector<1x1024xf32>
    %c1020_i32_108 = arith.constant 1020 : i32
    %263 = tpu.dynamic_rotate %261 by %c1020_i32_108 dim 1 : vector<1x1024xf32>, i32 -> vector<1x1024xf32>
    %264 = arith.select %11, %262, %263 : vector<1x1024xi1>, vector<1x1024xf32>
    %265 = arith.addf %261, %264 : vector<1x1024xf32>
    %c2_i32_109 = arith.constant 2 : i32
    %266 = tpu.dynamic_rotate %265 by %c2_i32_109 dim 1 : vector<1x1024xf32>, i32 -> vector<1x1024xf32>
    %c1022_i32 = arith.constant 1022 : i32
    %267 = tpu.dynamic_rotate %265 by %c1022_i32 dim 1 : vector<1x1024xf32>, i32 -> vector<1x1024xf32>
    %268 = arith.select %7, %266, %267 : vector<1x1024xi1>, vector<1x1024xf32>
    %269 = arith.addf %265, %268 : vector<1x1024xf32>
    %cst_110 = arith.constant 1.22070313E-4 : f32
    %270 = vector.broadcast %cst_110 : f32 to vector<1x1024xf32>
    %271 = arith.mulf %269, %270 : vector<1x1024xf32>
    %272 = vector.broadcast %271 : vector<1x1024xf32> to vector<32x1024xf32>
    %273 = arith.subf %235, %272 : vector<32x1024xf32>
    %274 = arith.mulf %273, %273 : vector<32x1024xf32>
    %cst_111 = arith.constant dense<0.000000e+00> : vector<1024xf32>
    %275 = vector.multi_reduction <add>, %274, %cst_111 [0] : vector<32x1024xf32> to vector<1024xf32>
    %276 = vector.shape_cast %275 : vector<1024xf32> to vector<1x1024xf32>
    %c512_i32_112 = arith.constant 512 : i32
    %277 = tpu.dynamic_rotate %276 by %c512_i32_112 dim 1 : vector<1x1024xf32>, i32 -> vector<1x1024xf32>
    %c512_i32_113 = arith.constant 512 : i32
    %278 = tpu.dynamic_rotate %276 by %c512_i32_113 dim 1 : vector<1x1024xf32>, i32 -> vector<1x1024xf32>
    %279 = arith.select %35, %277, %278 : vector<1x1024xi1>, vector<1x1024xf32>
    %280 = arith.addf %276, %279 : vector<1x1024xf32>
    %c256_i32_114 = arith.constant 256 : i32
    %281 = tpu.dynamic_rotate %280 by %c256_i32_114 dim 1 : vector<1x1024xf32>, i32 -> vector<1x1024xf32>
    %c768_i32_115 = arith.constant 768 : i32
    %282 = tpu.dynamic_rotate %280 by %c768_i32_115 dim 1 : vector<1x1024xf32>, i32 -> vector<1x1024xf32>
    %283 = arith.select %31, %281, %282 : vector<1x1024xi1>, vector<1x1024xf32>
    %284 = arith.addf %280, %283 : vector<1x1024xf32>
    %c128_i32_116 = arith.constant 128 : i32
    %285 = tpu.dynamic_rotate %284 by %c128_i32_116 dim 1 : vector<1x1024xf32>, i32 -> vector<1x1024xf32>
    %c896_i32_117 = arith.constant 896 : i32
    %286 = tpu.dynamic_rotate %284 by %c896_i32_117 dim 1 : vector<1x1024xf32>, i32 -> vector<1x1024xf32>
    %287 = arith.select %27, %285, %286 : vector<1x1024xi1>, vector<1x1024xf32>
    %288 = arith.addf %284, %287 : vector<1x1024xf32>
    %c64_i32_118 = arith.constant 64 : i32
    %289 = tpu.dynamic_rotate %288 by %c64_i32_118 dim 1 : vector<1x1024xf32>, i32 -> vector<1x1024xf32>
    %c960_i32_119 = arith.constant 960 : i32
    %290 = tpu.dynamic_rotate %288 by %c960_i32_119 dim 1 : vector<1x1024xf32>, i32 -> vector<1x1024xf32>
    %291 = arith.select %23, %289, %290 : vector<1x1024xi1>, vector<1x1024xf32>
    %292 = arith.addf %288, %291 : vector<1x1024xf32>
    %c16_i32_120 = arith.constant 16 : i32
    %293 = tpu.dynamic_rotate %292 by %c16_i32_120 dim 1 : vector<1x1024xf32>, i32 -> vector<1x1024xf32>
    %c1008_i32_121 = arith.constant 1008 : i32
    %294 = tpu.dynamic_rotate %292 by %c1008_i32_121 dim 1 : vector<1x1024xf32>, i32 -> vector<1x1024xf32>
    %295 = arith.select %19, %293, %294 : vector<1x1024xi1>, vector<1x1024xf32>
    %296 = arith.addf %292, %295 : vector<1x1024xf32>
    %c8_i32_122 = arith.constant 8 : i32
    %297 = tpu.dynamic_rotate %296 by %c8_i32_122 dim 1 : vector<1x1024xf32>, i32 -> vector<1x1024xf32>
    %c1016_i32_123 = arith.constant 1016 : i32
    %298 = tpu.dynamic_rotate %296 by %c1016_i32_123 dim 1 : vector<1x1024xf32>, i32 -> vector<1x1024xf32>
    %299 = arith.select %15, %297, %298 : vector<1x1024xi1>, vector<1x1024xf32>
    %300 = arith.addf %296, %299 : vector<1x1024xf32>
    %c4_i32_124 = arith.constant 4 : i32
    %301 = tpu.dynamic_rotate %300 by %c4_i32_124 dim 1 : vector<1x1024xf32>, i32 -> vector<1x1024xf32>
    %c1020_i32_125 = arith.constant 1020 : i32
    %302 = tpu.dynamic_rotate %300 by %c1020_i32_125 dim 1 : vector<1x1024xf32>, i32 -> vector<1x1024xf32>
    %303 = arith.select %11, %301, %302 : vector<1x1024xi1>, vector<1x1024xf32>
    %304 = arith.addf %300, %303 : vector<1x1024xf32>
    %c2_i32_126 = arith.constant 2 : i32
    %305 = tpu.dynamic_rotate %304 by %c2_i32_126 dim 1 : vector<1x1024xf32>, i32 -> vector<1x1024xf32>
    %c1022_i32_127 = arith.constant 1022 : i32
    %306 = tpu.dynamic_rotate %304 by %c1022_i32_127 dim 1 : vector<1x1024xf32>, i32 -> vector<1x1024xf32>
    %307 = arith.select %7, %305, %306 : vector<1x1024xi1>, vector<1x1024xf32>
    %308 = arith.addf %304, %307 : vector<1x1024xf32>
    %cst_128 = arith.constant 1.22070313E-4 : f32
    %309 = vector.broadcast %cst_128 : f32 to vector<1x1024xf32>
    %310 = arith.mulf %308, %309 : vector<1x1024xf32>
    %cst_129 = arith.constant 9.99999974E-6 : f32
    %311 = vector.broadcast %cst_129 : f32 to vector<1x1024xf32>
    %312 = arith.addf %310, %311 : vector<1x1024xf32>
    %313 = math.rsqrt %312 : vector<1x1024xf32>
    %c4 = arith.constant 4 : index
    %c0_130 = arith.constant 0 : index
    %314 = vector.load %arg2[%c4, %c0_130] : memref<5x1024xf32, #tpu.memory_space<vmem>>, vector<1x1024xf32>
    %315 = arith.mulf %313, %314 : vector<1x1024xf32>
    %316 = vector.broadcast %315 : vector<1x1024xf32> to vector<32x1024xf32>
    %317 = arith.mulf %273, %316 : vector<32x1024xf32>
    %c4_131 = arith.constant 4 : index
    %c0_132 = arith.constant 0 : index
    %318 = vector.load %arg3[%c4_131, %c0_132] : memref<5x1024xf32, #tpu.memory_space<vmem>>, vector<1x1024xf32>
    %319 = vector.broadcast %318 : vector<1x1024xf32> to vector<32x1024xf32>
    %320 = arith.addf %317, %319 : vector<32x1024xf32>
    %cst_133 = arith.constant 0.000000e+00 : f32
    %321 = vector.broadcast %cst_133 : f32 to vector<32x1024xf32>
    %322 = arith.cmpf oge, %320, %321 : vector<32x1024xf32>
    %cst_134 = arith.constant 0.00999999977 : f32
    %323 = vector.broadcast %cst_134 : f32 to vector<32x1024xf32>
    %324 = arith.mulf %323, %320 : vector<32x1024xf32>
    %325 = arith.select %322, %320, %324 : vector<32x1024xi1>, vector<32x1024xf32>
    %326 = math.tanh %325 : vector<32x1024xf32>
    %c0_135 = arith.constant 0 : index
    %c0_136 = arith.constant 0 : index
    %327 = vector.load %arg4[%c0_135, %c0_136] : memref<32x1024xf32, #tpu.memory_space<vmem>>, vector<32x1024xf32>
    tpu.vector_store %arg4[%c0_135, %c0_136], %326 {strides = array<i32>} : memref<32x1024xf32, #tpu.memory_space<vmem>>, vector<32x1024xf32>,
    return
  }
}

</mosaic_0001>

<llo_original>
// kernel: ps_generator_forward.1
$region0: #{ps_generator_forward.1}
  #allocation0 [shape = 'u32[]', space=smem, size = 0x4, offset = 0x4, fixed_abs, tag = 'smem constant byte address 0x4 - core index']
  #allocation1 [shape = 'u32[144,128]{1,0:T(1,128)}', space=vmem, size = 0x12000, scoped, tag = 'internal scratch']
  %s0 = inlined_call_operand.vmem [shape: bf16[32,128], index: 0, kind: input, shape index: {}]
  %s1 = inlined_call_operand.vmem [shape: bf16[128,1024], index: 1, kind: input, shape index: {}]
  %s2 = inlined_call_operand.hbm [shape: f32[5,1024], index: 2, kind: input, shape index: {}]
  %s3 = inlined_call_operand.hbm [shape: f32[5,1024], index: 3, kind: input, shape index: {}]
  %s4 = inlined_call_operand.vmem [shape: f32[32,1024], index: 4, kind: output, shape index: {}]
  %s5 = sld [smem:[#allocation0]]
  $region34: #{ps_generator_forward.1} parent=0
    _
  %s7 = ssub.s32 1, %s5
  %s8 = scalar_select 0, %s7, %s5
  $region1: #{ps_generator_forward.1} parent=0
    #allocation2 [shape = 'u8[32768]{0}', space=vmem, size = 0x8000, scoped, tag = 'input window, operand 2, single buffered']
    #allocation3 [shape = 's32[1]{0}', space=sflag, size = 0x4, scoped, tag = 'scoped memory for ps_generator_forward.1']
    #allocation4 [shape = 'u8[32768]{0}', space=vmem, size = 0x8000, scoped, tag = 'input window, operand 3, single buffered']
    #allocation5 [shape = 's32[1]{0}', space=sflag, size = 0x4, scoped, tag = 'scoped memory for ps_generator_forward.1']
    %9 = vsyncpa [#allocation3], 0
    %10 = vsyncpa [#allocation5], 0
    // Predicated region
    $region2: #{ps_generator_forward.1} parent=1 // pred_check
      _
    $region3: #{ps_generator_forward.1} parent=1 // pred_check_branch
      %12 = sbr.rel (0) target = $region5
    $region4: #{ps_generator_forward.1} parent=1 // pred_region
      _
    $region5: #{ps_generator_forward.1} parent=1 // pred_fallthru
      _
    // Predicated region
    $region6: #{ps_generator_forward.1} parent=1 // pred_check
      _
    $region7: #{ps_generator_forward.1} parent=1 // pred_check_branch
      %14 = sbr.rel (0) target = $region9
    $region8: #{ps_generator_forward.1} parent=1 // pred_region
      _
    $region9: #{ps_generator_forward.1} parent=1 // pred_fallthru
      _
    // Predicated region
    $region10: #{ps_generator_forward.1} parent=1 // pred_check
      _
    $region11: #{ps_generator_forward.1} parent=1 // pred_check_branch
      %16 = sbr.rel (0) target = $region13
    $region12: #{ps_generator_forward.1} parent=1 // pred_region
      %s18 = ssub.s32 1024, 1024
      %19 = vsyncadd [#allocation3], %s18
      %s21 = sshll.u32 [#allocation2], 4
      %s22 = int_to_ptr.vmem [resolvable:$true] %s21
      %24 = dma.hbm_to_vmem [thread:$0]  %s2, 1024, %s22, [#allocation3]
    $region13: #{ps_generator_forward.1} parent=1 // pred_fallthru
      _
    // Predicated region
    $region14: #{ps_generator_forward.1} parent=1 // pred_check
      _
    $region15: #{ps_generator_forward.1} parent=1 // pred_check_branch
      %26 = sbr.rel (0) target = $region17
    $region16: #{ps_generator_forward.1} parent=1 // pred_region
      %s28 = ssub.s32 1024, 1024
      %29 = vsyncadd [#allocation5], %s28
      %s31 = sshll.u32 [#allocation4], 4
      %s32 = int_to_ptr.vmem [resolvable:$true] %s31
      %34 = dma.hbm_to_vmem [thread:$0]  %s3, 1024, %s32, [#allocation5]
    $region17: #{ps_generator_forward.1} parent=1 // pred_fallthru
      _
    // Predicated region
    $region18: #{ps_generator_forward.1} parent=1 // pred_check
      _
    $region19: #{ps_generator_forward.1} parent=1 // pred_check_branch
      %36 = sbr.rel (0) target = $region21
    $region20: #{ps_generator_forward.1} parent=1 // pred_region
      %37 = dma.done [#allocation3], 1024
    $region21: #{ps_generator_forward.1} parent=1 // pred_fallthru
      _
    // Predicated region
    $region22: #{ps_generator_forward.1} parent=1 // pred_check
      _
    $region23: #{ps_generator_forward.1} parent=1 // pred_check_branch
      %39 = sbr.rel (0) target = $region25
    $region24: #{ps_generator_forward.1} parent=1 // pred_region
      %40 = dma.done [#allocation5], 1024
    $region25: #{ps_generator_forward.1} parent=1 // pred_fallthru
      _
    %v42 = vld [vmem:[%s0] sm:$0xf]
    %v43 = vld [vmem:[%s0 + $0x4] sm:$0xf]
    %v44 = vld [vmem:[%s0 + $0x8] sm:$0xf]
    %v45 = vld [vmem:[%s0 + $0xc] sm:$0xf]
    %v46 = vld [vmem:[%s1] sm:$0xff]
    %v47 = vld [vmem:[%s1 + $0x8] sm:$0xff]
    %v48 = vld [vmem:[%s1 + $0x10] sm:$0xff]
    %v49 = vld [vmem:[%s1 + $0x18] sm:$0xff]
    %v50 = vld [vmem:[%s1 + $0x20] sm:$0xff]
    %v51 = vld [vmem:[%s1 + $0x28] sm:$0xff]
    %v52 = vld [vmem:[%s1 + $0x30] sm:$0xff]
    %v53 = vld [vmem:[%s1 + $0x38] sm:$0xff]
    %v54 = vld [vmem:[%s1 + $0x40] sm:$0xff]
    %v55 = vld [vmem:[%s1 + $0x48] sm:$0xff]
    %v56 = vld [vmem:[%s1 + $0x50] sm:$0xff]
    %v57 = vld [vmem:[%s1 + $0x58] sm:$0xff]
    %v58 = vld [vmem:[%s1 + $0x60] sm:$0xff]
    %v59 = vld [vmem:[%s1 + $0x68] sm:$0xff]
    %v60 = vld [vmem:[%s1 + $0x70] sm:$0xff]
    %v61 = vld [vmem:[%s1 + $0x78] sm:$0xff]
    %v62 = vld [vmem:[%s1 + $0x80] sm:$0xff]
    %v63 = vld [vmem:[%s1 + $0x88] sm:$0xff]
    %v64 = vld [vmem:[%s1 + $0x90] sm:$0xff]
    %v65 = vld [vmem:[%s1 + $0x98] sm:$0xff]
    %v66 = vld [vmem:[%s1 + $0xa0] sm:$0xff]
    %v67 = vld [vmem:[%s1 + $0xa8] sm:$0xff]
    %v68 = vld [vmem:[%s1 + $0xb0] sm:$0xff]
    %v69 = vld [vmem:[%s1 + $0xb8] sm:$0xff]
    %v70 = vld [vmem:[%s1 + $0xc0] sm:$0xff]
    %v71 = vld [vmem:[%s1 + $0xc8] sm:$0xff]
    %v72 = vld [vmem:[%s1 + $0xd0] sm:$0xff]
    %v73 = vld [vmem:[%s1 + $0xd8] sm:$0xff]
    %v74 = vld [vmem:[%s1 + $0xe0] sm:$0xff]
    %v75 = vld [vmem:[%s1 + $0xe8] sm:$0xff]
    %v76 = vld [vmem:[%s1 + $0xf0] sm:$0xff]
    %v77 = vld [vmem:[%s1 + $0xf8] sm:$0xff]
    %v78 = vld [vmem:[%s1 + $0x100] sm:$0xff]
    %v79 = vld [vmem:[%s1 + $0x108] sm:$0xff]
    %v80 = vld [vmem:[%s1 + $0x110] sm:$0xff]
    %v81 = vld [vmem:[%s1 + $0x118] sm:$0xff]
    %v82 = vld [vmem:[%s1 + $0x120] sm:$0xff]
    %v83 = vld [vmem:[%s1 + $0x128] sm:$0xff]
    %v84 = vld [vmem:[%s1 + $0x130] sm:$0xff]
    %v85 = vld [vmem:[%s1 + $0x138] sm:$0xff]
    %v86 = vld [vmem:[%s1 + $0x140] sm:$0xff]
    %v87 = vld [vmem:[%s1 + $0x148] sm:$0xff]
    %v88 = vld [vmem:[%s1 + $0x150] sm:$0xff]
    %v89 = vld [vmem:[%s1 + $0x158] sm:$0xff]
    %v90 = vld [vmem:[%s1 + $0x160] sm:$0xff]
    %v91 = vld [vmem:[%s1 + $0x168] sm:$0xff]
    %v92 = vld [vmem:[%s1 + $0x170] sm:$0xff]
    %v93 = vld [vmem:[%s1 + $0x178] sm:$0xff]
    %v94 = vld [vmem:[%s1 + $0x180] sm:$0xff]
    %v95 = vld [vmem:[%s1 + $0x188] sm:$0xff]
    %v96 = vld [vmem:[%s1 + $0x190] sm:$0xff]
    %v97 = vld [vmem:[%s1 + $0x198] sm:$0xff]
    %v98 = vld [vmem:[%s1 + $0x1a0] sm:$0xff]
    %v99 = vld [vmem:[%s1 + $0x1a8] sm:$0xff]
    %v100 = vld [vmem:[%s1 + $0x1b0] sm:$0xff]
    %v101 = vld [vmem:[%s1 + $0x1b8] sm:$0xff]
    %v102 = vld [vmem:[%s1 + $0x1c0] sm:$0xff]
    %v103 = vld [vmem:[%s1 + $0x1c8] sm:$0xff]
    %v104 = vld [vmem:[%s1 + $0x1d0] sm:$0xff]
    %v105 = vld [vmem:[%s1 + $0x1d8] sm:$0xff]
    %v106 = vld [vmem:[%s1 + $0x1e0] sm:$0xff]
    %v107 = vld [vmem:[%s1 + $0x1e8] sm:$0xff]
    %v108 = vld [vmem:[%s1 + $0x1f0] sm:$0xff]
    %v109 = vld [vmem:[%s1 + $0x1f8] sm:$0xff]
    %v114 = vunpack.c.l.b16 %v42
    %v115 = vunpack.c.l.b16 %v43
    %v116 = vunpack.c.l.b16 %v44
    %v117 = vunpack.c.l.b16 %v45
    %v118 = vpack.c.b16 %v115, %v114
    %v119 = vpack.c.b16 %v117, %v116
    %v186 = vunpack.c.l.b16 %v46
    %v187 = vunpack.c.h.b16 %v46
    %v188 = vunpack.c.l.b16 %v47
    %v189 = vunpack.c.h.b16 %v47
    %v190 = vunpack.c.l.b16 %v48
    %v191 = vunpack.c.h.b16 %v48
    %v192 = vunpack.c.l.b16 %v49
    %v193 = vunpack.c.h.b16 %v49
    %v194 = vunpack.c.l.b16 %v50
    %v195 = vunpack.c.h.b16 %v50
    %v196 = vunpack.c.l.b16 %v51
    %v197 = vunpack.c.h.b16 %v51
    %v198 = vunpack.c.l.b16 %v52
    %v199 = vunpack.c.h.b16 %v52
    %v200 = vunpack.c.l.b16 %v53
    %v201 = vunpack.c.h.b16 %v53
    %v202 = vunpack.c.l.b16 %v54
    %v203 = vunpack.c.h.b16 %v54
    %v204 = vunpack.c.l.b16 %v55
    %v205 = vunpack.c.h.b16 %v55
    %v206 = vunpack.c.l.b16 %v56
    %v207 = vunpack.c.h.b16 %v56
    %v208 = vunpack.c.l.b16 %v57
    %v209 = vunpack.c.h.b16 %v57
    %v210 = vunpack.c.l.b16 %v58
    %v211 = vunpack.c.h.b16 %v58
    %v212 = vunpack.c.l.b16 %v59
    %v213 = vunpack.c.h.b16 %v59
    %v214 = vunpack.c.l.b16 %v60
    %v215 = vunpack.c.h.b16 %v60
    %v216 = vunpack.c.l.b16 %v61
    %v217 = vunpack.c.h.b16 %v61
    %v218 = vunpack.c.l.b16 %v62
    %v219 = vunpack.c.h.b16 %v62
    %v220 = vunpack.c.l.b16 %v63
    %v221 = vunpack.c.h.b16 %v63
    %v222 = vunpack.c.l.b16 %v64
    %v223 = vunpack.c.h.b16 %v64
    %v224 = vunpack.c.l.b16 %v65
    %v225 = vunpack.c.h.b16 %v65
    %v226 = vunpack.c.l.b16 %v66
    %v227 = vunpack.c.h.b16 %v66
    %v228 = vunpack.c.l.b16 %v67
    %v229 = vunpack.c.h.b16 %v67
    %v230 = vunpack.c.l.b16 %v68
    %v231 = vunpack.c.h.b16 %v68
    %v232 = vunpack.c.l.b16 %v69
    %v233 = vunpack.c.h.b16 %v69
    %v234 = vunpack.c.l.b16 %v70
    %v235 = vunpack.c.h.b16 %v70
    %v236 = vunpack.c.l.b16 %v71
    %v237 = vunpack.c.h.b16 %v71
    %v238 = vunpack.c.l.b16 %v72
    %v239 = vunpack.c.h.b16 %v72
    %v240 = vunpack.c.l.b16 %v73
    %v241 = vunpack.c.h.b16 %v73
    %v242 = vunpack.c.l.b16 %v74
    %v243 = vunpack.c.h.b16 %v74
    %v244 = vunpack.c.l.b16 %v75
    %v245 = vunpack.c.h.b16 %v75
    %v246 = vunpack.c.l.b16 %v76
    %v247 = vunpack.c.h.b16 %v76
    %v248 = vunpack.c.l.b16 %v77
    %v249 = vunpack.c.h.b16 %v77
    %v250 = vunpack.c.l.b16 %v78
    %v251 = vunpack.c.h.b16 %v78
    %v252 = vunpack.c.l.b16 %v79
    %v253 = vunpack.c.h.b16 %v79
    %v254 = vunpack.c.l.b16 %v80
    %v255 = vunpack.c.h.b16 %v80
    %v256 = vunpack.c.l.b16 %v81
    %v257 = vunpack.c.h.b16 %v81
    %v258 = vunpack.c.l.b16 %v82
    %v259 = vunpack.c.h.b16 %v82
    %v260 = vunpack.c.l.b16 %v83
    %v261 = vunpack.c.h.b16 %v83
    %v262 = vunpack.c.l.b16 %v84
    %v263 = vunpack.c.h.b16 %v84
    %v264 = vunpack.c.l.b16 %v85
    %v265 = vunpack.c.h.b16 %v85
    %v266 = vunpack.c.l.b16 %v86
    %v267 = vunpack.c.h.b16 %v86
    %v268 = vunpack.c.l.b16 %v87
    %v269 = vunpack.c.h.b16 %v87
    %v270 = vunpack.c.l.b16 %v88
    %v271 = vunpack.c.h.b16 %v88
    %v272 = vunpack.c.l.b16 %v89
    %v273 = vunpack.c.h.b16 %v89
    %v274 = vunpack.c.l.b16 %v90
    %v275 = vunpack.c.h.b16 %v90
    %v276 = vunpack.c.l.b16 %v91
    %v277 = vunpack.c.h.b16 %v91
    %v278 = vunpack.c.l.b16 %v92
    %v279 = vunpack.c.h.b16 %v92
    %v280 = vunpack.c.l.b16 %v93
    %v281 = vunpack.c.h.b16 %v93
    %v282 = vunpack.c.l.b16 %v94
    %v283 = vunpack.c.h.b16 %v94
    %v284 = vunpack.c.l.b16 %v95
    %v285 = vunpack.c.h.b16 %v95
    %v286 = vunpack.c.l.b16 %v96
    %v287 = vunpack.c.h.b16 %v96
    %v288 = vunpack.c.l.b16 %v97
    %v289 = vunpack.c.h.b16 %v97
    %v290 = vunpack.c.l.b16 %v98
    %v291 = vunpack.c.h.b16 %v98
    %v292 = vunpack.c.l.b16 %v99
    %v293 = vunpack.c.h.b16 %v99
    %v294 = vunpack.c.l.b16 %v100
    %v295 = vunpack.c.h.b16 %v100
    %v296 = vunpack.c.l.b16 %v101
    %v297 = vunpack.c.h.b16 %v101
    %v298 = vunpack.c.l.b16 %v102
    %v299 = vunpack.c.h.b16 %v102
    %v300 = vunpack.c.l.b16 %v103
    %v301 = vunpack.c.h.b16 %v103
    %v302 = vunpack.c.l.b16 %v104
    %v303 = vunpack.c.h.b16 %v104
    %v304 = vunpack.c.l.b16 %v105
    %v305 = vunpack.c.h.b16 %v105
    %v306 = vunpack.c.l.b16 %v106
    %v307 = vunpack.c.h.b16 %v106
    %v308 = vunpack.c.l.b16 %v107
    %v309 = vunpack.c.h.b16 %v107
    %v310 = vunpack.c.l.b16 %v108
    %v311 = vunpack.c.h.b16 %v108
    %v312 = vunpack.c.l.b16 %v109
    %v313 = vunpack.c.h.b16 %v109
    %v314 = vpack.c.b16 %v194, %v186
    %v315 = vpack.c.b16 %v195, %v187
    %v316 = vpack.c.b16 %v196, %v188
    %v317 = vpack.c.b16 %v197, %v189
    %v318 = vpack.c.b16 %v198, %v190
    %v319 = vpack.c.b16 %v199, %v191
    %v320 = vpack.c.b16 %v200, %v192
    %v321 = vpack.c.b16 %v201, %v193
    %v322 = vpack.c.b16 %v210, %v202
    %v323 = vpack.c.b16 %v211, %v203
    %v324 = vpack.c.b16 %v212, %v204
    %v325 = vpack.c.b16 %v213, %v205
    %v326 = vpack.c.b16 %v214, %v206
    %v327 = vpack.c.b16 %v215, %v207
    %v328 = vpack.c.b16 %v216, %v208
    %v329 = vpack.c.b16 %v217, %v209
    %v330 = vpack.c.b16 %v226, %v218
    %v331 = vpack.c.b16 %v227, %v219
    %v332 = vpack.c.b16 %v228, %v220
    %v333 = vpack.c.b16 %v229, %v221
    %v334 = vpack.c.b16 %v230, %v222
    %v335 = vpack.c.b16 %v231, %v223
    %v336 = vpack.c.b16 %v232, %v224
    %v337 = vpack.c.b16 %v233, %v225
    %v338 = vpack.c.b16 %v242, %v234
    %v339 = vpack.c.b16 %v243, %v235
    %v340 = vpack.c.b16 %v244, %v236
    %v341 = vpack.c.b16 %v245, %v237
    %v342 = vpack.c.b16 %v246, %v238
    %v343 = vpack.c.b16 %v247, %v239
    %v344 = vpack.c.b16 %v248, %v240
    %v345 = vpack.c.b16 %v249, %v241
    %v346 = vpack.c.b16 %v258, %v250
    %v347 = vpack.c.b16 %v259, %v251
    %v348 = vpack.c.b16 %v260, %v252
    %v349 = vpack.c.b16 %v261, %v253
    %v350 = vpack.c.b16 %v262, %v254
    %v351 = vpack.c.b16 %v263, %v255
    %v352 = vpack.c.b16 %v264, %v256
    %v353 = vpack.c.b16 %v265, %v257
    %v354 = vpack.c.b16 %v274, %v266
    %v355 = vpack.c.b16 %v275, %v267
    %v356 = vpack.c.b16 %v276, %v268
    %v357 = vpack.c.b16 %v277, %v269
    %v358 = vpack.c.b16 %v278, %v270
    %v359 = vpack.c.b16 %v279, %v271
    %v360 = vpack.c.b16 %v280, %v272
    %v361 = vpack.c.b16 %v281, %v273
    %v362 = vpack.c.b16 %v290, %v282
    %v363 = vpack.c.b16 %v291, %v283
    %v364 = vpack.c.b16 %v292, %v284
    %v365 = vpack.c.b16 %v293, %v285
    %v366 = vpack.c.b16 %v294, %v286
    %v367 = vpack.c.b16 %v295, %v287
    %v368 = vpack.c.b16 %v296, %v288
    %v369 = vpack.c.b16 %v297, %v289
    %v370 = vpack.c.b16 %v306, %v298
    %v371 = vpack.c.b16 %v307, %v299
    %v372 = vpack.c.b16 %v308, %v300
    %v373 = vpack.c.b16 %v309, %v301
    %v374 = vpack.c.b16 %v310, %v302
    %v375 = vpack.c.b16 %v311, %v303
    %v376 = vpack.c.b16 %v312, %v304
    %v377 = vpack.c.b16 %v313, %v305
    %442 = vmatprep.subr.bf16.mxu0 %v371
    %443 = vmatpush1.bf16.msra.mxu0 %v370
    %444 = vmatprep.subr.bf16.mxu0 %v363
    %445 = vmatpush1.bf16.msra.mxu0 %v362
    %446 = vmatprep.subr.bf16.mxu0 %v355
    %447 = vmatpush1.bf16.msra.mxu0 %v354
    %448 = vmatprep.subr.bf16.mxu0 %v347
    %449 = vmatpush1.bf16.msra.mxu0 %v346
    %450 = vmatprep.subr.bf16.mxu0 %v339
    %451 = vmatpush1.bf16.msra.mxu0 %v338
    %452 = vmatprep.subr.bf16.mxu0 %v331
    %453 = vmatpush1.bf16.msra.mxu0 %v330
    %454 = vmatprep.subr.bf16.mxu0 %v323
    %455 = vmatpush1.bf16.msra.mxu0 %v322
    %456 = vmatprep.subr.bf16.mxu0 %v315
    %457 = vmatpush1.bf16.msra.mxu0 %v314
    %458 = vmatprep.subr.bf16.mxu0 0
    %459 = vmatpush2.bf16.msra.mxu0 0
    %460 = vmatprep.subr.bf16.mxu0 0
    %461 = vmatpush2.bf16.msra.mxu0 0
    %462 = vmatprep.subr.bf16.mxu0 0
    %463 = vmatpush2.bf16.msra.mxu0 0
    %464 = vmatprep.subr.bf16.mxu0 0
    %465 = vmatpush2.bf16.msra.mxu0 0
    %466 = vmatprep.subr.bf16.mxu0 0
    %467 = vmatpush2.bf16.msra.mxu0 0
    %468 = vmatprep.subr.bf16.mxu0 0
    %469 = vmatpush2.bf16.msra.mxu0 0
    %470 = vmatprep.subr.bf16.mxu0 0
    %471 = vmatpush2.bf16.msra.mxu0 0
    %472 = vmatprep.subr.bf16.mxu0 0
    %473 = vmatpush2.bf16.msra.mxu0 0
    %474 = vmatprep.mubr.bf16.mxu0 0
    %475 = vmatmul.mubr.bf16.gmra.mxu0 %v118
    %v476 = vpop.f32.mrf.mxu0
    %v477 = vadd.f32 0.0, %v476
    %v478 = vpop.f32.mrf.mxu0
    %v479 = vadd.f32 0.0, %v478
    %v480 = vpop.f32.mrf.mxu0
    %v481 = vadd.f32 0.0, %v480
    %v482 = vpop.f32.mrf.mxu0
    %v483 = vadd.f32 0.0, %v482
    %484 = vmatprep.mubr.bf16.mxu0 0
    %485 = vmatmul.mubr.bf16.gmra.mxu0 %v119
    %v486 = vpop.f32.mrf.mxu0
    %v487 = vadd.f32 0.0, %v486
    %v488 = vpop.f32.mrf.mxu0
    %v489 = vadd.f32 0.0, %v488
    %v490 = vpop.f32.mrf.mxu0
    %v491 = vadd.f32 0.0, %v490
    %v492 = vpop.f32.mrf.mxu0
    %v493 = vadd.f32 0.0, %v492
    %494 = vdwg.mxu0
    %495 = vmatprep.subr.bf16.mxu0 %v373
    %496 = vmatpush1.bf16.msra.mxu0 %v372
    %497 = vmatprep.subr.bf16.mxu0 %v365
    %498 = vmatpush1.bf16.msra.mxu0 %v364
    %499 = vmatprep.subr.bf16.mxu0 %v357
    %500 = vmatpush1.bf16.msra.mxu0 %v356
    %501 = vmatprep.subr.bf16.mxu0 %v349
    %502 = vmatpush1.bf16.msra.mxu0 %v348
    %503 = vmatprep.subr.bf16.mxu0 %v341
    %504 = vmatpush1.bf16.msra.mxu0 %v340
    %505 = vmatprep.subr.bf16.mxu0 %v333
    %506 = vmatpush1.bf16.msra.mxu0 %v332
    %507 = vmatprep.subr.bf16.mxu0 %v325
    %508 = vmatpush1.bf16.msra.mxu0 %v324
    %509 = vmatprep.subr.bf16.mxu0 %v317
    %510 = vmatpush1.bf16.msra.mxu0 %v316
    %511 = vmatprep.subr.bf16.mxu0 0
    %512 = vmatpush2.bf16.msra.mxu0 0
    %513 = vmatprep.subr.bf16.mxu0 0
    %514 = vmatpush2.bf16.msra.mxu0 0
    %515 = vmatprep.subr.bf16.mxu0 0
    %516 = vmatpush2.bf16.msra.mxu0 0
    %517 = vmatprep.subr.bf16.mxu0 0
    %518 = vmatpush2.bf16.msra.mxu0 0
    %519 = vmatprep.subr.bf16.mxu0 0
    %520 = vmatpush2.bf16.msra.mxu0 0
    %521 = vmatprep.subr.bf16.mxu0 0
    %522 = vmatpush2.bf16.msra.mxu0 0
    %523 = vmatprep.subr.bf16.mxu0 0
    %524 = vmatpush2.bf16.msra.mxu0 0
    %525 = vmatprep.subr.bf16.mxu0 0
    %526 = vmatpush2.bf16.msra.mxu0 0
    %527 = vmatprep.mubr.bf16.mxu0 0
    %528 = vmatmul.mubr.bf16.gmra.mxu0 %v118
    %v529 = vpop.f32.mrf.mxu0
    %v530 = vadd.f32 0.0, %v529
    %v531 = vpop.f32.mrf.mxu0
    %v532 = vadd.f32 0.0, %v531
    %v533 = vpop.f32.mrf.mxu0
    %v534 = vadd.f32 0.0, %v533
    %v535 = vpop.f32.mrf.mxu0
    %v536 = vadd.f32 0.0, %v535
    %537 = vmatprep.mubr.bf16.mxu0 0
    %538 = vmatmul.mubr.bf16.gmra.mxu0 %v119
    %v539 = vpop.f32.mrf.mxu0
    %v540 = vadd.f32 0.0, %v539
    %v541 = vpop.f32.mrf.mxu0
    %v542 = vadd.f32 0.0, %v541
    %v543 = vpop.f32.mrf.mxu0
    %v544 = vadd.f32 0.0, %v543
    %v545 = vpop.f32.mrf.mxu0
    %v546 = vadd.f32 0.0, %v545
    %547 = vdwg.mxu0
    %548 = vmatprep.subr.bf16.mxu0 %v375
    %549 = vmatpush1.bf16.msra.mxu0 %v374
    %550 = vmatprep.subr.bf16.mxu0 %v367
    %551 = vmatpush1.bf16.msra.mxu0 %v366
    %552 = vmatprep.subr.bf16.mxu0 %v359
    %553 = vmatpush1.bf16.msra.mxu0 %v358
    %554 = vmatprep.subr.bf16.mxu0 %v351
    %555 = vmatpush1.bf16.msra.mxu0 %v350
    %556 = vmatprep.subr.bf16.mxu0 %v343
    %557 = vmatpush1.bf16.msra.mxu0 %v342
    %558 = vmatprep.subr.bf16.mxu0 %v335
    %559 = vmatpush1.bf16.msra.mxu0 %v334
    %560 = vmatprep.subr.bf16.mxu0 %v327
    %561 = vmatpush1.bf16.msra.mxu0 %v326
    %562 = vmatprep.subr.bf16.mxu0 %v319
    %563 = vmatpush1.bf16.msra.mxu0 %v318
    %564 = vmatprep.subr.bf16.mxu0 0
    %565 = vmatpush2.bf16.msra.mxu0 0
    %566 = vmatprep.subr.bf16.mxu0 0
    %567 = vmatpush2.bf16.msra.mxu0 0
    %568 = vmatprep.subr.bf16.mxu0 0
    %569 = vmatpush2.bf16.msra.mxu0 0
    %570 = vmatprep.subr.bf16.mxu0 0
    %571 = vmatpush2.bf16.msra.mxu0 0
    %572 = vmatprep.subr.bf16.mxu0 0
    %573 = vmatpush2.bf16.msra.mxu0 0
    %574 = vmatprep.subr.bf16.mxu0 0
    %575 = vmatpush2.bf16.msra.mxu0 0
    %576 = vmatprep.subr.bf16.mxu0 0
    %577 = vmatpush2.bf16.msra.mxu0 0
    %578 = vmatprep.subr.bf16.mxu0 0
    %579 = vmatpush2.bf16.msra.mxu0 0
    %580 = vmatprep.mubr.bf16.mxu0 0
    %581 = vmatmul.mubr.bf16.gmra.mxu0 %v118
    %v582 = vpop.f32.mrf.mxu0
    %v583 = vadd.f32 0.0, %v582
    %v584 = vpop.f32.mrf.mxu0
    %v585 = vadd.f32 0.0, %v584
    %v586 = vpop.f32.mrf.mxu0
    %v587 = vadd.f32 0.0, %v586
    %v588 = vpop.f32.mrf.mxu0
    %v589 = vadd.f32 0.0, %v588
    %590 = vmatprep.mubr.bf16.mxu0 0
    %591 = vmatmul.mubr.bf16.gmra.mxu0 %v119
    %v592 = vpop.f32.mrf.mxu0
    %v593 = vadd.f32 0.0, %v592
    %v594 = vpop.f32.mrf.mxu0
    %v595 = vadd.f32 0.0, %v594
    %v596 = vpop.f32.mrf.mxu0
    %v597 = vadd.f32 0.0, %v596
    %v598 = vpop.f32.mrf.mxu0
    %v599 = vadd.f32 0.0, %v598
    %600 = vdwg.mxu0
    %601 = vmatprep.subr.bf16.mxu0 %v377
    %602 = vmatpush1.bf16.msra.mxu0 %v376
    %603 = vmatprep.subr.bf16.mxu0 %v369
    %604 = vmatpush1.bf16.msra.mxu0 %v368
    %605 = vmatprep.subr.bf16.mxu0 %v361
    %606 = vmatpush1.bf16.msra.mxu0 %v360
    %607 = vmatprep.subr.bf16.mxu0 %v353
    %608 = vmatpush1.bf16.msra.mxu0 %v352
    %609 = vmatprep.subr.bf16.mxu0 %v345
    %610 = vmatpush1.bf16.msra.mxu0 %v344
    %611 = vmatprep.subr.bf16.mxu0 %v337
    %612 = vmatpush1.bf16.msra.mxu0 %v336
    %613 = vmatprep.subr.bf16.mxu0 %v329
    %614 = vmatpush1.bf16.msra.mxu0 %v328
    %615 = vmatprep.subr.bf16.mxu0 %v321
    %616 = vmatpush1.bf16.msra.mxu0 %v320
    %617 = vmatprep.subr.bf16.mxu0 0
    %618 = vmatpush2.bf16.msra.mxu0 0
    %619 = vmatprep.subr.bf16.mxu0 0
    %620 = vmatpush2.bf16.msra.mxu0 0
    %621 = vmatprep.subr.bf16.mxu0 0
    %622 = vmatpush2.bf16.msra.mxu0 0
    %623 = vmatprep.subr.bf16.mxu0 0
    %624 = vmatpush2.bf16.msra.mxu0 0
    %625 = vmatprep.subr.bf16.mxu0 0
    %626 = vmatpush2.bf16.msra.mxu0 0
    %627 = vmatprep.subr.bf16.mxu0 0
    %628 = vmatpush2.bf16.msra.mxu0 0
    %629 = vmatprep.subr.bf16.mxu0 0
    %630 = vmatpush2.bf16.msra.mxu0 0
    %631 = vmatprep.subr.bf16.mxu0 0
    %632 = vmatpush2.bf16.msra.mxu0 0
    %633 = vmatprep.mubr.bf16.mxu0 0
    %634 = vmatmul.mubr.bf16.gmra.mxu0 %v118
    %v635 = vpop.f32.mrf.mxu0
    %v636 = vadd.f32 0.0, %v635
    %v637 = vpop.f32.mrf.mxu0
    %v638 = vadd.f32 0.0, %v637
    %v639 = vpop.f32.mrf.mxu0
    %v640 = vadd.f32 0.0, %v639
    %v641 = vpop.f32.mrf.mxu0
    %v642 = vadd.f32 0.0, %v641
    %643 = vmatprep.mubr.bf16.mxu0 0
    %644 = vmatmul.mubr.bf16.gmra.mxu0 %v119
    %v645 = vpop.f32.mrf.mxu0
    %v646 = vadd.f32 0.0, %v645
    %v647 = vpop.f32.mrf.mxu0
    %v648 = vadd.f32 0.0, %v647
    %v649 = vpop.f32.mrf.mxu0
    %v650 = vadd.f32 0.0, %v649
    %v651 = vpop.f32.mrf.mxu0
    %v652 = vadd.f32 0.0, %v651
    %653 = vdwg.mxu0
    %v654 = vlaneseq
    %v655 = vand.u32 %v654, 127
    %v656 = vadd.s32 %v655, 128
    %v657 = vadd.s32 %v655, 256
    %v658 = vadd.s32 %v655, 384
    %v659 = vadd.s32 %v655, 512
    %v660 = vadd.s32 %v655, 640
    %v661 = vadd.s32 %v655, 768
    %v662 = vadd.s32 %v655, 896
    %663 = vrot.lane.b32.xlu0 %v655, 2
    %v664 = vpop.permute.xlu0 %663
    %665 = vrot.lane.b32.xlu0 %v656, 2
    %v666 = vpop.permute.xlu0 %665
    %667 = vrot.lane.b32.xlu0 %v657, 2
    %v668 = vpop.permute.xlu0 %667
    %669 = vrot.lane.b32.xlu0 %v658, 2
    %v670 = vpop.permute.xlu0 %669
    %671 = vrot.lane.b32.xlu0 %v659, 2
    %v672 = vpop.permute.xlu0 %671
    %673 = vrot.lane.b32.xlu0 %v660, 2
    %v674 = vpop.permute.xlu0 %673
    %675 = vrot.lane.b32.xlu0 %v661, 2
    %v676 = vpop.permute.xlu0 %675
    %677 = vrot.lane.b32.xlu0 %v662, 2
    %v678 = vpop.permute.xlu0 %677
    %vm679 = vcmp.lt.s32.totalorder %v655, 2
    %v680 = vsel %vm679, %v676, %v678
    %v681 = vsel %vm679, %v674, %v676
    %v682 = vsel %vm679, %v672, %v674
    %v683 = vsel %vm679, %v670, %v672
    %v684 = vsel %vm679, %v668, %v670
    %v685 = vsel %vm679, %v666, %v668
    %v686 = vsel %vm679, %v664, %v666
    %v687 = vsel %vm679, %v678, %v664
    %v688 = vxor.u32 %v687, %v655
    %v689 = vxor.u32 %v686, %v656
    %v690 = vxor.u32 %v685, %v657
    %v691 = vxor.u32 %v684, %v658
    %v692 = vxor.u32 %v683, %v659
    %v693 = vxor.u32 %v682, %v660
    %v694 = vxor.u32 %v681, %v661
    %v695 = vxor.u32 %v680, %v662
    %vm696 = vcmp.eq.s32.totalorder %v688, 2
    %vm697 = vcmp.eq.s32.totalorder %v689, 2
    %vm698 = vcmp.eq.s32.totalorder %v690, 2
    %vm699 = vcmp.eq.s32.totalorder %v691, 2
    %vm700 = vcmp.eq.s32.totalorder %v692, 2
    %vm701 = vcmp.eq.s32.totalorder %v693, 2
    %vm702 = vcmp.eq.s32.totalorder %v694, 2
    %vm703 = vcmp.eq.s32.totalorder %v695, 2
    %704 = vrot.lane.b32.xlu0 %v655, 4
    %v705 = vpop.permute.xlu0 %704
    %706 = vrot.lane.b32.xlu0 %v656, 4
    %v707 = vpop.permute.xlu0 %706
    %708 = vrot.lane.b32.xlu0 %v657, 4
    %v709 = vpop.permute.xlu0 %708
    %710 = vrot.lane.b32.xlu0 %v658, 4
    %v711 = vpop.permute.xlu0 %710
    %712 = vrot.lane.b32.xlu0 %v659, 4
    %v713 = vpop.permute.xlu0 %712
    %714 = vrot.lane.b32.xlu0 %v660, 4
    %v715 = vpop.permute.xlu0 %714
    %716 = vrot.lane.b32.xlu0 %v661, 4
    %v717 = vpop.permute.xlu0 %716
    %718 = vrot.lane.b32.xlu0 %v662, 4
    %v719 = vpop.permute.xlu0 %718
    %vm720 = vcmp.lt.s32.totalorder %v655, 4
    %v721 = vsel %vm720, %v717, %v719
    %v722 = vsel %vm720, %v715, %v717
    %v723 = vsel %vm720, %v713, %v715
    %v724 = vsel %vm720, %v711, %v713
    %v725 = vsel %vm720, %v709, %v711
    %v726 = vsel %vm720, %v707, %v709
    %v727 = vsel %vm720, %v705, %v707
    %v728 = vsel %vm720, %v719, %v705
    %v729 = vxor.u32 %v728, %v655
    %v730 = vxor.u32 %v727, %v656
    %v731 = vxor.u32 %v726, %v657
    %v732 = vxor.u32 %v725, %v658
    %v733 = vxor.u32 %v724, %v659
    %v734 = vxor.u32 %v723, %v660
    %v735 = vxor.u32 %v722, %v661
    %v736 = vxor.u32 %v721, %v662
    %vm737 = vcmp.eq.s32.totalorder %v729, 4
    %vm738 = vcmp.eq.s32.totalorder %v730, 4
    %vm739 = vcmp.eq.s32.totalorder %v731, 4
    %vm740 = vcmp.eq.s32.totalorder %v732, 4
    %vm741 = vcmp.eq.s32.totalorder %v733, 4
    %vm742 = vcmp.eq.s32.totalorder %v734, 4
    %vm743 = vcmp.eq.s32.totalorder %v735, 4
    %vm744 = vcmp.eq.s32.totalorder %v736, 4
    %745 = vrot.lane.b32.xlu0 %v655, 8
    %v746 = vpop.permute.xlu0 %745
    %747 = vrot.lane.b32.xlu0 %v656, 8
    %v748 = vpop.permute.xlu0 %747
    %749 = vrot.lane.b32.xlu0 %v657, 8
    %v750 = vpop.permute.xlu0 %749
    %751 = vrot.lane.b32.xlu0 %v658, 8
    %v752 = vpop.permute.xlu0 %751
    %753 = vrot.lane.b32.xlu0 %v659, 8
    %v754 = vpop.permute.xlu0 %753
    %755 = vrot.lane.b32.xlu0 %v660, 8
    %v756 = vpop.permute.xlu0 %755
    %757 = vrot.lane.b32.xlu0 %v661, 8
    %v758 = vpop.permute.xlu0 %757
    %759 = vrot.lane.b32.xlu0 %v662, 8
    %v760 = vpop.permute.xlu0 %759
    %vm761 = vcmp.lt.s32.totalorder %v655, 8
    %v762 = vsel %vm761, %v758, %v760
    %v763 = vsel %vm761, %v756, %v758
    %v764 = vsel %vm761, %v754, %v756
    %v765 = vsel %vm761, %v752, %v754
    %v766 = vsel %vm761, %v750, %v752
    %v767 = vsel %vm761, %v748, %v750
    %v768 = vsel %vm761, %v746, %v748
    %v769 = vsel %vm761, %v760, %v746
    %v770 = vxor.u32 %v769, %v655
    %v771 = vxor.u32 %v768, %v656
    %v772 = vxor.u32 %v767, %v657
    %v773 = vxor.u32 %v766, %v658
    %v774 = vxor.u32 %v765, %v659
    %v775 = vxor.u32 %v764, %v660
    %v776 = vxor.u32 %v763, %v661
    %v777 = vxor.u32 %v762, %v662
    %vm778 = vcmp.eq.s32.totalorder %v770, 8
    %vm779 = vcmp.eq.s32.totalorder %v771, 8
    %vm780 = vcmp.eq.s32.totalorder %v772, 8
    %vm781 = vcmp.eq.s32.totalorder %v773, 8
    %vm782 = vcmp.eq.s32.totalorder %v774, 8
    %vm783 = vcmp.eq.s32.totalorder %v775, 8
    %vm784 = vcmp.eq.s32.totalorder %v776, 8
    %vm785 = vcmp.eq.s32.totalorder %v777, 8
    %786 = vrot.lane.b32.xlu0 %v655, 16
    %v787 = vpop.permute.xlu0 %786
    %788 = vrot.lane.b32.xlu0 %v656, 16
    %v789 = vpop.permute.xlu0 %788
    %790 = vrot.lane.b32.xlu0 %v657, 16
    %v791 = vpop.permute.xlu0 %790
    %792 = vrot.lane.b32.xlu0 %v658, 16
    %v793 = vpop.permute.xlu0 %792
    %794 = vrot.lane.b32.xlu0 %v659, 16
    %v795 = vpop.permute.xlu0 %794
    %796 = vrot.lane.b32.xlu0 %v660, 16
    %v797 = vpop.permute.xlu0 %796
    %798 = vrot.lane.b32.xlu0 %v661, 16
    %v799 = vpop.permute.xlu0 %798
    %800 = vrot.lane.b32.xlu0 %v662, 16
    %v801 = vpop.permute.xlu0 %800
    %vm802 = vcmp.lt.s32.totalorder %v655, 16
    %v803 = vsel %vm802, %v799, %v801
    %v804 = vsel %vm802, %v797, %v799
    %v805 = vsel %vm802, %v795, %v797
    %v806 = vsel %vm802, %v793, %v795
    %v807 = vsel %vm802, %v791, %v793
    %v808 = vsel %vm802, %v789, %v791
    %v809 = vsel %vm802, %v787, %v789
    %v810 = vsel %vm802, %v801, %v787
    %v811 = vxor.u32 %v810, %v655
    %v812 = vxor.u32 %v809, %v656
    %v813 = vxor.u32 %v808, %v657
    %v814 = vxor.u32 %v807, %v658
    %v815 = vxor.u32 %v806, %v659
    %v816 = vxor.u32 %v805, %v660
    %v817 = vxor.u32 %v804, %v661
    %v818 = vxor.u32 %v803, %v662
    %vm819 = vcmp.eq.s32.totalorder %v811, 16
    %vm820 = vcmp.eq.s32.totalorder %v812, 16
    %vm821 = vcmp.eq.s32.totalorder %v813, 16
    %vm822 = vcmp.eq.s32.totalorder %v814, 16
    %vm823 = vcmp.eq.s32.totalorder %v815, 16
    %vm824 = vcmp.eq.s32.totalorder %v816, 16
    %vm825 = vcmp.eq.s32.totalorder %v817, 16
    %vm826 = vcmp.eq.s32.totalorder %v818, 16
    %827 = vrot.lane.b32.xlu0 %v655, 64
    %v828 = vpop.permute.xlu0 %827
    %829 = vrot.lane.b32.xlu0 %v656, 64
    %v830 = vpop.permute.xlu0 %829
    %831 = vrot.lane.b32.xlu0 %v657, 64
    %v832 = vpop.permute.xlu0 %831
    %833 = vrot.lane.b32.xlu0 %v658, 64
    %v834 = vpop.permute.xlu0 %833
    %835 = vrot.lane.b32.xlu0 %v659, 64
    %v836 = vpop.permute.xlu0 %835
    %837 = vrot.lane.b32.xlu0 %v660, 64
    %v838 = vpop.permute.xlu0 %837
    %839 = vrot.lane.b32.xlu0 %v661, 64
    %v840 = vpop.permute.xlu0 %839
    %841 = vrot.lane.b32.xlu0 %v662, 64
    %v842 = vpop.permute.xlu0 %841
    %vm843 = vcmp.lt.s32.totalorder %v655, 64
    %v844 = vsel %vm843, %v840, %v842
    %v845 = vsel %vm843, %v838, %v840
    %v846 = vsel %vm843, %v836, %v838
    %v847 = vsel %vm843, %v834, %v836
    %v848 = vsel %vm843, %v832, %v834
    %v849 = vsel %vm843, %v830, %v832
    %v850 = vsel %vm843, %v828, %v830
    %v851 = vsel %vm843, %v842, %v828
    %v852 = vxor.u32 %v851, %v655
    %v853 = vxor.u32 %v850, %v656
    %v854 = vxor.u32 %v849, %v657
    %v855 = vxor.u32 %v848, %v658
    %v856 = vxor.u32 %v847, %v659
    %v857 = vxor.u32 %v846, %v660
    %v858 = vxor.u32 %v845, %v661
    %v859 = vxor.u32 %v844, %v662
    %vm860 = vcmp.eq.s32.totalorder %v852, 64
    %vm861 = vcmp.eq.s32.totalorder %v853, 64
    %vm862 = vcmp.eq.s32.totalorder %v854, 64
    %vm863 = vcmp.eq.s32.totalorder %v855, 64
    %vm864 = vcmp.eq.s32.totalorder %v856, 64
    %vm865 = vcmp.eq.s32.totalorder %v857, 64
    %vm866 = vcmp.eq.s32.totalorder %v858, 64
    %vm867 = vcmp.eq.s32.totalorder %v859, 64
    %v868 = vxor.u32 %v662, %v655
    %v869 = vxor.u32 %v655, %v656
    %v870 = vxor.u32 %v656, %v657
    %v871 = vxor.u32 %v657, %v658
    %v872 = vxor.u32 %v658, %v659
    %v873 = vxor.u32 %v659, %v660
    %v874 = vxor.u32 %v660, %v661
    %v875 = vxor.u32 %v661, %v662
    %vm876 = vcmp.eq.s32.totalorder %v868, 128
    %vm877 = vcmp.eq.s32.totalorder %v869, 128
    %vm878 = vcmp.eq.s32.totalorder %v870, 128
    %vm879 = vcmp.eq.s32.totalorder %v871, 128
    %vm880 = vcmp.eq.s32.totalorder %v872, 128
    %vm881 = vcmp.eq.s32.totalorder %v873, 128
    %vm882 = vcmp.eq.s32.totalorder %v874, 128
    %vm883 = vcmp.eq.s32.totalorder %v875, 128
    %v884 = vadd.f32 %v477, %v481
    %v885 = vadd.f32 %v884, %v487
    %v886 = vadd.f32 %v885, %v491
    %v887 = vrot.slane %v886, 4
    %v888 = vadd.f32 %v886, %v887
    %v889 = vrot.slane %v888, 2
    %v890 = vadd.f32 %v888, %v889
    %v891 = vrot.slane %v890, 1
    %v892 = vadd.f32 %v890, %v891
    %v893 = vadd.f32 %v479, %v483
    %v894 = vadd.f32 %v893, %v489
    %v895 = vadd.f32 %v894, %v493
    %v896 = vrot.slane %v895, 4
    %v897 = vadd.f32 %v895, %v896
    %v898 = vrot.slane %v897, 2
    %v899 = vadd.f32 %v897, %v898
    %v900 = vrot.slane %v899, 1
    %v901 = vadd.f32 %v899, %v900
    %v902 = vadd.f32 %v530, %v534
    %v903 = vadd.f32 %v902, %v540
    %v904 = vadd.f32 %v903, %v544
    %v905 = vrot.slane %v904, 4
    %v906 = vadd.f32 %v904, %v905
    %v907 = vrot.slane %v906, 2
    %v908 = vadd.f32 %v906, %v907
    %v909 = vrot.slane %v908, 1
    %v910 = vadd.f32 %v908, %v909
    %v911 = vadd.f32 %v532, %v536
    %v912 = vadd.f32 %v911, %v542
    %v913 = vadd.f32 %v912, %v546
    %v914 = vrot.slane %v913, 4
    %v915 = vadd.f32 %v913, %v914
    %v916 = vrot.slane %v915, 2
    %v917 = vadd.f32 %v915, %v916
    %v918 = vrot.slane %v917, 1
    %v919 = vadd.f32 %v917, %v918
    %v920 = vadd.f32 %v583, %v587
    %v921 = vadd.f32 %v920, %v593
    %v922 = vadd.f32 %v921, %v597
    %v923 = vrot.slane %v922, 4
    %v924 = vadd.f32 %v922, %v923
    %v925 = vrot.slane %v924, 2
    %v926 = vadd.f32 %v924, %v925
    %v927 = vrot.slane %v926, 1
    %v928 = vadd.f32 %v926, %v927
    %v929 = vadd.f32 %v585, %v589
    %v930 = vadd.f32 %v929, %v595
    %v931 = vadd.f32 %v930, %v599
    %v932 = vrot.slane %v931, 4
    %v933 = vadd.f32 %v931, %v932
    %v934 = vrot.slane %v933, 2
    %v935 = vadd.f32 %v933, %v934
    %v936 = vrot.slane %v935, 1
    %v937 = vadd.f32 %v935, %v936
    %v938 = vadd.f32 %v636, %v640
    %v939 = vadd.f32 %v938, %v646
    %v940 = vadd.f32 %v939, %v650
    %v941 = vrot.slane %v940, 4
    %v942 = vadd.f32 %v940, %v941
    %v943 = vrot.slane %v942, 2
    %v944 = vadd.f32 %v942, %v943
    %v945 = vrot.slane %v944, 1
    %v946 = vadd.f32 %v944, %v945
    %v947 = vadd.f32 %v638, %v642
    %v948 = vadd.f32 %v947, %v648
    %v949 = vadd.f32 %v948, %v652
    %v950 = vrot.slane %v949, 4
    %v951 = vadd.f32 %v949, %v950
    %v952 = vrot.slane %v951, 2
    %v953 = vadd.f32 %v951, %v952
    %v954 = vrot.slane %v953, 1
    %v955 = vadd.f32 %v953, %v954
    %v956 = vmul.f32 %v892, 0.03125
    %v957 = vmul.f32 %v901, 0.03125
    %v958 = vmul.f32 %v910, 0.03125
    %v959 = vmul.f32 %v919, 0.03125
    %v960 = vmul.f32 %v928, 0.03125
    %v961 = vmul.f32 %v937, 0.03125
    %v962 = vmul.f32 %v946, 0.03125
    %v963 = vmul.f32 %v955, 0.03125
    %v964 = vsub.f32 %v477, %v956
    %v965 = vsub.f32 %v479, %v957
    %v966 = vsub.f32 %v530, %v958
    %v967 = vsub.f32 %v532, %v959
    %v968 = vsub.f32 %v583, %v960
    %v969 = vsub.f32 %v585, %v961
    %v970 = vsub.f32 %v636, %v962
    %v971 = vsub.f32 %v638, %v963
    %v972 = vsub.f32 %v481, %v956
    %v973 = vsub.f32 %v483, %v957
    %v974 = vsub.f32 %v534, %v958
    %v975 = vsub.f32 %v536, %v959
    %v976 = vsub.f32 %v587, %v960
    %v977 = vsub.f32 %v589, %v961
    %v978 = vsub.f32 %v640, %v962
    %v979 = vsub.f32 %v642, %v963
    %v980 = vsub.f32 %v487, %v956
    %v981 = vsub.f32 %v489, %v957
    %v982 = vsub.f32 %v540, %v958
    %v983 = vsub.f32 %v542, %v959
    %v984 = vsub.f32 %v593, %v960
    %v985 = vsub.f32 %v595, %v961
    %v986 = vsub.f32 %v646, %v962
    %v987 = vsub.f32 %v648, %v963
    %v988 = vsub.f32 %v491, %v956
    %v989 = vsub.f32 %v493, %v957
    %v990 = vsub.f32 %v544, %v958
    %v991 = vsub.f32 %v546, %v959
    %v992 = vsub.f32 %v597, %v960
    %v993 = vsub.f32 %v599, %v961
    %v994 = vsub.f32 %v650, %v962
    %v995 = vsub.f32 %v652, %v963
    %v996 = vmul.f32 %v964, %v964
    %v997 = vmul.f32 %v965, %v965
    %v998 = vmul.f32 %v966, %v966
    %v999 = vmul.f32 %v967, %v967
    %v1000 = vmul.f32 %v968, %v968
    %v1001 = vmul.f32 %v969, %v969
    %v1002 = vmul.f32 %v970, %v970
    %v1003 = vmul.f32 %v971, %v971
    %v1004 = vmul.f32 %v972, %v972
    %v1005 = vmul.f32 %v973, %v973
    %v1006 = vmul.f32 %v974, %v974
    %v1007 = vmul.f32 %v975, %v975
    %v1008 = vmul.f32 %v976, %v976
    %v1009 = vmul.f32 %v977, %v977
    %v1010 = vmul.f32 %v978, %v978
    %v1011 = vmul.f32 %v979, %v979
    %v1012 = vmul.f32 %v980, %v980
    %v1013 = vmul.f32 %v981, %v981
    %v1014 = vmul.f32 %v982, %v982
    %v1015 = vmul.f32 %v983, %v983
    %v1016 = vmul.f32 %v984, %v984
    %v1017 = vmul.f32 %v985, %v985
    %v1018 = vmul.f32 %v986, %v986
    %v1019 = vmul.f32 %v987, %v987
    %v1020 = vmul.f32 %v988, %v988
    %v1021 = vmul.f32 %v989, %v989
    %v1022 = vmul.f32 %v990, %v990
    %v1023 = vmul.f32 %v991, %v991
    %v1024 = vmul.f32 %v992, %v992
    %v1025 = vmul.f32 %v993, %v993
    %v1026 = vmul.f32 %v994, %v994
    %v1027 = vmul.f32 %v995, %v995
    %v1028 = vadd.f32 %v996, %v1004
    %v1029 = vadd.f32 %v1028, %v1012
    %v1030 = vadd.f32 %v1029, %v1020
    %v1031 = vrot.slane %v1030, 4
    %v1032 = vadd.f32 %v1030, %v1031
    %v1033 = vrot.slane %v1032, 2
    %v1034 = vadd.f32 %v1032, %v1033
    %v1035 = vrot.slane %v1034, 1
    %v1036 = vadd.f32 %v1034, %v1035
    %v1037 = vadd.f32 %v997, %v1005
    %v1038 = vadd.f32 %v1037, %v1013
    %v1039 = vadd.f32 %v1038, %v1021
    %v1040 = vrot.slane %v1039, 4
    %v1041 = vadd.f32 %v1039, %v1040
    %v1042 = vrot.slane %v1041, 2
    %v1043 = vadd.f32 %v1041, %v1042
    %v1044 = vrot.slane %v1043, 1
    %v1045 = vadd.f32 %v1043, %v1044
    %v1046 = vadd.f32 %v998, %v1006
    %v1047 = vadd.f32 %v1046, %v1014
    %v1048 = vadd.f32 %v1047, %v1022
    %v1049 = vrot.slane %v1048, 4
    %v1050 = vadd.f32 %v1048, %v1049
    %v1051 = vrot.slane %v1050, 2
    %v1052 = vadd.f32 %v1050, %v1051
    %v1053 = vrot.slane %v1052, 1
    %v1054 = vadd.f32 %v1052, %v1053
    %v1055 = vadd.f32 %v999, %v1007
    %v1056 = vadd.f32 %v1055, %v1015
    %v1057 = vadd.f32 %v1056, %v1023
    %v1058 = vrot.slane %v1057, 4
    %v1059 = vadd.f32 %v1057, %v1058
    %v1060 = vrot.slane %v1059, 2
    %v1061 = vadd.f32 %v1059, %v1060
    %v1062 = vrot.slane %v1061, 1
    %v1063 = vadd.f32 %v1061, %v1062
    %v1064 = vadd.f32 %v1000, %v1008
    %v1065 = vadd.f32 %v1064, %v1016
    %v1066 = vadd.f32 %v1065, %v1024
    %v1067 = vrot.slane %v1066, 4
    %v1068 = vadd.f32 %v1066, %v1067
    %v1069 = vrot.slane %v1068, 2
    %v1070 = vadd.f32 %v1068, %v1069
    %v1071 = vrot.slane %v1070, 1
    %v1072 = vadd.f32 %v1070, %v1071
    %v1073 = vadd.f32 %v1001, %v1009
    %v1074 = vadd.f32 %v1073, %v1017
    %v1075 = vadd.f32 %v1074, %v1025
    %v1076 = vrot.slane %v1075, 4
    %v1077 = vadd.f32 %v1075, %v1076
    %v1078 = vrot.slane %v1077, 2
    %v1079 = vadd.f32 %v1077, %v1078
    %v1080 = vrot.slane %v1079, 1
    %v1081 = vadd.f32 %v1079, %v1080
    %v1082 = vadd.f32 %v1002, %v1010
    %v1083 = vadd.f32 %v1082, %v1018
    %v1084 = vadd.f32 %v1083, %v1026
    %v1085 = vrot.slane %v1084, 4
    %v1086 = vadd.f32 %v1084, %v1085
    %v1087 = vrot.slane %v1086, 2
    %v1088 = vadd.f32 %v1086, %v1087
    %v1089 = vrot.slane %v1088, 1
    %v1090 = vadd.f32 %v1088, %v1089
    %v1091 = vadd.f32 %v1003, %v1011
    %v1092 = vadd.f32 %v1091, %v1019
    %v1093 = vadd.f32 %v1092, %v1027
    %v1094 = vrot.slane %v1093, 4
    %v1095 = vadd.f32 %v1093, %v1094
    %v1096 = vrot.slane %v1095, 2
    %v1097 = vadd.f32 %v1095, %v1096
    %v1098 = vrot.slane %v1097, 1
    %v1099 = vadd.f32 %v1097, %v1098
    %v1100 = vmul.f32 %v1036, 0.03125
    %v1101 = vmul.f32 %v1045, 0.03125
    %v1102 = vmul.f32 %v1054, 0.03125
    %v1103 = vmul.f32 %v1063, 0.03125
    %v1104 = vmul.f32 %v1072, 0.03125
    %v1105 = vmul.f32 %v1081, 0.03125
    %v1106 = vmul.f32 %v1090, 0.03125
    %v1107 = vmul.f32 %v1099, 0.03125
    %v1108 = vadd.f32 %v1100, 1e-05
    %v1109 = vadd.f32 %v1101, 1e-05
    %v1110 = vadd.f32 %v1102, 1e-05
    %v1111 = vadd.f32 %v1103, 1e-05
    %v1112 = vadd.f32 %v1104, 1e-05
    %v1113 = vadd.f32 %v1105, 1e-05
    %v1114 = vadd.f32 %v1106, 1e-05
    %v1115 = vadd.f32 %v1107, 1e-05
    %v1116 = vrsqrt.pop %v1108
    %v1117 = vrsqrt.pop %v1109
    %v1118 = vrsqrt.pop %v1110
    %v1119 = vrsqrt.pop %v1111
    %v1120 = vrsqrt.pop %v1112
    %v1121 = vrsqrt.pop %v1113
    %v1122 = vrsqrt.pop %v1114
    %v1123 = vrsqrt.pop %v1115
    %v1124 = vld [vmem:[#allocation2] ss:$8 sm:$0xf]
    %v1125 = vld [vmem:[#allocation2] ss:$8 sm:$0xf0]
    %v1126 = vor.u32 %v1124, %v1125
    %v1128 = vlaneseq
    %v1129 = vshrl.u32 %v1128, 7
    %v1130 = vsub.s32 0, %v1129
    %v1131 = vrot.slane %v1126, %v1130
    %v1132 = vlaneseq
    %v1133 = vshrl.u32 %v1132, 7
    %v1134 = vsub.s32 1, %v1133
    %v1135 = vrot.slane %v1126, %v1134
    %v1136 = vlaneseq
    %v1137 = vshrl.u32 %v1136, 7
    %v1138 = vsub.s32 2, %v1137
    %v1139 = vrot.slane %v1126, %v1138
    %v1140 = vlaneseq
    %v1141 = vshrl.u32 %v1140, 7
    %v1142 = vsub.s32 3, %v1141
    %v1143 = vrot.slane %v1126, %v1142
    %v1144 = vlaneseq
    %v1145 = vshrl.u32 %v1144, 7
    %v1146 = vsub.s32 4, %v1145
    %v1147 = vrot.slane %v1126, %v1146
    %v1148 = vlaneseq
    %v1149 = vshrl.u32 %v1148, 7
    %v1150 = vsub.s32 5, %v1149
    %v1151 = vrot.slane %v1126, %v1150
    %v1152 = vlaneseq
    %v1153 = vshrl.u32 %v1152, 7
    %v1154 = vsub.s32 6, %v1153
    %v1155 = vrot.slane %v1126, %v1154
    %v1156 = vlaneseq
    %v1157 = vshrl.u32 %v1156, 7
    %v1158 = vsub.s32 7, %v1157
    %v1159 = vrot.slane %v1126, %v1158
    %v1168 = vmul.f32 %v1116, %v1131
    %v1169 = vmul.f32 %v1117, %v1135
    %v1170 = vmul.f32 %v1118, %v1139
    %v1171 = vmul.f32 %v1119, %v1143
    %v1172 = vmul.f32 %v1120, %v1147
    %v1173 = vmul.f32 %v1121, %v1151
    %v1174 = vmul.f32 %v1122, %v1155
    %v1175 = vmul.f32 %v1123, %v1159
    %v1176 = vlaneseq
    %v1177 = vshrl.u32 %v1176, 7
    %v1178 = vsub.s32 0, %v1177
    %v1179 = vrot.slane %v1168, %v1178
    %v1180 = vlaneseq
    %v1181 = vshrl.u32 %v1180, 7
    %v1182 = vsub.s32 0, %v1181
    %v1183 = vrot.slane %v1169, %v1182
    %v1184 = vlaneseq
    %v1185 = vshrl.u32 %v1184, 7
    %v1186 = vsub.s32 0, %v1185
    %v1187 = vrot.slane %v1170, %v1186
    %v1188 = vlaneseq
    %v1189 = vshrl.u32 %v1188, 7
    %v1190 = vsub.s32 0, %v1189
    %v1191 = vrot.slane %v1171, %v1190
    %v1192 = vlaneseq
    %v1193 = vshrl.u32 %v1192, 7
    %v1194 = vsub.s32 0, %v1193
    %v1195 = vrot.slane %v1172, %v1194
    %v1196 = vlaneseq
    %v1197 = vshrl.u32 %v1196, 7
    %v1198 = vsub.s32 0, %v1197
    %v1199 = vrot.slane %v1173, %v1198
    %v1200 = vlaneseq
    %v1201 = vshrl.u32 %v1200, 7
    %v1202 = vsub.s32 0, %v1201
    %v1203 = vrot.slane %v1174, %v1202
    %v1204 = vlaneseq
    %v1205 = vshrl.u32 %v1204, 7
    %v1206 = vsub.s32 0, %v1205
    %v1207 = vrot.slane %v1175, %v1206
    %v1208 = vmul.f32 %v964, %v1179
    %v1209 = vmul.f32 %v965, %v1183
    %v1210 = vmul.f32 %v966, %v1187
    %v1211 = vmul.f32 %v967, %v1191
    %v1212 = vmul.f32 %v968, %v1195
    %v1213 = vmul.f32 %v969, %v1199
    %v1214 = vmul.f32 %v970, %v1203
    %v1215 = vmul.f32 %v971, %v1207
    %v1216 = vmul.f32 %v972, %v1179
    %v1217 = vmul.f32 %v973, %v1183
    %v1218 = vmul.f32 %v974, %v1187
    %v1219 = vmul.f32 %v975, %v1191
    %v1220 = vmul.f32 %v976, %v1195
    %v1221 = vmul.f32 %v977, %v1199
    %v1222 = vmul.f32 %v978, %v1203
    %v1223 = vmul.f32 %v979, %v1207
    %v1224 = vmul.f32 %v980, %v1179
    %v1225 = vmul.f32 %v981, %v1183
    %v1226 = vmul.f32 %v982, %v1187
    %v1227 = vmul.f32 %v983, %v1191
    %v1228 = vmul.f32 %v984, %v1195
    %v1229 = vmul.f32 %v985, %v1199
    %v1230 = vmul.f32 %v986, %v1203
    %v1231 = vmul.f32 %v987, %v1207
    %v1232 = vmul.f32 %v988, %v1179
    %v1233 = vmul.f32 %v989, %v1183
    %v1234 = vmul.f32 %v990, %v1187
    %v1235 = vmul.f32 %v991, %v1191
    %v1236 = vmul.f32 %v992, %v1195
    %v1237 = vmul.f32 %v993, %v1199
    %v1238 = vmul.f32 %v994, %v1203
    %v1239 = vmul.f32 %v995, %v1207
    %v1240 = vld [vmem:[#allocation4] ss:$8 sm:$0xf]
    %v1241 = vld [vmem:[#allocation4] ss:$8 sm:$0xf0]
    %v1242 = vor.u32 %v1240, %v1241
    %v1244 = vlaneseq
    %v1245 = vshrl.u32 %v1244, 7
    %v1246 = vsub.s32 0, %v1245
    %v1247 = vrot.slane %v1242, %v1246
    %v1248 = vlaneseq
    %v1249 = vshrl.u32 %v1248, 7
    %v1250 = vsub.s32 1, %v1249
    %v1251 = vrot.slane %v1242, %v1250
    %v1252 = vlaneseq
    %v1253 = vshrl.u32 %v1252, 7
    %v1254 = vsub.s32 2, %v1253
    %v1255 = vrot.slane %v1242, %v1254
    %v1256 = vlaneseq
    %v1257 = vshrl.u32 %v1256, 7
    %v1258 = vsub.s32 3, %v1257
    %v1259 = vrot.slane %v1242, %v1258
    %v1260 = vlaneseq
    %v1261 = vshrl.u32 %v1260, 7
    %v1262 = vsub.s32 4, %v1261
    %v1263 = vrot.slane %v1242, %v1262
    %v1264 = vlaneseq
    %v1265 = vshrl.u32 %v1264, 7
    %v1266 = vsub.s32 5, %v1265
    %v1267 = vrot.slane %v1242, %v1266
    %v1268 = vlaneseq
    %v1269 = vshrl.u32 %v1268, 7
    %v1270 = vsub.s32 6, %v1269
    %v1271 = vrot.slane %v1242, %v1270
    %v1272 = vlaneseq
    %v1273 = vshrl.u32 %v1272, 7
    %v1274 = vsub.s32 7, %v1273
    %v1275 = vrot.slane %v1242, %v1274
    %v1284 = vadd.f32 %v1208, %v1247
    %v1285 = vadd.f32 %v1209, %v1251
    %v1286 = vadd.f32 %v1210, %v1255
    %v1287 = vadd.f32 %v1211, %v1259
    %v1288 = vadd.f32 %v1212, %v1263
    %v1289 = vadd.f32 %v1213, %v1267
    %v1290 = vadd.f32 %v1214, %v1271
    %v1291 = vadd.f32 %v1215, %v1275
    %v1292 = vadd.f32 %v1216, %v1247
    %v1293 = vadd.f32 %v1217, %v1251
    %v1294 = vadd.f32 %v1218, %v1255
    %v1295 = vadd.f32 %v1219, %v1259
    %v1296 = vadd.f32 %v1220, %v1263
    %v1297 = vadd.f32 %v1221, %v1267
    %v1298 = vadd.f32 %v1222, %v1271
    %v1299 = vadd.f32 %v1223, %v1275
    %v1300 = vadd.f32 %v1224, %v1247
    %v1301 = vadd.f32 %v1225, %v1251
    %v1302 = vadd.f32 %v1226, %v1255
    %v1303 = vadd.f32 %v1227, %v1259
    %v1304 = vadd.f32 %v1228, %v1263
    %v1305 = vadd.f32 %v1229, %v1267
    %v1306 = vadd.f32 %v1230, %v1271
    %v1307 = vadd.f32 %v1231, %v1275
    %v1308 = vadd.f32 %v1232, %v1247
    %v1309 = vadd.f32 %v1233, %v1251
    %v1310 = vadd.f32 %v1234, %v1255
    %v1311 = vadd.f32 %v1235, %v1259
    %v1312 = vadd.f32 %v1236, %v1263
    %v1313 = vadd.f32 %v1237, %v1267
    %v1314 = vadd.f32 %v1238, %v1271
    %v1315 = vadd.f32 %v1239, %v1275
    %vm1316 = vcmp.ge.f32.partialorder %v1284, 0.0
    %vm1317 = vcmp.ge.f32.partialorder %v1285, 0.0
    %vm1318 = vcmp.ge.f32.partialorder %v1286, 0.0
    %vm1319 = vcmp.ge.f32.partialorder %v1287, 0.0
    %vm1320 = vcmp.ge.f32.partialorder %v1288, 0.0
    %vm1321 = vcmp.ge.f32.partialorder %v1289, 0.0
    %vm1322 = vcmp.ge.f32.partialorder %v1290, 0.0
    %vm1323 = vcmp.ge.f32.partialorder %v1291, 0.0
    %vm1324 = vcmp.ge.f32.partialorder %v1292, 0.0
    %vm1325 = vcmp.ge.f32.partialorder %v1293, 0.0
    %vm1326 = vcmp.ge.f32.partialorder %v1294, 0.0
    %vm1327 = vcmp.ge.f32.partialorder %v1295, 0.0
    %vm1328 = vcmp.ge.f32.partialorder %v1296, 0.0
    %vm1329 = vcmp.ge.f32.partialorder %v1297, 0.0
    %vm1330 = vcmp.ge.f32.partialorder %v1298, 0.0
    %vm1331 = vcmp.ge.f32.partialorder %v1299, 0.0
    %vm1332 = vcmp.ge.f32.partialorder %v1300, 0.0
    %vm1333 = vcmp.ge.f32.partialorder %v1301, 0.0
    %vm1334 = vcmp.ge.f32.partialorder %v1302, 0.0
    %vm1335 = vcmp.ge.f32.partialorder %v1303, 0.0
    %vm1336 = vcmp.ge.f32.partialorder %v1304, 0.0
    %vm1337 = vcmp.ge.f32.partialorder %v1305, 0.0
    %vm1338 = vcmp.ge.f32.partialorder %v1306, 0.0
    %vm1339 = vcmp.ge.f32.partialorder %v1307, 0.0
    %vm1340 = vcmp.ge.f32.partialorder %v1308, 0.0
    %vm1341 = vcmp.ge.f32.partialorder %v1309, 0.0
    %vm1342 = vcmp.ge.f32.partialorder %v1310, 0.0
    %vm1343 = vcmp.ge.f32.partialorder %v1311, 0.0
    %vm1344 = vcmp.ge.f32.partialorder %v1312, 0.0
    %vm1345 = vcmp.ge.f32.partialorder %v1313, 0.0
    %vm1346 = vcmp.ge.f32.partialorder %v1314, 0.0
    %vm1347 = vcmp.ge.f32.partialorder %v1315, 0.0
    %v1348 = vmul.f32 %v1284, 0.01
    %v1349 = vmul.f32 %v1285, 0.01
    %v1350 = vmul.f32 %v1286, 0.01
    %v1351 = vmul.f32 %v1287, 0.01
    %v1352 = vmul.f32 %v1288, 0.01
    %v1353 = vmul.f32 %v1289, 0.01
    %v1354 = vmul.f32 %v1290, 0.01
    %v1355 = vmul.f32 %v1291, 0.01
    %v1356 = vmul.f32 %v1292, 0.01
    %v1357 = vmul.f32 %v1293, 0.01
    %v1358 = vmul.f32 %v1294, 0.01
    %v1359 = vmul.f32 %v1295, 0.01
    %v1360 = vmul.f32 %v1296, 0.01
    %v1361 = vmul.f32 %v1297, 0.01
    %v1362 = vmul.f32 %v1298, 0.01
    %v1363 = vmul.f32 %v1299, 0.01
    %v1364 = vmul.f32 %v1300, 0.01
    %v1365 = vmul.f32 %v1301, 0.01
    %v1366 = vmul.f32 %v1302, 0.01
    %v1367 = vmul.f32 %v1303, 0.01
    %v1368 = vmul.f32 %v1304, 0.01
    %v1369 = vmul.f32 %v1305, 0.01
    %v1370 = vmul.f32 %v1306, 0.01
    %v1371 = vmul.f32 %v1307, 0.01
    %v1372 = vmul.f32 %v1308, 0.01
    %v1373 = vmul.f32 %v1309, 0.01
    %v1374 = vmul.f32 %v1310, 0.01
    %v1375 = vmul.f32 %v1311, 0.01
    %v1376 = vmul.f32 %v1312, 0.01
    %v1377 = vmul.f32 %v1313, 0.01
    %v1378 = vmul.f32 %v1314, 0.01
    %v1379 = vmul.f32 %v1315, 0.01
    %v1380 = vsel %vm1316, %v1284, %v1348
    %v1381 = vsel %vm1317, %v1285, %v1349
    %v1382 = vsel %vm1318, %v1286, %v1350
    %v1383 = vsel %vm1319, %v1287, %v1351
    %v1384 = vsel %vm1320, %v1288, %v1352
    %v1385 = vsel %vm1321, %v1289, %v1353
    %v1386 = vsel %vm1322, %v1290, %v1354
    %v1387 = vsel %vm1323, %v1291, %v1355
    %v1388 = vsel %vm1324, %v1292, %v1356
    %v1389 = vsel %vm1325, %v1293, %v1357
    %v1390 = vsel %vm1326, %v1294, %v1358
    %v1391 = vsel %vm1327, %v1295, %v1359
    %v1392 = vsel %vm1328, %v1296, %v1360
    %v1393 = vsel %vm1329, %v1297, %v1361
    %v1394 = vsel %vm1330, %v1298, %v1362
    %v1395 = vsel %vm1331, %v1299, %v1363
    %v1396 = vsel %vm1332, %v1300, %v1364
    %v1397 = vsel %vm1333, %v1301, %v1365
    %v1398 = vsel %vm1334, %v1302, %v1366
    %v1399 = vsel %vm1335, %v1303, %v1367
    %v1400 = vsel %vm1336, %v1304, %v1368
    %v1401 = vsel %vm1337, %v1305, %v1369
    %v1402 = vsel %vm1338, %v1306, %v1370
    %v1403 = vsel %vm1339, %v1307, %v1371
    %v1404 = vsel %vm1340, %v1308, %v1372
    %v1405 = vsel %vm1341, %v1309, %v1373
    %v1406 = vsel %vm1342, %v1310, %v1374
    %v1407 = vsel %vm1343, %v1311, %v1375
    %v1408 = vsel %vm1344, %v1312, %v1376
    %v1409 = vsel %vm1345, %v1313, %v1377
    %v1410 = vsel %vm1346, %v1314, %v1378
    %v1411 = vsel %vm1347, %v1315, %v1379
    %v1412 = vadd.f32 %v1380, %v1388
    %v1413 = vadd.f32 %v1412, %v1396
    %v1414 = vadd.f32 %v1413, %v1404
    %v1415 = vrot.slane %v1414, 4
    %v1416 = vadd.f32 %v1414, %v1415
    %v1417 = vrot.slane %v1416, 2
    %v1418 = vadd.f32 %v1416, %v1417
    %v1419 = vrot.slane %v1418, 1
    %v1420 = vadd.f32 %v1418, %v1419
    %v1421 = vadd.f32 %v1381, %v1389
    %v1422 = vadd.f32 %v1421, %v1397
    %v1423 = vadd.f32 %v1422, %v1405
    %v1424 = vrot.slane %v1423, 4
    %v1425 = vadd.f32 %v1423, %v1424
    %v1426 = vrot.slane %v1425, 2
    %v1427 = vadd.f32 %v1425, %v1426
    %v1428 = vrot.slane %v1427, 1
    %v1429 = vadd.f32 %v1427, %v1428
    %v1430 = vadd.f32 %v1382, %v1390
    %v1431 = vadd.f32 %v1430, %v1398
    %v1432 = vadd.f32 %v1431, %v1406
    %v1433 = vrot.slane %v1432, 4
    %v1434 = vadd.f32 %v1432, %v1433
    %v1435 = vrot.slane %v1434, 2
    %v1436 = vadd.f32 %v1434, %v1435
    %v1437 = vrot.slane %v1436, 1
    %v1438 = vadd.f32 %v1436, %v1437
    %v1439 = vadd.f32 %v1383, %v1391
    %v1440 = vadd.f32 %v1439, %v1399
    %v1441 = vadd.f32 %v1440, %v1407
    %v1442 = vrot.slane %v1441, 4
    %v1443 = vadd.f32 %v1441, %v1442
    %v1444 = vrot.slane %v1443, 2
    %v1445 = vadd.f32 %v1443, %v1444
    %v1446 = vrot.slane %v1445, 1
    %v1447 = vadd.f32 %v1445, %v1446
    %v1448 = vadd.f32 %v1384, %v1392
    %v1449 = vadd.f32 %v1448, %v1400
    %v1450 = vadd.f32 %v1449, %v1408
    %v1451 = vrot.slane %v1450, 4
    %v1452 = vadd.f32 %v1450, %v1451
    %v1453 = vrot.slane %v1452, 2
    %v1454 = vadd.f32 %v1452, %v1453
    %v1455 = vrot.slane %v1454, 1
    %v1456 = vadd.f32 %v1454, %v1455
    %v1457 = vadd.f32 %v1385, %v1393
    %v1458 = vadd.f32 %v1457, %v1401
    %v1459 = vadd.f32 %v1458, %v1409
    %v1460 = vrot.slane %v1459, 4
    %v1461 = vadd.f32 %v1459, %v1460
    %v1462 = vrot.slane %v1461, 2
    %v1463 = vadd.f32 %v1461, %v1462
    %v1464 = vrot.slane %v1463, 1
    %v1465 = vadd.f32 %v1463, %v1464
    %v1466 = vadd.f32 %v1386, %v1394
    %v1467 = vadd.f32 %v1466, %v1402
    %v1468 = vadd.f32 %v1467, %v1410
    %v1469 = vrot.slane %v1468, 4
    %v1470 = vadd.f32 %v1468, %v1469
    %v1471 = vrot.slane %v1470, 2
    %v1472 = vadd.f32 %v1470, %v1471
    %v1473 = vrot.slane %v1472, 1
    %v1474 = vadd.f32 %v1472, %v1473
    %v1475 = vadd.f32 %v1387, %v1395
    %v1476 = vadd.f32 %v1475, %v1403
    %v1477 = vadd.f32 %v1476, %v1411
    %v1478 = vrot.slane %v1477, 4
    %v1479 = vadd.f32 %v1477, %v1478
    %v1480 = vrot.slane %v1479, 2
    %v1481 = vadd.f32 %v1479, %v1480
    %v1482 = vrot.slane %v1481, 1
    %v1483 = vadd.f32 %v1481, %v1482
    %v1484 = vadd.f32 %v1420, %v1456
    %v1485 = vadd.f32 %v1429, %v1465
    %v1486 = vadd.f32 %v1438, %v1474
    %v1487 = vadd.f32 %v1447, %v1483
    %1488 = vrot.lane.b32.xlu0 %v1484, 16
    %v1489 = vpop.permute.xlu0 %1488
    %1490 = vrot.lane.b32.xlu0 %v1485, 16
    %v1491 = vpop.permute.xlu0 %1490
    %1492 = vrot.lane.b32.xlu0 %v1486, 16
    %v1493 = vpop.permute.xlu0 %1492
    %1494 = vrot.lane.b32.xlu0 %v1487, 16
    %v1495 = vpop.permute.xlu0 %1494
    %v1496 = vsel %vm802, %v1493, %v1495
    %v1497 = vsel %vm802, %v1491, %v1493
    %v1498 = vsel %vm802, %v1489, %v1491
    %v1499 = vsel %vm802, %v1495, %v1489
    %1500 = vrot.lane.b32.xlu0 %v1484, 112
    %v1501 = vpop.permute.xlu0 %1500
    %1502 = vrot.lane.b32.xlu0 %v1485, 112
    %v1503 = vpop.permute.xlu0 %1502
    %1504 = vrot.lane.b32.xlu0 %v1486, 112
    %v1505 = vpop.permute.xlu0 %1504
    %1506 = vrot.lane.b32.xlu0 %v1487, 112
    %v1507 = vpop.permute.xlu0 %1506
    %vm1508 = vcmp.lt.s32.totalorder %v655, 112
    %v1509 = vsel %vm1508, %v1505, %v1507
    %v1510 = vsel %vm1508, %v1503, %v1505
    %v1511 = vsel %vm1508, %v1501, %v1503
    %v1512 = vsel %vm1508, %v1507, %v1501
    %v1513 = vsel %vm819, %v1499, %v1511
    %v1514 = vsel %vm820, %v1498, %v1510
    %v1515 = vsel %vm821, %v1497, %v1509
    %v1516 = vsel %vm822, %v1496, %v1512
    %v1517 = vsel %vm823, %v1499, %v1511
    %v1518 = vsel %vm824, %v1498, %v1510
    %v1519 = vsel %vm825, %v1497, %v1509
    %v1520 = vsel %vm826, %v1496, %v1512
    %v1521 = vadd.f32 %v1484, %v1513
    %v1522 = vadd.f32 %v1485, %v1514
    %v1523 = vadd.f32 %v1486, %v1515
    %v1524 = vadd.f32 %v1487, %v1516
    %v1525 = vadd.f32 %v1484, %v1517
    %v1526 = vadd.f32 %v1485, %v1518
    %v1527 = vadd.f32 %v1486, %v1519
    %v1528 = vadd.f32 %v1487, %v1520
    %v1529 = vmul.f32 %v1521, 0.0078125
    %v1530 = vmul.f32 %v1522, 0.0078125
    %v1531 = vmul.f32 %v1523, 0.0078125
    %v1532 = vmul.f32 %v1524, 0.0078125
    %v1533 = vmul.f32 %v1525, 0.0078125
    %v1534 = vmul.f32 %v1526, 0.0078125
    %v1535 = vmul.f32 %v1527, 0.0078125
    %v1536 = vmul.f32 %v1528, 0.0078125
    %v1537 = vlaneseq
    %v1538 = vshrl.u32 %v1537, 7
    %v1539 = vsub.s32 0, %v1538
    %v1540 = vrot.slane %v1529, %v1539
    %v1541 = vlaneseq
    %v1542 = vshrl.u32 %v1541, 7
    %v1543 = vsub.s32 0, %v1542
    %v1544 = vrot.slane %v1530, %v1543
    %v1545 = vlaneseq
    %v1546 = vshrl.u32 %v1545, 7
    %v1547 = vsub.s32 0, %v1546
    %v1548 = vrot.slane %v1531, %v1547
    %v1549 = vlaneseq
    %v1550 = vshrl.u32 %v1549, 7
    %v1551 = vsub.s32 0, %v1550
    %v1552 = vrot.slane %v1532, %v1551
    %v1553 = vlaneseq
    %v1554 = vshrl.u32 %v1553, 7
    %v1555 = vsub.s32 0, %v1554
    %v1556 = vrot.slane %v1533, %v1555
    %v1557 = vlaneseq
    %v1558 = vshrl.u32 %v1557, 7
    %v1559 = vsub.s32 0, %v1558
    %v1560 = vrot.slane %v1534, %v1559
    %v1561 = vlaneseq
    %v1562 = vshrl.u32 %v1561, 7
    %v1563 = vsub.s32 0, %v1562
    %v1564 = vrot.slane %v1535, %v1563
    %v1565 = vlaneseq
    %v1566 = vshrl.u32 %v1565, 7
    %v1567 = vsub.s32 0, %v1566
    %v1568 = vrot.slane %v1536, %v1567
    %v1569 = vsub.f32 %v1380, %v1540
    %v1570 = vsub.f32 %v1381, %v1544
    %v1571 = vsub.f32 %v1382, %v1548
    %v1572 = vsub.f32 %v1383, %v1552
    %v1573 = vsub.f32 %v1384, %v1556
    %v1574 = vsub.f32 %v1385, %v1560
    %v1575 = vsub.f32 %v1386, %v1564
    %v1576 = vsub.f32 %v1387, %v1568
    %v1577 = vsub.f32 %v1388, %v1540
    %v1578 = vsub.f32 %v1389, %v1544
    %v1579 = vsub.f32 %v1390, %v1548
    %v1580 = vsub.f32 %v1391, %v1552
    %v1581 = vsub.f32 %v1392, %v1556
    %v1582 = vsub.f32 %v1393, %v1560
    %v1583 = vsub.f32 %v1394, %v1564
    %v1584 = vsub.f32 %v1395, %v1568
    %v1585 = vsub.f32 %v1396, %v1540
    %v1586 = vsub.f32 %v1397, %v1544
    %v1587 = vsub.f32 %v1398, %v1548
    %v1588 = vsub.f32 %v1399, %v1552
    %v1589 = vsub.f32 %v1400, %v1556
    %v1590 = vsub.f32 %v1401, %v1560
    %v1591 = vsub.f32 %v1402, %v1564
    %v1592 = vsub.f32 %v1403, %v1568
    %v1593 = vsub.f32 %v1404, %v1540
    %v1594 = vsub.f32 %v1405, %v1544
    %v1595 = vsub.f32 %v1406, %v1548
    %v1596 = vsub.f32 %v1407, %v1552
    %v1597 = vsub.f32 %v1408, %v1556
    %v1598 = vsub.f32 %v1409, %v1560
    %v1599 = vsub.f32 %v1410, %v1564
    %v1600 = vsub.f32 %v1411, %v1568
    %v1601 = vmul.f32 %v1569, %v1569
    %v1602 = vmul.f32 %v1570, %v1570
    %v1603 = vmul.f32 %v1571, %v1571
    %v1604 = vmul.f32 %v1572, %v1572
    %v1605 = vmul.f32 %v1573, %v1573
    %v1606 = vmul.f32 %v1574, %v1574
    %v1607 = vmul.f32 %v1575, %v1575
    %v1608 = vmul.f32 %v1576, %v1576
    %v1609 = vmul.f32 %v1577, %v1577
    %v1610 = vmul.f32 %v1578, %v1578
    %v1611 = vmul.f32 %v1579, %v1579
    %v1612 = vmul.f32 %v1580, %v1580
    %v1613 = vmul.f32 %v1581, %v1581
    %v1614 = vmul.f32 %v1582, %v1582
    %v1615 = vmul.f32 %v1583, %v1583
    %v1616 = vmul.f32 %v1584, %v1584
    %v1617 = vmul.f32 %v1585, %v1585
    %v1618 = vmul.f32 %v1586, %v1586
    %v1619 = vmul.f32 %v1587, %v1587
    %v1620 = vmul.f32 %v1588, %v1588
    %v1621 = vmul.f32 %v1589, %v1589
    %v1622 = vmul.f32 %v1590, %v1590
    %v1623 = vmul.f32 %v1591, %v1591
    %v1624 = vmul.f32 %v1592, %v1592
    %v1625 = vmul.f32 %v1593, %v1593
    %v1626 = vmul.f32 %v1594, %v1594
    %v1627 = vmul.f32 %v1595, %v1595
    %v1628 = vmul.f32 %v1596, %v1596
    %v1629 = vmul.f32 %v1597, %v1597
    %v1630 = vmul.f32 %v1598, %v1598
    %v1631 = vmul.f32 %v1599, %v1599
    %v1632 = vmul.f32 %v1600, %v1600
    %v1633 = vadd.f32 %v1601, %v1609
    %v1634 = vadd.f32 %v1633, %v1617
    %v1635 = vadd.f32 %v1634, %v1625
    %v1636 = vrot.slane %v1635, 4
    %v1637 = vadd.f32 %v1635, %v1636
    %v1638 = vrot.slane %v1637, 2
    %v1639 = vadd.f32 %v1637, %v1638
    %v1640 = vrot.slane %v1639, 1
    %v1641 = vadd.f32 %v1639, %v1640
    %v1642 = vadd.f32 %v1602, %v1610
    %v1643 = vadd.f32 %v1642, %v1618
    %v1644 = vadd.f32 %v1643, %v1626
    %v1645 = vrot.slane %v1644, 4
    %v1646 = vadd.f32 %v1644, %v1645
    %v1647 = vrot.slane %v1646, 2
    %v1648 = vadd.f32 %v1646, %v1647
    %v1649 = vrot.slane %v1648, 1
    %v1650 = vadd.f32 %v1648, %v1649
    %v1651 = vadd.f32 %v1603, %v1611
    %v1652 = vadd.f32 %v1651, %v1619
    %v1653 = vadd.f32 %v1652, %v1627
    %v1654 = vrot.slane %v1653, 4
    %v1655 = vadd.f32 %v1653, %v1654
    %v1656 = vrot.slane %v1655, 2
    %v1657 = vadd.f32 %v1655, %v1656
    %v1658 = vrot.slane %v1657, 1
    %v1659 = vadd.f32 %v1657, %v1658
    %v1660 = vadd.f32 %v1604, %v1612
    %v1661 = vadd.f32 %v1660, %v1620
    %v1662 = vadd.f32 %v1661, %v1628
    %v1663 = vrot.slane %v1662, 4
    %v1664 = vadd.f32 %v1662, %v1663
    %v1665 = vrot.slane %v1664, 2
    %v1666 = vadd.f32 %v1664, %v1665
    %v1667 = vrot.slane %v1666, 1
    %v1668 = vadd.f32 %v1666, %v1667
    %v1669 = vadd.f32 %v1605, %v1613
    %v1670 = vadd.f32 %v1669, %v1621
    %v1671 = vadd.f32 %v1670, %v1629
    %v1672 = vrot.slane %v1671, 4
    %v1673 = vadd.f32 %v1671, %v1672
    %v1674 = vrot.slane %v1673, 2
    %v1675 = vadd.f32 %v1673, %v1674
    %v1676 = vrot.slane %v1675, 1
    %v1677 = vadd.f32 %v1675, %v1676
    %v1678 = vadd.f32 %v1606, %v1614
    %v1679 = vadd.f32 %v1678, %v1622
    %v1680 = vadd.f32 %v1679, %v1630
    %v1681 = vrot.slane %v1680, 4
    %v1682 = vadd.f32 %v1680, %v1681
    %v1683 = vrot.slane %v1682, 2
    %v1684 = vadd.f32 %v1682, %v1683
    %v1685 = vrot.slane %v1684, 1
    %v1686 = vadd.f32 %v1684, %v1685
    %v1687 = vadd.f32 %v1607, %v1615
    %v1688 = vadd.f32 %v1687, %v1623
    %v1689 = vadd.f32 %v1688, %v1631
    %v1690 = vrot.slane %v1689, 4
    %v1691 = vadd.f32 %v1689, %v1690
    %v1692 = vrot.slane %v1691, 2
    %v1693 = vadd.f32 %v1691, %v1692
    %v1694 = vrot.slane %v1693, 1
    %v1695 = vadd.f32 %v1693, %v1694
    %v1696 = vadd.f32 %v1608, %v1616
    %v1697 = vadd.f32 %v1696, %v1624
    %v1698 = vadd.f32 %v1697, %v1632
    %v1699 = vrot.slane %v1698, 4
    %v1700 = vadd.f32 %v1698, %v1699
    %v1701 = vrot.slane %v1700, 2
    %v1702 = vadd.f32 %v1700, %v1701
    %v1703 = vrot.slane %v1702, 1
    %v1704 = vadd.f32 %v1702, %v1703
    %v1705 = vadd.f32 %v1641, %v1677
    %v1706 = vadd.f32 %v1650, %v1686
    %v1707 = vadd.f32 %v1659, %v1695
    %v1708 = vadd.f32 %v1668, %v1704
    %1709 = vrot.lane.b32.xlu0 %v1705, 16
    %v1710 = vpop.permute.xlu0 %1709
    %1711 = vrot.lane.b32.xlu0 %v1706, 16
    %v1712 = vpop.permute.xlu0 %1711
    %1713 = vrot.lane.b32.xlu0 %v1707, 16
    %v1714 = vpop.permute.xlu0 %1713
    %1715 = vrot.lane.b32.xlu0 %v1708, 16
    %v1716 = vpop.permute.xlu0 %1715
    %v1717 = vsel %vm802, %v1714, %v1716
    %v1718 = vsel %vm802, %v1712, %v1714
    %v1719 = vsel %vm802, %v1710, %v1712
    %v1720 = vsel %vm802, %v1716, %v1710
    %1721 = vrot.lane.b32.xlu0 %v1705, 112
    %v1722 = vpop.permute.xlu0 %1721
    %1723 = vrot.lane.b32.xlu0 %v1706, 112
    %v1724 = vpop.permute.xlu0 %1723
    %1725 = vrot.lane.b32.xlu0 %v1707, 112
    %v1726 = vpop.permute.xlu0 %1725
    %1727 = vrot.lane.b32.xlu0 %v1708, 112
    %v1728 = vpop.permute.xlu0 %1727
    %v1729 = vsel %vm1508, %v1726, %v1728
    %v1730 = vsel %vm1508, %v1724, %v1726
    %v1731 = vsel %vm1508, %v1722, %v1724
    %v1732 = vsel %vm1508, %v1728, %v1722
    %v1733 = vsel %vm819, %v1720, %v1731
    %v1734 = vsel %vm820, %v1719, %v1730
    %v1735 = vsel %vm821, %v1718, %v1729
    %v1736 = vsel %vm822, %v1717, %v1732
    %v1737 = vsel %vm823, %v1720, %v1731
    %v1738 = vsel %vm824, %v1719, %v1730
    %v1739 = vsel %vm825, %v1718, %v1729
    %v1740 = vsel %vm826, %v1717, %v1732
    %v1741 = vadd.f32 %v1705, %v1733
    %v1742 = vadd.f32 %v1706, %v1734
    %v1743 = vadd.f32 %v1707, %v1735
    %v1744 = vadd.f32 %v1708, %v1736
    %v1745 = vadd.f32 %v1705, %v1737
    %v1746 = vadd.f32 %v1706, %v1738
    %v1747 = vadd.f32 %v1707, %v1739
    %v1748 = vadd.f32 %v1708, %v1740
    %v1749 = vmul.f32 %v1741, 0.0078125
    %v1750 = vmul.f32 %v1742, 0.0078125
    %v1751 = vmul.f32 %v1743, 0.0078125
    %v1752 = vmul.f32 %v1744, 0.0078125
    %v1753 = vmul.f32 %v1745, 0.0078125
    %v1754 = vmul.f32 %v1746, 0.0078125
    %v1755 = vmul.f32 %v1747, 0.0078125
    %v1756 = vmul.f32 %v1748, 0.0078125
    %v1757 = vadd.f32 %v1749, 1e-05
    %v1758 = vadd.f32 %v1750, 1e-05
    %v1759 = vadd.f32 %v1751, 1e-05
    %v1760 = vadd.f32 %v1752, 1e-05
    %v1761 = vadd.f32 %v1753, 1e-05
    %v1762 = vadd.f32 %v1754, 1e-05
    %v1763 = vadd.f32 %v1755, 1e-05
    %v1764 = vadd.f32 %v1756, 1e-05
    %v1765 = vrsqrt.pop %v1757
    %v1766 = vrsqrt.pop %v1758
    %v1767 = vrsqrt.pop %v1759
    %v1768 = vrsqrt.pop %v1760
    %v1769 = vrsqrt.pop %v1761
    %v1770 = vrsqrt.pop %v1762
    %v1771 = vrsqrt.pop %v1763
    %v1772 = vrsqrt.pop %v1764
    %s1773 = scalar_lea.vmem [#allocation2], 1
    %v1774 = vld [vmem:[%s1773] ss:$8 sm:$0xf]
    %v1775 = vld [vmem:[%s1773] ss:$8 sm:$0xf0]
    %v1776 = vor.u32 %v1774, %v1775
    %v1778 = vlaneseq
    %v1779 = vshrl.u32 %v1778, 7
    %v1780 = vsub.s32 0, %v1779
    %v1781 = vrot.slane %v1776, %v1780
    %v1782 = vlaneseq
    %v1783 = vshrl.u32 %v1782, 7
    %v1784 = vsub.s32 1, %v1783
    %v1785 = vrot.slane %v1776, %v1784
    %v1786 = vlaneseq
    %v1787 = vshrl.u32 %v1786, 7
    %v1788 = vsub.s32 2, %v1787
    %v1789 = vrot.slane %v1776, %v1788
    %v1790 = vlaneseq
    %v1791 = vshrl.u32 %v1790, 7
    %v1792 = vsub.s32 3, %v1791
    %v1793 = vrot.slane %v1776, %v1792
    %v1794 = vlaneseq
    %v1795 = vshrl.u32 %v1794, 7
    %v1796 = vsub.s32 4, %v1795
    %v1797 = vrot.slane %v1776, %v1796
    %v1798 = vlaneseq
    %v1799 = vshrl.u32 %v1798, 7
    %v1800 = vsub.s32 5, %v1799
    %v1801 = vrot.slane %v1776, %v1800
    %v1802 = vlaneseq
    %v1803 = vshrl.u32 %v1802, 7
    %v1804 = vsub.s32 6, %v1803
    %v1805 = vrot.slane %v1776, %v1804
    %v1806 = vlaneseq
    %v1807 = vshrl.u32 %v1806, 7
    %v1808 = vsub.s32 7, %v1807
    %v1809 = vrot.slane %v1776, %v1808
    %v1818 = vmul.f32 %v1765, %v1781
    %v1819 = vmul.f32 %v1766, %v1785
    %v1820 = vmul.f32 %v1767, %v1789
    %v1821 = vmul.f32 %v1768, %v1793
    %v1822 = vmul.f32 %v1769, %v1797
    %v1823 = vmul.f32 %v1770, %v1801
    %v1824 = vmul.f32 %v1771, %v1805
    %v1825 = vmul.f32 %v1772, %v1809
    %v1826 = vlaneseq
    %v1827 = vshrl.u32 %v1826, 7
    %v1828 = vsub.s32 0, %v1827
    %v1829 = vrot.slane %v1818, %v1828
    %v1830 = vlaneseq
    %v1831 = vshrl.u32 %v1830, 7
    %v1832 = vsub.s32 0, %v1831
    %v1833 = vrot.slane %v1819, %v1832
    %v1834 = vlaneseq
    %v1835 = vshrl.u32 %v1834, 7
    %v1836 = vsub.s32 0, %v1835
    %v1837 = vrot.slane %v1820, %v1836
    %v1838 = vlaneseq
    %v1839 = vshrl.u32 %v1838, 7
    %v1840 = vsub.s32 0, %v1839
    %v1841 = vrot.slane %v1821, %v1840
    %v1842 = vlaneseq
    %v1843 = vshrl.u32 %v1842, 7
    %v1844 = vsub.s32 0, %v1843
    %v1845 = vrot.slane %v1822, %v1844
    %v1846 = vlaneseq
    %v1847 = vshrl.u32 %v1846, 7
    %v1848 = vsub.s32 0, %v1847
    %v1849 = vrot.slane %v1823, %v1848
    %v1850 = vlaneseq
    %v1851 = vshrl.u32 %v1850, 7
    %v1852 = vsub.s32 0, %v1851
    %v1853 = vrot.slane %v1824, %v1852
    %v1854 = vlaneseq
    %v1855 = vshrl.u32 %v1854, 7
    %v1856 = vsub.s32 0, %v1855
    %v1857 = vrot.slane %v1825, %v1856
    %v1858 = vmul.f32 %v1569, %v1829
    %v1859 = vmul.f32 %v1570, %v1833
    %v1860 = vmul.f32 %v1571, %v1837
    %v1861 = vmul.f32 %v1572, %v1841
    %v1862 = vmul.f32 %v1573, %v1845
    %v1863 = vmul.f32 %v1574, %v1849
    %v1864 = vmul.f32 %v1575, %v1853
    %v1865 = vmul.f32 %v1576, %v1857
    %v1866 = vmul.f32 %v1577, %v1829
    %v1867 = vmul.f32 %v1578, %v1833
    %v1868 = vmul.f32 %v1579, %v1837
    %v1869 = vmul.f32 %v1580, %v1841
    %v1870 = vmul.f32 %v1581, %v1845
    %v1871 = vmul.f32 %v1582, %v1849
    %v1872 = vmul.f32 %v1583, %v1853
    %v1873 = vmul.f32 %v1584, %v1857
    %v1874 = vmul.f32 %v1585, %v1829
    %v1875 = vmul.f32 %v1586, %v1833
    %v1876 = vmul.f32 %v1587, %v1837
    %v1877 = vmul.f32 %v1588, %v1841
    %v1878 = vmul.f32 %v1589, %v1845
    %v1879 = vmul.f32 %v1590, %v1849
    %v1880 = vmul.f32 %v1591, %v1853
    %v1881 = vmul.f32 %v1592, %v1857
    %v1882 = vmul.f32 %v1593, %v1829
    %v1883 = vmul.f32 %v1594, %v1833
    %v1884 = vmul.f32 %v1595, %v1837
    %v1885 = vmul.f32 %v1596, %v1841
    %v1886 = vmul.f32 %v1597, %v1845
    %v1887 = vmul.f32 %v1598, %v1849
    %v1888 = vmul.f32 %v1599, %v1853
    %v1889 = vmul.f32 %v1600, %v1857
    %s1890 = scalar_lea.vmem [#allocation4], 1
    %v1891 = vld [vmem:[%s1890] ss:$8 sm:$0xf]
    %v1892 = vld [vmem:[%s1890] ss:$8 sm:$0xf0]
    %v1893 = vor.u32 %v1891, %v1892
    %v1895 = vlaneseq
    %v1896 = vshrl.u32 %v1895, 7
    %v1897 = vsub.s32 0, %v1896
    %v1898 = vrot.slane %v1893, %v1897
    %v1899 = vlaneseq
    %v1900 = vshrl.u32 %v1899, 7
    %v1901 = vsub.s32 1, %v1900
    %v1902 = vrot.slane %v1893, %v1901
    %v1903 = vlaneseq
    %v1904 = vshrl.u32 %v1903, 7
    %v1905 = vsub.s32 2, %v1904
    %v1906 = vrot.slane %v1893, %v1905
    %v1907 = vlaneseq
    %v1908 = vshrl.u32 %v1907, 7
    %v1909 = vsub.s32 3, %v1908
    %v1910 = vrot.slane %v1893, %v1909
    %v1911 = vlaneseq
    %v1912 = vshrl.u32 %v1911, 7
    %v1913 = vsub.s32 4, %v1912
    %v1914 = vrot.slane %v1893, %v1913
    %v1915 = vlaneseq
    %v1916 = vshrl.u32 %v1915, 7
    %v1917 = vsub.s32 5, %v1916
    %v1918 = vrot.slane %v1893, %v1917
    %v1919 = vlaneseq
    %v1920 = vshrl.u32 %v1919, 7
    %v1921 = vsub.s32 6, %v1920
    %v1922 = vrot.slane %v1893, %v1921
    %v1923 = vlaneseq
    %v1924 = vshrl.u32 %v1923, 7
    %v1925 = vsub.s32 7, %v1924
    %v1926 = vrot.slane %v1893, %v1925
    %v1935 = vadd.f32 %v1858, %v1898
    %v1936 = vadd.f32 %v1859, %v1902
    %v1937 = vadd.f32 %v1860, %v1906
    %v1938 = vadd.f32 %v1861, %v1910
    %v1939 = vadd.f32 %v1862, %v1914
    %v1940 = vadd.f32 %v1863, %v1918
    %v1941 = vadd.f32 %v1864, %v1922
    %v1942 = vadd.f32 %v1865, %v1926
    %v1943 = vadd.f32 %v1866, %v1898
    %v1944 = vadd.f32 %v1867, %v1902
    %v1945 = vadd.f32 %v1868, %v1906
    %v1946 = vadd.f32 %v1869, %v1910
    %v1947 = vadd.f32 %v1870, %v1914
    %v1948 = vadd.f32 %v1871, %v1918
    %v1949 = vadd.f32 %v1872, %v1922
    %v1950 = vadd.f32 %v1873, %v1926
    %v1951 = vadd.f32 %v1874, %v1898
    %v1952 = vadd.f32 %v1875, %v1902
    %v1953 = vadd.f32 %v1876, %v1906
    %v1954 = vadd.f32 %v1877, %v1910
    %v1955 = vadd.f32 %v1878, %v1914
    %v1956 = vadd.f32 %v1879, %v1918
    %v1957 = vadd.f32 %v1880, %v1922
    %v1958 = vadd.f32 %v1881, %v1926
    %v1959 = vadd.f32 %v1882, %v1898
    %v1960 = vadd.f32 %v1883, %v1902
    %v1961 = vadd.f32 %v1884, %v1906
    %v1962 = vadd.f32 %v1885, %v1910
    %v1963 = vadd.f32 %v1886, %v1914
    %v1964 = vadd.f32 %v1887, %v1918
    %v1965 = vadd.f32 %v1888, %v1922
    %v1966 = vadd.f32 %v1889, %v1926
    %vm1967 = vcmp.ge.f32.partialorder %v1935, 0.0
    %vm1968 = vcmp.ge.f32.partialorder %v1936, 0.0
    %vm1969 = vcmp.ge.f32.partialorder %v1937, 0.0
    %vm1970 = vcmp.ge.f32.partialorder %v1938, 0.0
    %vm1971 = vcmp.ge.f32.partialorder %v1939, 0.0
    %vm1972 = vcmp.ge.f32.partialorder %v1940, 0.0
    %vm1973 = vcmp.ge.f32.partialorder %v1941, 0.0
    %vm1974 = vcmp.ge.f32.partialorder %v1942, 0.0
    %vm1975 = vcmp.ge.f32.partialorder %v1943, 0.0
    %vm1976 = vcmp.ge.f32.partialorder %v1944, 0.0
    %vm1977 = vcmp.ge.f32.partialorder %v1945, 0.0
    %vm1978 = vcmp.ge.f32.partialorder %v1946, 0.0
    %vm1979 = vcmp.ge.f32.partialorder %v1947, 0.0
    %vm1980 = vcmp.ge.f32.partialorder %v1948, 0.0
    %vm1981 = vcmp.ge.f32.partialorder %v1949, 0.0
    %vm1982 = vcmp.ge.f32.partialorder %v1950, 0.0
    %vm1983 = vcmp.ge.f32.partialorder %v1951, 0.0
    %vm1984 = vcmp.ge.f32.partialorder %v1952, 0.0
    %vm1985 = vcmp.ge.f32.partialorder %v1953, 0.0
    %vm1986 = vcmp.ge.f32.partialorder %v1954, 0.0
    %vm1987 = vcmp.ge.f32.partialorder %v1955, 0.0
    %vm1988 = vcmp.ge.f32.partialorder %v1956, 0.0
    %vm1989 = vcmp.ge.f32.partialorder %v1957, 0.0
    %vm1990 = vcmp.ge.f32.partialorder %v1958, 0.0
    %vm1991 = vcmp.ge.f32.partialorder %v1959, 0.0
    %vm1992 = vcmp.ge.f32.partialorder %v1960, 0.0
    %vm1993 = vcmp.ge.f32.partialorder %v1961, 0.0
    %vm1994 = vcmp.ge.f32.partialorder %v1962, 0.0
    %vm1995 = vcmp.ge.f32.partialorder %v1963, 0.0
    %vm1996 = vcmp.ge.f32.partialorder %v1964, 0.0
    %vm1997 = vcmp.ge.f32.partialorder %v1965, 0.0
    %vm1998 = vcmp.ge.f32.partialorder %v1966, 0.0
    %v1999 = vmul.f32 %v1935, 0.01
    %v2000 = vmul.f32 %v1936, 0.01
    %v2001 = vmul.f32 %v1937, 0.01
    %v2002 = vmul.f32 %v1938, 0.01
    %v2003 = vmul.f32 %v1939, 0.01
    %v2004 = vmul.f32 %v1940, 0.01
    %v2005 = vmul.f32 %v1941, 0.01
    %v2006 = vmul.f32 %v1942, 0.01
    %v2007 = vmul.f32 %v1943, 0.01
    %v2008 = vmul.f32 %v1944, 0.01
    %v2009 = vmul.f32 %v1945, 0.01
    %v2010 = vmul.f32 %v1946, 0.01
    %v2011 = vmul.f32 %v1947, 0.01
    %v2012 = vmul.f32 %v1948, 0.01
    %v2013 = vmul.f32 %v1949, 0.01
    %v2014 = vmul.f32 %v1950, 0.01
    %v2015 = vmul.f32 %v1951, 0.01
    %v2016 = vmul.f32 %v1952, 0.01
    %v2017 = vmul.f32 %v1953, 0.01
    %v2018 = vmul.f32 %v1954, 0.01
    %v2019 = vmul.f32 %v1955, 0.01
    %v2020 = vmul.f32 %v1956, 0.01
    %v2021 = vmul.f32 %v1957, 0.01
    %v2022 = vmul.f32 %v1958, 0.01
    %v2023 = vmul.f32 %v1959, 0.01
    %v2024 = vmul.f32 %v1960, 0.01
    %v2025 = vmul.f32 %v1961, 0.01
    %v2026 = vmul.f32 %v1962, 0.01
    %v2027 = vmul.f32 %v1963, 0.01
    %v2028 = vmul.f32 %v1964, 0.01
    %v2029 = vmul.f32 %v1965, 0.01
    %v2030 = vmul.f32 %v1966, 0.01
    %v2031 = vsel %vm1967, %v1935, %v1999
    %v2032 = vsel %vm1968, %v1936, %v2000
    %v2033 = vsel %vm1969, %v1937, %v2001
    %v2034 = vsel %vm1970, %v1938, %v2002
    %v2035 = vsel %vm1971, %v1939, %v2003
    %v2036 = vsel %vm1972, %v1940, %v2004
    %v2037 = vsel %vm1973, %v1941, %v2005
    %v2038 = vsel %vm1974, %v1942, %v2006
    %v2039 = vsel %vm1975, %v1943, %v2007
    %v2040 = vsel %vm1976, %v1944, %v2008
    %v2041 = vsel %vm1977, %v1945, %v2009
    %v2042 = vsel %vm1978, %v1946, %v2010
    %v2043 = vsel %vm1979, %v1947, %v2011
    %v2044 = vsel %vm1980, %v1948, %v2012
    %v2045 = vsel %vm1981, %v1949, %v2013
    %v2046 = vsel %vm1982, %v1950, %v2014
    %v2047 = vsel %vm1983, %v1951, %v2015
    %v2048 = vsel %vm1984, %v1952, %v2016
    %v2049 = vsel %vm1985, %v1953, %v2017
    %v2050 = vsel %vm1986, %v1954, %v2018
    %v2051 = vsel %vm1987, %v1955, %v2019
    %v2052 = vsel %vm1988, %v1956, %v2020
    %v2053 = vsel %vm1989, %v1957, %v2021
    %v2054 = vsel %vm1990, %v1958, %v2022
    %v2055 = vsel %vm1991, %v1959, %v2023
    %v2056 = vsel %vm1992, %v1960, %v2024
    %v2057 = vsel %vm1993, %v1961, %v2025
    %v2058 = vsel %vm1994, %v1962, %v2026
    %v2059 = vsel %vm1995, %v1963, %v2027
    %v2060 = vsel %vm1996, %v1964, %v2028
    %v2061 = vsel %vm1997, %v1965, %v2029
    %v2062 = vsel %vm1998, %v1966, %v2030
    %v2063 = vadd.f32 %v2031, %v2039
    %v2064 = vadd.f32 %v2063, %v2047
    %v2065 = vadd.f32 %v2064, %v2055
    %v2066 = vrot.slane %v2065, 4
    %v2067 = vadd.f32 %v2065, %v2066
    %v2068 = vrot.slane %v2067, 2
    %v2069 = vadd.f32 %v2067, %v2068
    %v2070 = vrot.slane %v2069, 1
    %v2071 = vadd.f32 %v2069, %v2070
    %v2072 = vadd.f32 %v2032, %v2040
    %v2073 = vadd.f32 %v2072, %v2048
    %v2074 = vadd.f32 %v2073, %v2056
    %v2075 = vrot.slane %v2074, 4
    %v2076 = vadd.f32 %v2074, %v2075
    %v2077 = vrot.slane %v2076, 2
    %v2078 = vadd.f32 %v2076, %v2077
    %v2079 = vrot.slane %v2078, 1
    %v2080 = vadd.f32 %v2078, %v2079
    %v2081 = vadd.f32 %v2033, %v2041
    %v2082 = vadd.f32 %v2081, %v2049
    %v2083 = vadd.f32 %v2082, %v2057
    %v2084 = vrot.slane %v2083, 4
    %v2085 = vadd.f32 %v2083, %v2084
    %v2086 = vrot.slane %v2085, 2
    %v2087 = vadd.f32 %v2085, %v2086
    %v2088 = vrot.slane %v2087, 1
    %v2089 = vadd.f32 %v2087, %v2088
    %v2090 = vadd.f32 %v2034, %v2042
    %v2091 = vadd.f32 %v2090, %v2050
    %v2092 = vadd.f32 %v2091, %v2058
    %v2093 = vrot.slane %v2092, 4
    %v2094 = vadd.f32 %v2092, %v2093
    %v2095 = vrot.slane %v2094, 2
    %v2096 = vadd.f32 %v2094, %v2095
    %v2097 = vrot.slane %v2096, 1
    %v2098 = vadd.f32 %v2096, %v2097
    %v2099 = vadd.f32 %v2035, %v2043
    %v2100 = vadd.f32 %v2099, %v2051
    %v2101 = vadd.f32 %v2100, %v2059
    %v2102 = vrot.slane %v2101, 4
    %v2103 = vadd.f32 %v2101, %v2102
    %v2104 = vrot.slane %v2103, 2
    %v2105 = vadd.f32 %v2103, %v2104
    %v2106 = vrot.slane %v2105, 1
    %v2107 = vadd.f32 %v2105, %v2106
    %v2108 = vadd.f32 %v2036, %v2044
    %v2109 = vadd.f32 %v2108, %v2052
    %v2110 = vadd.f32 %v2109, %v2060
    %v2111 = vrot.slane %v2110, 4
    %v2112 = vadd.f32 %v2110, %v2111
    %v2113 = vrot.slane %v2112, 2
    %v2114 = vadd.f32 %v2112, %v2113
    %v2115 = vrot.slane %v2114, 1
    %v2116 = vadd.f32 %v2114, %v2115
    %v2117 = vadd.f32 %v2037, %v2045
    %v2118 = vadd.f32 %v2117, %v2053
    %v2119 = vadd.f32 %v2118, %v2061
    %v2120 = vrot.slane %v2119, 4
    %v2121 = vadd.f32 %v2119, %v2120
    %v2122 = vrot.slane %v2121, 2
    %v2123 = vadd.f32 %v2121, %v2122
    %v2124 = vrot.slane %v2123, 1
    %v2125 = vadd.f32 %v2123, %v2124
    %v2126 = vadd.f32 %v2038, %v2046
    %v2127 = vadd.f32 %v2126, %v2054
    %v2128 = vadd.f32 %v2127, %v2062
    %v2129 = vrot.slane %v2128, 4
    %v2130 = vadd.f32 %v2128, %v2129
    %v2131 = vrot.slane %v2130, 2
    %v2132 = vadd.f32 %v2130, %v2131
    %v2133 = vrot.slane %v2132, 1
    %v2134 = vadd.f32 %v2132, %v2133
    %v2135 = vadd.f32 %v2071, %v2107
    %v2136 = vadd.f32 %v2080, %v2116
    %v2137 = vadd.f32 %v2089, %v2125
    %v2138 = vadd.f32 %v2098, %v2134
    %v2139 = vadd.f32 %v2135, %v2137
    %v2140 = vadd.f32 %v2136, %v2138
    %v2141 = vadd.f32 %v2137, %v2135
    %v2142 = vadd.f32 %v2138, %v2136
    %2143 = vrot.lane.b32.xlu0 %v2139, 16
    %v2144 = vpop.permute.xlu0 %2143
    %2145 = vrot.lane.b32.xlu0 %v2140, 16
    %v2146 = vpop.permute.xlu0 %2145
    %2147 = vrot.lane.b32.xlu0 %v2141, 16
    %v2148 = vpop.permute.xlu0 %2147
    %2149 = vrot.lane.b32.xlu0 %v2142, 16
    %v2150 = vpop.permute.xlu0 %2149
    %v2151 = vsel %vm802, %v2148, %v2150
    %v2152 = vsel %vm802, %v2146, %v2148
    %v2153 = vsel %vm802, %v2144, %v2146
    %v2154 = vsel %vm802, %v2150, %v2144
    %2155 = vrot.lane.b32.xlu0 %v2139, 112
    %v2156 = vpop.permute.xlu0 %2155
    %2157 = vrot.lane.b32.xlu0 %v2140, 112
    %v2158 = vpop.permute.xlu0 %2157
    %2159 = vrot.lane.b32.xlu0 %v2141, 112
    %v2160 = vpop.permute.xlu0 %2159
    %2161 = vrot.lane.b32.xlu0 %v2142, 112
    %v2162 = vpop.permute.xlu0 %2161
    %v2163 = vsel %vm1508, %v2160, %v2162
    %v2164 = vsel %vm1508, %v2158, %v2160
    %v2165 = vsel %vm1508, %v2156, %v2158
    %v2166 = vsel %vm1508, %v2162, %v2156
    %v2167 = vsel %vm819, %v2154, %v2165
    %v2168 = vsel %vm820, %v2153, %v2164
    %v2169 = vsel %vm821, %v2152, %v2163
    %v2170 = vsel %vm822, %v2151, %v2166
    %v2171 = vsel %vm823, %v2154, %v2165
    %v2172 = vsel %vm824, %v2153, %v2164
    %v2173 = vsel %vm825, %v2152, %v2163
    %v2174 = vsel %vm826, %v2151, %v2166
    %v2175 = vadd.f32 %v2139, %v2167
    %v2176 = vadd.f32 %v2140, %v2168
    %v2177 = vadd.f32 %v2141, %v2169
    %v2178 = vadd.f32 %v2142, %v2170
    %v2179 = vadd.f32 %v2139, %v2171
    %v2180 = vadd.f32 %v2140, %v2172
    %v2181 = vadd.f32 %v2141, %v2173
    %v2182 = vadd.f32 %v2142, %v2174
    %2183 = vrot.lane.b32.xlu0 %v2175, 8
    %v2184 = vpop.permute.xlu0 %2183
    %2185 = vrot.lane.b32.xlu0 %v2176, 8
    %v2186 = vpop.permute.xlu0 %2185
    %2187 = vrot.lane.b32.xlu0 %v2177, 8
    %v2188 = vpop.permute.xlu0 %2187
    %2189 = vrot.lane.b32.xlu0 %v2178, 8
    %v2190 = vpop.permute.xlu0 %2189
    %2191 = vrot.lane.b32.xlu0 %v2179, 8
    %v2192 = vpop.permute.xlu0 %2191
    %2193 = vrot.lane.b32.xlu0 %v2180, 8
    %v2194 = vpop.permute.xlu0 %2193
    %2195 = vrot.lane.b32.xlu0 %v2181, 8
    %v2196 = vpop.permute.xlu0 %2195
    %2197 = vrot.lane.b32.xlu0 %v2182, 8
    %v2198 = vpop.permute.xlu0 %2197
    %v2199 = vsel %vm761, %v2196, %v2198
    %v2200 = vsel %vm761, %v2194, %v2196
    %v2201 = vsel %vm761, %v2192, %v2194
    %v2202 = vsel %vm761, %v2190, %v2192
    %v2203 = vsel %vm761, %v2188, %v2190
    %v2204 = vsel %vm761, %v2186, %v2188
    %v2205 = vsel %vm761, %v2184, %v2186
    %v2206 = vsel %vm761, %v2198, %v2184
    %2207 = vrot.lane.b32.xlu0 %v2175, 120
    %v2208 = vpop.permute.xlu0 %2207
    %2209 = vrot.lane.b32.xlu0 %v2176, 120
    %v2210 = vpop.permute.xlu0 %2209
    %2211 = vrot.lane.b32.xlu0 %v2177, 120
    %v2212 = vpop.permute.xlu0 %2211
    %2213 = vrot.lane.b32.xlu0 %v2178, 120
    %v2214 = vpop.permute.xlu0 %2213
    %2215 = vrot.lane.b32.xlu0 %v2179, 120
    %v2216 = vpop.permute.xlu0 %2215
    %2217 = vrot.lane.b32.xlu0 %v2180, 120
    %v2218 = vpop.permute.xlu0 %2217
    %2219 = vrot.lane.b32.xlu0 %v2181, 120
    %v2220 = vpop.permute.xlu0 %2219
    %2221 = vrot.lane.b32.xlu0 %v2182, 120
    %v2222 = vpop.permute.xlu0 %2221
    %vm2223 = vcmp.lt.s32.totalorder %v655, 120
    %v2224 = vsel %vm2223, %v2220, %v2222
    %v2225 = vsel %vm2223, %v2218, %v2220
    %v2226 = vsel %vm2223, %v2216, %v2218
    %v2227 = vsel %vm2223, %v2214, %v2216
    %v2228 = vsel %vm2223, %v2212, %v2214
    %v2229 = vsel %vm2223, %v2210, %v2212
    %v2230 = vsel %vm2223, %v2208, %v2210
    %v2231 = vsel %vm2223, %v2222, %v2208
    %v2232 = vsel %vm778, %v2206, %v2230
    %v2233 = vsel %vm779, %v2205, %v2229
    %v2234 = vsel %vm780, %v2204, %v2228
    %v2235 = vsel %vm781, %v2203, %v2227
    %v2236 = vsel %vm782, %v2202, %v2226
    %v2237 = vsel %vm783, %v2201, %v2225
    %v2238 = vsel %vm784, %v2200, %v2224
    %v2239 = vsel %vm785, %v2199, %v2231
    %v2240 = vadd.f32 %v2175, %v2232
    %v2241 = vadd.f32 %v2176, %v2233
    %v2242 = vadd.f32 %v2177, %v2234
    %v2243 = vadd.f32 %v2178, %v2235
    %v2244 = vadd.f32 %v2179, %v2236
    %v2245 = vadd.f32 %v2180, %v2237
    %v2246 = vadd.f32 %v2181, %v2238
    %v2247 = vadd.f32 %v2182, %v2239
    %v2248 = vmul.f32 %v2240, 0.001953125
    %v2249 = vmul.f32 %v2241, 0.001953125
    %v2250 = vmul.f32 %v2242, 0.001953125
    %v2251 = vmul.f32 %v2243, 0.001953125
    %v2252 = vmul.f32 %v2244, 0.001953125
    %v2253 = vmul.f32 %v2245, 0.001953125
    %v2254 = vmul.f32 %v2246, 0.001953125
    %v2255 = vmul.f32 %v2247, 0.001953125
    %v2256 = vlaneseq
    %v2257 = vshrl.u32 %v2256, 7
    %v2258 = vsub.s32 0, %v2257
    %v2259 = vrot.slane %v2248, %v2258
    %v2260 = vlaneseq
    %v2261 = vshrl.u32 %v2260, 7
    %v2262 = vsub.s32 0, %v2261
    %v2263 = vrot.slane %v2249, %v2262
    %v2264 = vlaneseq
    %v2265 = vshrl.u32 %v2264, 7
    %v2266 = vsub.s32 0, %v2265
    %v2267 = vrot.slane %v2250, %v2266
    %v2268 = vlaneseq
    %v2269 = vshrl.u32 %v2268, 7
    %v2270 = vsub.s32 0, %v2269
    %v2271 = vrot.slane %v2251, %v2270
    %v2272 = vlaneseq
    %v2273 = vshrl.u32 %v2272, 7
    %v2274 = vsub.s32 0, %v2273
    %v2275 = vrot.slane %v2252, %v2274
    %v2276 = vlaneseq
    %v2277 = vshrl.u32 %v2276, 7
    %v2278 = vsub.s32 0, %v2277
    %v2279 = vrot.slane %v2253, %v2278
    %v2280 = vlaneseq
    %v2281 = vshrl.u32 %v2280, 7
    %v2282 = vsub.s32 0, %v2281
    %v2283 = vrot.slane %v2254, %v2282
    %v2284 = vlaneseq
    %v2285 = vshrl.u32 %v2284, 7
    %v2286 = vsub.s32 0, %v2285
    %v2287 = vrot.slane %v2255, %v2286
    %v2288 = vsub.f32 %v2031, %v2259
    %v2289 = vsub.f32 %v2032, %v2263
    %v2290 = vsub.f32 %v2033, %v2267
    %v2291 = vsub.f32 %v2034, %v2271
    %v2292 = vsub.f32 %v2035, %v2275
    %v2293 = vsub.f32 %v2036, %v2279
    %v2294 = vsub.f32 %v2037, %v2283
    %v2295 = vsub.f32 %v2038, %v2287
    %v2296 = vsub.f32 %v2039, %v2259
    %v2297 = vsub.f32 %v2040, %v2263
    %v2298 = vsub.f32 %v2041, %v2267
    %v2299 = vsub.f32 %v2042, %v2271
    %v2300 = vsub.f32 %v2043, %v2275
    %v2301 = vsub.f32 %v2044, %v2279
    %v2302 = vsub.f32 %v2045, %v2283
    %v2303 = vsub.f32 %v2046, %v2287
    %v2304 = vsub.f32 %v2047, %v2259
    %v2305 = vsub.f32 %v2048, %v2263
    %v2306 = vsub.f32 %v2049, %v2267
    %v2307 = vsub.f32 %v2050, %v2271
    %v2308 = vsub.f32 %v2051, %v2275
    %v2309 = vsub.f32 %v2052, %v2279
    %v2310 = vsub.f32 %v2053, %v2283
    %v2311 = vsub.f32 %v2054, %v2287
    %v2312 = vsub.f32 %v2055, %v2259
    %v2313 = vsub.f32 %v2056, %v2263
    %v2314 = vsub.f32 %v2057, %v2267
    %v2315 = vsub.f32 %v2058, %v2271
    %v2316 = vsub.f32 %v2059, %v2275
    %v2317 = vsub.f32 %v2060, %v2279
    %v2318 = vsub.f32 %v2061, %v2283
    %v2319 = vsub.f32 %v2062, %v2287
    %v2320 = vmul.f32 %v2288, %v2288
    %v2321 = vmul.f32 %v2289, %v2289
    %v2322 = vmul.f32 %v2290, %v2290
    %v2323 = vmul.f32 %v2291, %v2291
    %v2324 = vmul.f32 %v2292, %v2292
    %v2325 = vmul.f32 %v2293, %v2293
    %v2326 = vmul.f32 %v2294, %v2294
    %v2327 = vmul.f32 %v2295, %v2295
    %v2328 = vmul.f32 %v2296, %v2296
    %v2329 = vmul.f32 %v2297, %v2297
    %v2330 = vmul.f32 %v2298, %v2298
    %v2331 = vmul.f32 %v2299, %v2299
    %v2332 = vmul.f32 %v2300, %v2300
    %v2333 = vmul.f32 %v2301, %v2301
    %v2334 = vmul.f32 %v2302, %v2302
    %v2335 = vmul.f32 %v2303, %v2303
    %v2336 = vmul.f32 %v2304, %v2304
    %v2337 = vmul.f32 %v2305, %v2305
    %v2338 = vmul.f32 %v2306, %v2306
    %v2339 = vmul.f32 %v2307, %v2307
    %v2340 = vmul.f32 %v2308, %v2308
    %v2341 = vmul.f32 %v2309, %v2309
    %v2342 = vmul.f32 %v2310, %v2310
    %v2343 = vmul.f32 %v2311, %v2311
    %v2344 = vmul.f32 %v2312, %v2312
    %v2345 = vmul.f32 %v2313, %v2313
    %v2346 = vmul.f32 %v2314, %v2314
    %v2347 = vmul.f32 %v2315, %v2315
    %v2348 = vmul.f32 %v2316, %v2316
    %v2349 = vmul.f32 %v2317, %v2317
    %v2350 = vmul.f32 %v2318, %v2318
    %v2351 = vmul.f32 %v2319, %v2319
    %v2352 = vadd.f32 %v2320, %v2328
    %v2353 = vadd.f32 %v2352, %v2336
    %v2354 = vadd.f32 %v2353, %v2344
    %v2355 = vrot.slane %v2354, 4
    %v2356 = vadd.f32 %v2354, %v2355
    %v2357 = vrot.slane %v2356, 2
    %v2358 = vadd.f32 %v2356, %v2357
    %v2359 = vrot.slane %v2358, 1
    %v2360 = vadd.f32 %v2358, %v2359
    %v2361 = vadd.f32 %v2321, %v2329
    %v2362 = vadd.f32 %v2361, %v2337
    %v2363 = vadd.f32 %v2362, %v2345
    %v2364 = vrot.slane %v2363, 4
    %v2365 = vadd.f32 %v2363, %v2364
    %v2366 = vrot.slane %v2365, 2
    %v2367 = vadd.f32 %v2365, %v2366
    %v2368 = vrot.slane %v2367, 1
    %v2369 = vadd.f32 %v2367, %v2368
    %v2370 = vadd.f32 %v2322, %v2330
    %v2371 = vadd.f32 %v2370, %v2338
    %v2372 = vadd.f32 %v2371, %v2346
    %v2373 = vrot.slane %v2372, 4
    %v2374 = vadd.f32 %v2372, %v2373
    %v2375 = vrot.slane %v2374, 2
    %v2376 = vadd.f32 %v2374, %v2375
    %v2377 = vrot.slane %v2376, 1
    %v2378 = vadd.f32 %v2376, %v2377
    %v2379 = vadd.f32 %v2323, %v2331
    %v2380 = vadd.f32 %v2379, %v2339
    %v2381 = vadd.f32 %v2380, %v2347
    %v2382 = vrot.slane %v2381, 4
    %v2383 = vadd.f32 %v2381, %v2382
    %v2384 = vrot.slane %v2383, 2
    %v2385 = vadd.f32 %v2383, %v2384
    %v2386 = vrot.slane %v2385, 1
    %v2387 = vadd.f32 %v2385, %v2386
    %v2388 = vadd.f32 %v2324, %v2332
    %v2389 = vadd.f32 %v2388, %v2340
    %v2390 = vadd.f32 %v2389, %v2348
    %v2391 = vrot.slane %v2390, 4
    %v2392 = vadd.f32 %v2390, %v2391
    %v2393 = vrot.slane %v2392, 2
    %v2394 = vadd.f32 %v2392, %v2393
    %v2395 = vrot.slane %v2394, 1
    %v2396 = vadd.f32 %v2394, %v2395
    %v2397 = vadd.f32 %v2325, %v2333
    %v2398 = vadd.f32 %v2397, %v2341
    %v2399 = vadd.f32 %v2398, %v2349
    %v2400 = vrot.slane %v2399, 4
    %v2401 = vadd.f32 %v2399, %v2400
    %v2402 = vrot.slane %v2401, 2
    %v2403 = vadd.f32 %v2401, %v2402
    %v2404 = vrot.slane %v2403, 1
    %v2405 = vadd.f32 %v2403, %v2404
    %v2406 = vadd.f32 %v2326, %v2334
    %v2407 = vadd.f32 %v2406, %v2342
    %v2408 = vadd.f32 %v2407, %v2350
    %v2409 = vrot.slane %v2408, 4
    %v2410 = vadd.f32 %v2408, %v2409
    %v2411 = vrot.slane %v2410, 2
    %v2412 = vadd.f32 %v2410, %v2411
    %v2413 = vrot.slane %v2412, 1
    %v2414 = vadd.f32 %v2412, %v2413
    %v2415 = vadd.f32 %v2327, %v2335
    %v2416 = vadd.f32 %v2415, %v2343
    %v2417 = vadd.f32 %v2416, %v2351
    %v2418 = vrot.slane %v2417, 4
    %v2419 = vadd.f32 %v2417, %v2418
    %v2420 = vrot.slane %v2419, 2
    %v2421 = vadd.f32 %v2419, %v2420
    %v2422 = vrot.slane %v2421, 1
    %v2423 = vadd.f32 %v2421, %v2422
    %v2424 = vadd.f32 %v2360, %v2396
    %v2425 = vadd.f32 %v2369, %v2405
    %v2426 = vadd.f32 %v2378, %v2414
    %v2427 = vadd.f32 %v2387, %v2423
    %v2428 = vadd.f32 %v2424, %v2426
    %v2429 = vadd.f32 %v2425, %v2427
    %v2430 = vadd.f32 %v2426, %v2424
    %v2431 = vadd.f32 %v2427, %v2425
    %2432 = vrot.lane.b32.xlu0 %v2428, 16
    %v2433 = vpop.permute.xlu0 %2432
    %2434 = vrot.lane.b32.xlu0 %v2429, 16
    %v2435 = vpop.permute.xlu0 %2434
    %2436 = vrot.lane.b32.xlu0 %v2430, 16
    %v2437 = vpop.permute.xlu0 %2436
    %2438 = vrot.lane.b32.xlu0 %v2431, 16
    %v2439 = vpop.permute.xlu0 %2438
    %v2440 = vsel %vm802, %v2437, %v2439
    %v2441 = vsel %vm802, %v2435, %v2437
    %v2442 = vsel %vm802, %v2433, %v2435
    %v2443 = vsel %vm802, %v2439, %v2433
    %2444 = vrot.lane.b32.xlu0 %v2428, 112
    %v2445 = vpop.permute.xlu0 %2444
    %2446 = vrot.lane.b32.xlu0 %v2429, 112
    %v2447 = vpop.permute.xlu0 %2446
    %2448 = vrot.lane.b32.xlu0 %v2430, 112
    %v2449 = vpop.permute.xlu0 %2448
    %2450 = vrot.lane.b32.xlu0 %v2431, 112
    %v2451 = vpop.permute.xlu0 %2450
    %v2452 = vsel %vm1508, %v2449, %v2451
    %v2453 = vsel %vm1508, %v2447, %v2449
    %v2454 = vsel %vm1508, %v2445, %v2447
    %v2455 = vsel %vm1508, %v2451, %v2445
    %v2456 = vsel %vm819, %v2443, %v2454
    %v2457 = vsel %vm820, %v2442, %v2453
    %v2458 = vsel %vm821, %v2441, %v2452
    %v2459 = vsel %vm822, %v2440, %v2455
    %v2460 = vsel %vm823, %v2443, %v2454
    %v2461 = vsel %vm824, %v2442, %v2453
    %v2462 = vsel %vm825, %v2441, %v2452
    %v2463 = vsel %vm826, %v2440, %v2455
    %v2464 = vadd.f32 %v2428, %v2456
    %v2465 = vadd.f32 %v2429, %v2457
    %v2466 = vadd.f32 %v2430, %v2458
    %v2467 = vadd.f32 %v2431, %v2459
    %v2468 = vadd.f32 %v2428, %v2460
    %v2469 = vadd.f32 %v2429, %v2461
    %v2470 = vadd.f32 %v2430, %v2462
    %v2471 = vadd.f32 %v2431, %v2463
    %2472 = vrot.lane.b32.xlu0 %v2464, 8
    %v2473 = vpop.permute.xlu0 %2472
    %2474 = vrot.lane.b32.xlu0 %v2465, 8
    %v2475 = vpop.permute.xlu0 %2474
    %2476 = vrot.lane.b32.xlu0 %v2466, 8
    %v2477 = vpop.permute.xlu0 %2476
    %2478 = vrot.lane.b32.xlu0 %v2467, 8
    %v2479 = vpop.permute.xlu0 %2478
    %2480 = vrot.lane.b32.xlu0 %v2468, 8
    %v2481 = vpop.permute.xlu0 %2480
    %2482 = vrot.lane.b32.xlu0 %v2469, 8
    %v2483 = vpop.permute.xlu0 %2482
    %2484 = vrot.lane.b32.xlu0 %v2470, 8
    %v2485 = vpop.permute.xlu0 %2484
    %2486 = vrot.lane.b32.xlu0 %v2471, 8
    %v2487 = vpop.permute.xlu0 %2486
    %v2488 = vsel %vm761, %v2485, %v2487
    %v2489 = vsel %vm761, %v2483, %v2485
    %v2490 = vsel %vm761, %v2481, %v2483
    %v2491 = vsel %vm761, %v2479, %v2481
    %v2492 = vsel %vm761, %v2477, %v2479
    %v2493 = vsel %vm761, %v2475, %v2477
    %v2494 = vsel %vm761, %v2473, %v2475
    %v2495 = vsel %vm761, %v2487, %v2473
    %2496 = vrot.lane.b32.xlu0 %v2464, 120
    %v2497 = vpop.permute.xlu0 %2496
    %2498 = vrot.lane.b32.xlu0 %v2465, 120
    %v2499 = vpop.permute.xlu0 %2498
    %2500 = vrot.lane.b32.xlu0 %v2466, 120
    %v2501 = vpop.permute.xlu0 %2500
    %2502 = vrot.lane.b32.xlu0 %v2467, 120
    %v2503 = vpop.permute.xlu0 %2502
    %2504 = vrot.lane.b32.xlu0 %v2468, 120
    %v2505 = vpop.permute.xlu0 %2504
    %2506 = vrot.lane.b32.xlu0 %v2469, 120
    %v2507 = vpop.permute.xlu0 %2506
    %2508 = vrot.lane.b32.xlu0 %v2470, 120
    %v2509 = vpop.permute.xlu0 %2508
    %2510 = vrot.lane.b32.xlu0 %v2471, 120
    %v2511 = vpop.permute.xlu0 %2510
    %v2512 = vsel %vm2223, %v2509, %v2511
    %v2513 = vsel %vm2223, %v2507, %v2509
    %v2514 = vsel %vm2223, %v2505, %v2507
    %v2515 = vsel %vm2223, %v2503, %v2505
    %v2516 = vsel %vm2223, %v2501, %v2503
    %v2517 = vsel %vm2223, %v2499, %v2501
    %v2518 = vsel %vm2223, %v2497, %v2499
    %v2519 = vsel %vm2223, %v2511, %v2497
    %v2520 = vsel %vm778, %v2495, %v2518
    %v2521 = vsel %vm779, %v2494, %v2517
    %v2522 = vsel %vm780, %v2493, %v2516
    %v2523 = vsel %vm781, %v2492, %v2515
    %v2524 = vsel %vm782, %v2491, %v2514
    %v2525 = vsel %vm783, %v2490, %v2513
    %v2526 = vsel %vm784, %v2489, %v2512
    %v2527 = vsel %vm785, %v2488, %v2519
    %v2528 = vadd.f32 %v2464, %v2520
    %v2529 = vadd.f32 %v2465, %v2521
    %v2530 = vadd.f32 %v2466, %v2522
    %v2531 = vadd.f32 %v2467, %v2523
    %v2532 = vadd.f32 %v2468, %v2524
    %v2533 = vadd.f32 %v2469, %v2525
    %v2534 = vadd.f32 %v2470, %v2526
    %v2535 = vadd.f32 %v2471, %v2527
    %v2536 = vmul.f32 %v2528, 0.001953125
    %v2537 = vmul.f32 %v2529, 0.001953125
    %v2538 = vmul.f32 %v2530, 0.001953125
    %v2539 = vmul.f32 %v2531, 0.001953125
    %v2540 = vmul.f32 %v2532, 0.001953125
    %v2541 = vmul.f32 %v2533, 0.001953125
    %v2542 = vmul.f32 %v2534, 0.001953125
    %v2543 = vmul.f32 %v2535, 0.001953125
    %v2544 = vadd.f32 %v2536, 1e-05
    %v2545 = vadd.f32 %v2537, 1e-05
    %v2546 = vadd.f32 %v2538, 1e-05
    %v2547 = vadd.f32 %v2539, 1e-05
    %v2548 = vadd.f32 %v2540, 1e-05
    %v2549 = vadd.f32 %v2541, 1e-05
    %v2550 = vadd.f32 %v2542, 1e-05
    %v2551 = vadd.f32 %v2543, 1e-05
    %v2552 = vrsqrt.pop %v2544
    %v2553 = vrsqrt.pop %v2545
    %v2554 = vrsqrt.pop %v2546
    %v2555 = vrsqrt.pop %v2547
    %v2556 = vrsqrt.pop %v2548
    %v2557 = vrsqrt.pop %v2549
    %v2558 = vrsqrt.pop %v2550
    %v2559 = vrsqrt.pop %v2551
    %s2560 = scalar_lea.vmem [#allocation2], 2
    %v2561 = vld [vmem:[%s2560] ss:$8 sm:$0xf]
    %v2562 = vld [vmem:[%s2560] ss:$8 sm:$0xf0]
    %v2563 = vor.u32 %v2561, %v2562
    %v2565 = vlaneseq
    %v2566 = vshrl.u32 %v2565, 7
    %v2567 = vsub.s32 0, %v2566
    %v2568 = vrot.slane %v2563, %v2567
    %v2569 = vlaneseq
    %v2570 = vshrl.u32 %v2569, 7
    %v2571 = vsub.s32 1, %v2570
    %v2572 = vrot.slane %v2563, %v2571
    %v2573 = vlaneseq
    %v2574 = vshrl.u32 %v2573, 7
    %v2575 = vsub.s32 2, %v2574
    %v2576 = vrot.slane %v2563, %v2575
    %v2577 = vlaneseq
    %v2578 = vshrl.u32 %v2577, 7
    %v2579 = vsub.s32 3, %v2578
    %v2580 = vrot.slane %v2563, %v2579
    %v2581 = vlaneseq
    %v2582 = vshrl.u32 %v2581, 7
    %v2583 = vsub.s32 4, %v2582
    %v2584 = vrot.slane %v2563, %v2583
    %v2585 = vlaneseq
    %v2586 = vshrl.u32 %v2585, 7
    %v2587 = vsub.s32 5, %v2586
    %v2588 = vrot.slane %v2563, %v2587
    %v2589 = vlaneseq
    %v2590 = vshrl.u32 %v2589, 7
    %v2591 = vsub.s32 6, %v2590
    %v2592 = vrot.slane %v2563, %v2591
    %v2593 = vlaneseq
    %v2594 = vshrl.u32 %v2593, 7
    %v2595 = vsub.s32 7, %v2594
    %v2596 = vrot.slane %v2563, %v2595
    %v2605 = vmul.f32 %v2552, %v2568
    %v2606 = vmul.f32 %v2553, %v2572
    %v2607 = vmul.f32 %v2554, %v2576
    %v2608 = vmul.f32 %v2555, %v2580
    %v2609 = vmul.f32 %v2556, %v2584
    %v2610 = vmul.f32 %v2557, %v2588
    %v2611 = vmul.f32 %v2558, %v2592
    %v2612 = vmul.f32 %v2559, %v2596
    %v2613 = vlaneseq
    %v2614 = vshrl.u32 %v2613, 7
    %v2615 = vsub.s32 0, %v2614
    %v2616 = vrot.slane %v2605, %v2615
    %v2617 = vlaneseq
    %v2618 = vshrl.u32 %v2617, 7
    %v2619 = vsub.s32 0, %v2618
    %v2620 = vrot.slane %v2606, %v2619
    %v2621 = vlaneseq
    %v2622 = vshrl.u32 %v2621, 7
    %v2623 = vsub.s32 0, %v2622
    %v2624 = vrot.slane %v2607, %v2623
    %v2625 = vlaneseq
    %v2626 = vshrl.u32 %v2625, 7
    %v2627 = vsub.s32 0, %v2626
    %v2628 = vrot.slane %v2608, %v2627
    %v2629 = vlaneseq
    %v2630 = vshrl.u32 %v2629, 7
    %v2631 = vsub.s32 0, %v2630
    %v2632 = vrot.slane %v2609, %v2631
    %v2633 = vlaneseq
    %v2634 = vshrl.u32 %v2633, 7
    %v2635 = vsub.s32 0, %v2634
    %v2636 = vrot.slane %v2610, %v2635
    %v2637 = vlaneseq
    %v2638 = vshrl.u32 %v2637, 7
    %v2639 = vsub.s32 0, %v2638
    %v2640 = vrot.slane %v2611, %v2639
    %v2641 = vlaneseq
    %v2642 = vshrl.u32 %v2641, 7
    %v2643 = vsub.s32 0, %v2642
    %v2644 = vrot.slane %v2612, %v2643
    %v2645 = vmul.f32 %v2288, %v2616
    %v2646 = vmul.f32 %v2289, %v2620
    %v2647 = vmul.f32 %v2290, %v2624
    %v2648 = vmul.f32 %v2291, %v2628
    %v2649 = vmul.f32 %v2292, %v2632
    %v2650 = vmul.f32 %v2293, %v2636
    %v2651 = vmul.f32 %v2294, %v2640
    %v2652 = vmul.f32 %v2295, %v2644
    %v2653 = vmul.f32 %v2296, %v2616
    %v2654 = vmul.f32 %v2297, %v2620
    %v2655 = vmul.f32 %v2298, %v2624
    %v2656 = vmul.f32 %v2299, %v2628
    %v2657 = vmul.f32 %v2300, %v2632
    %v2658 = vmul.f32 %v2301, %v2636
    %v2659 = vmul.f32 %v2302, %v2640
    %v2660 = vmul.f32 %v2303, %v2644
    %v2661 = vmul.f32 %v2304, %v2616
    %v2662 = vmul.f32 %v2305, %v2620
    %v2663 = vmul.f32 %v2306, %v2624
    %v2664 = vmul.f32 %v2307, %v2628
    %v2665 = vmul.f32 %v2308, %v2632
    %v2666 = vmul.f32 %v2309, %v2636
    %v2667 = vmul.f32 %v2310, %v2640
    %v2668 = vmul.f32 %v2311, %v2644
    %v2669 = vmul.f32 %v2312, %v2616
    %v2670 = vmul.f32 %v2313, %v2620
    %v2671 = vmul.f32 %v2314, %v2624
    %v2672 = vmul.f32 %v2315, %v2628
    %v2673 = vmul.f32 %v2316, %v2632
    %v2674 = vmul.f32 %v2317, %v2636
    %v2675 = vmul.f32 %v2318, %v2640
    %v2676 = vmul.f32 %v2319, %v2644
    %s2677 = scalar_lea.vmem [#allocation4], 2
    %v2678 = vld [vmem:[%s2677] ss:$8 sm:$0xf]
    %v2679 = vld [vmem:[%s2677] ss:$8 sm:$0xf0]
    %v2680 = vor.u32 %v2678, %v2679
    %v2682 = vlaneseq
    %v2683 = vshrl.u32 %v2682, 7
    %v2684 = vsub.s32 0, %v2683
    %v2685 = vrot.slane %v2680, %v2684
    %v2686 = vlaneseq
    %v2687 = vshrl.u32 %v2686, 7
    %v2688 = vsub.s32 1, %v2687
    %v2689 = vrot.slane %v2680, %v2688
    %v2690 = vlaneseq
    %v2691 = vshrl.u32 %v2690, 7
    %v2692 = vsub.s32 2, %v2691
    %v2693 = vrot.slane %v2680, %v2692
    %v2694 = vlaneseq
    %v2695 = vshrl.u32 %v2694, 7
    %v2696 = vsub.s32 3, %v2695
    %v2697 = vrot.slane %v2680, %v2696
    %v2698 = vlaneseq
    %v2699 = vshrl.u32 %v2698, 7
    %v2700 = vsub.s32 4, %v2699
    %v2701 = vrot.slane %v2680, %v2700
    %v2702 = vlaneseq
    %v2703 = vshrl.u32 %v2702, 7
    %v2704 = vsub.s32 5, %v2703
    %v2705 = vrot.slane %v2680, %v2704
    %v2706 = vlaneseq
    %v2707 = vshrl.u32 %v2706, 7
    %v2708 = vsub.s32 6, %v2707
    %v2709 = vrot.slane %v2680, %v2708
    %v2710 = vlaneseq
    %v2711 = vshrl.u32 %v2710, 7
    %v2712 = vsub.s32 7, %v2711
    %v2713 = vrot.slane %v2680, %v2712
    %v2722 = vadd.f32 %v2645, %v2685
    %v2723 = vadd.f32 %v2646, %v2689
    %v2724 = vadd.f32 %v2647, %v2693
    %v2725 = vadd.f32 %v2648, %v2697
    %v2726 = vadd.f32 %v2649, %v2701
    %v2727 = vadd.f32 %v2650, %v2705
    %v2728 = vadd.f32 %v2651, %v2709
    %v2729 = vadd.f32 %v2652, %v2713
    %v2730 = vadd.f32 %v2653, %v2685
    %v2731 = vadd.f32 %v2654, %v2689
    %v2732 = vadd.f32 %v2655, %v2693
    %v2733 = vadd.f32 %v2656, %v2697
    %v2734 = vadd.f32 %v2657, %v2701
    %v2735 = vadd.f32 %v2658, %v2705
    %v2736 = vadd.f32 %v2659, %v2709
    %v2737 = vadd.f32 %v2660, %v2713
    %v2738 = vadd.f32 %v2661, %v2685
    %v2739 = vadd.f32 %v2662, %v2689
    %v2740 = vadd.f32 %v2663, %v2693
    %v2741 = vadd.f32 %v2664, %v2697
    %v2742 = vadd.f32 %v2665, %v2701
    %v2743 = vadd.f32 %v2666, %v2705
    %v2744 = vadd.f32 %v2667, %v2709
    %v2745 = vadd.f32 %v2668, %v2713
    %v2746 = vadd.f32 %v2669, %v2685
    %v2747 = vadd.f32 %v2670, %v2689
    %v2748 = vadd.f32 %v2671, %v2693
    %v2749 = vadd.f32 %v2672, %v2697
    %v2750 = vadd.f32 %v2673, %v2701
    %v2751 = vadd.f32 %v2674, %v2705
    %v2752 = vadd.f32 %v2675, %v2709
    %v2753 = vadd.f32 %v2676, %v2713
    %vm2754 = vcmp.ge.f32.partialorder %v2722, 0.0
    %vm2755 = vcmp.ge.f32.partialorder %v2723, 0.0
    %vm2756 = vcmp.ge.f32.partialorder %v2724, 0.0
    %vm2757 = vcmp.ge.f32.partialorder %v2725, 0.0
    %vm2758 = vcmp.ge.f32.partialorder %v2726, 0.0
    %vm2759 = vcmp.ge.f32.partialorder %v2727, 0.0
    %vm2760 = vcmp.ge.f32.partialorder %v2728, 0.0
    %vm2761 = vcmp.ge.f32.partialorder %v2729, 0.0
    %vm2762 = vcmp.ge.f32.partialorder %v2730, 0.0
    %vm2763 = vcmp.ge.f32.partialorder %v2731, 0.0
    %vm2764 = vcmp.ge.f32.partialorder %v2732, 0.0
    %vm2765 = vcmp.ge.f32.partialorder %v2733, 0.0
    %vm2766 = vcmp.ge.f32.partialorder %v2734, 0.0
    %vm2767 = vcmp.ge.f32.partialorder %v2735, 0.0
    %vm2768 = vcmp.ge.f32.partialorder %v2736, 0.0
    %vm2769 = vcmp.ge.f32.partialorder %v2737, 0.0
    %vm2770 = vcmp.ge.f32.partialorder %v2738, 0.0
    %vm2771 = vcmp.ge.f32.partialorder %v2739, 0.0
    %vm2772 = vcmp.ge.f32.partialorder %v2740, 0.0
    %vm2773 = vcmp.ge.f32.partialorder %v2741, 0.0
    %vm2774 = vcmp.ge.f32.partialorder %v2742, 0.0
    %vm2775 = vcmp.ge.f32.partialorder %v2743, 0.0
    %vm2776 = vcmp.ge.f32.partialorder %v2744, 0.0
    %vm2777 = vcmp.ge.f32.partialorder %v2745, 0.0
    %vm2778 = vcmp.ge.f32.partialorder %v2746, 0.0
    %vm2779 = vcmp.ge.f32.partialorder %v2747, 0.0
    %vm2780 = vcmp.ge.f32.partialorder %v2748, 0.0
    %vm2781 = vcmp.ge.f32.partialorder %v2749, 0.0
    %vm2782 = vcmp.ge.f32.partialorder %v2750, 0.0
    %vm2783 = vcmp.ge.f32.partialorder %v2751, 0.0
    %vm2784 = vcmp.ge.f32.partialorder %v2752, 0.0
    %vm2785 = vcmp.ge.f32.partialorder %v2753, 0.0
    %v2786 = vmul.f32 %v2722, 0.01
    %v2787 = vmul.f32 %v2723, 0.01
    %v2788 = vmul.f32 %v2724, 0.01
    %v2789 = vmul.f32 %v2725, 0.01
    %v2790 = vmul.f32 %v2726, 0.01
    %v2791 = vmul.f32 %v2727, 0.01
    %v2792 = vmul.f32 %v2728, 0.01
    %v2793 = vmul.f32 %v2729, 0.01
    %v2794 = vmul.f32 %v2730, 0.01
    %v2795 = vmul.f32 %v2731, 0.01
    %v2796 = vmul.f32 %v2732, 0.01
    %v2797 = vmul.f32 %v2733, 0.01
    %v2798 = vmul.f32 %v2734, 0.01
    %v2799 = vmul.f32 %v2735, 0.01
    %v2800 = vmul.f32 %v2736, 0.01
    %v2801 = vmul.f32 %v2737, 0.01
    %v2802 = vmul.f32 %v2738, 0.01
    %v2803 = vmul.f32 %v2739, 0.01
    %v2804 = vmul.f32 %v2740, 0.01
    %v2805 = vmul.f32 %v2741, 0.01
    %v2806 = vmul.f32 %v2742, 0.01
    %v2807 = vmul.f32 %v2743, 0.01
    %v2808 = vmul.f32 %v2744, 0.01
    %v2809 = vmul.f32 %v2745, 0.01
    %v2810 = vmul.f32 %v2746, 0.01
    %v2811 = vmul.f32 %v2747, 0.01
    %v2812 = vmul.f32 %v2748, 0.01
    %v2813 = vmul.f32 %v2749, 0.01
    %v2814 = vmul.f32 %v2750, 0.01
    %v2815 = vmul.f32 %v2751, 0.01
    %v2816 = vmul.f32 %v2752, 0.01
    %v2817 = vmul.f32 %v2753, 0.01
    %v2818 = vsel %vm2754, %v2722, %v2786
    %v2819 = vsel %vm2755, %v2723, %v2787
    %v2820 = vsel %vm2756, %v2724, %v2788
    %v2821 = vsel %vm2757, %v2725, %v2789
    %v2822 = vsel %vm2758, %v2726, %v2790
    %v2823 = vsel %vm2759, %v2727, %v2791
    %v2824 = vsel %vm2760, %v2728, %v2792
    %v2825 = vsel %vm2761, %v2729, %v2793
    %v2826 = vsel %vm2762, %v2730, %v2794
    %v2827 = vsel %vm2763, %v2731, %v2795
    %v2828 = vsel %vm2764, %v2732, %v2796
    %v2829 = vsel %vm2765, %v2733, %v2797
    %v2830 = vsel %vm2766, %v2734, %v2798
    %v2831 = vsel %vm2767, %v2735, %v2799
    %v2832 = vsel %vm2768, %v2736, %v2800
    %v2833 = vsel %vm2769, %v2737, %v2801
    %v2834 = vsel %vm2770, %v2738, %v2802
    %v2835 = vsel %vm2771, %v2739, %v2803
    %v2836 = vsel %vm2772, %v2740, %v2804
    %v2837 = vsel %vm2773, %v2741, %v2805
    %v2838 = vsel %vm2774, %v2742, %v2806
    %v2839 = vsel %vm2775, %v2743, %v2807
    %v2840 = vsel %vm2776, %v2744, %v2808
    %v2841 = vsel %vm2777, %v2745, %v2809
    %v2842 = vsel %vm2778, %v2746, %v2810
    %v2843 = vsel %vm2779, %v2747, %v2811
    %v2844 = vsel %vm2780, %v2748, %v2812
    %v2845 = vsel %vm2781, %v2749, %v2813
    %v2846 = vsel %vm2782, %v2750, %v2814
    %v2847 = vsel %vm2783, %v2751, %v2815
    %v2848 = vsel %vm2784, %v2752, %v2816
    %v2849 = vsel %vm2785, %v2753, %v2817
    %v2850 = vadd.f32 %v2818, %v2826
    %v2851 = vadd.f32 %v2850, %v2834
    %v2852 = vadd.f32 %v2851, %v2842
    %v2853 = vrot.slane %v2852, 4
    %v2854 = vadd.f32 %v2852, %v2853
    %v2855 = vrot.slane %v2854, 2
    %v2856 = vadd.f32 %v2854, %v2855
    %v2857 = vrot.slane %v2856, 1
    %v2858 = vadd.f32 %v2856, %v2857
    %v2859 = vadd.f32 %v2819, %v2827
    %v2860 = vadd.f32 %v2859, %v2835
    %v2861 = vadd.f32 %v2860, %v2843
    %v2862 = vrot.slane %v2861, 4
    %v2863 = vadd.f32 %v2861, %v2862
    %v2864 = vrot.slane %v2863, 2
    %v2865 = vadd.f32 %v2863, %v2864
    %v2866 = vrot.slane %v2865, 1
    %v2867 = vadd.f32 %v2865, %v2866
    %v2868 = vadd.f32 %v2820, %v2828
    %v2869 = vadd.f32 %v2868, %v2836
    %v2870 = vadd.f32 %v2869, %v2844
    %v2871 = vrot.slane %v2870, 4
    %v2872 = vadd.f32 %v2870, %v2871
    %v2873 = vrot.slane %v2872, 2
    %v2874 = vadd.f32 %v2872, %v2873
    %v2875 = vrot.slane %v2874, 1
    %v2876 = vadd.f32 %v2874, %v2875
    %v2877 = vadd.f32 %v2821, %v2829
    %v2878 = vadd.f32 %v2877, %v2837
    %v2879 = vadd.f32 %v2878, %v2845
    %v2880 = vrot.slane %v2879, 4
    %v2881 = vadd.f32 %v2879, %v2880
    %v2882 = vrot.slane %v2881, 2
    %v2883 = vadd.f32 %v2881, %v2882
    %v2884 = vrot.slane %v2883, 1
    %v2885 = vadd.f32 %v2883, %v2884
    %v2886 = vadd.f32 %v2822, %v2830
    %v2887 = vadd.f32 %v2886, %v2838
    %v2888 = vadd.f32 %v2887, %v2846
    %v2889 = vrot.slane %v2888, 4
    %v2890 = vadd.f32 %v2888, %v2889
    %v2891 = vrot.slane %v2890, 2
    %v2892 = vadd.f32 %v2890, %v2891
    %v2893 = vrot.slane %v2892, 1
    %v2894 = vadd.f32 %v2892, %v2893
    %v2895 = vadd.f32 %v2823, %v2831
    %v2896 = vadd.f32 %v2895, %v2839
    %v2897 = vadd.f32 %v2896, %v2847
    %v2898 = vrot.slane %v2897, 4
    %v2899 = vadd.f32 %v2897, %v2898
    %v2900 = vrot.slane %v2899, 2
    %v2901 = vadd.f32 %v2899, %v2900
    %v2902 = vrot.slane %v2901, 1
    %v2903 = vadd.f32 %v2901, %v2902
    %v2904 = vadd.f32 %v2824, %v2832
    %v2905 = vadd.f32 %v2904, %v2840
    %v2906 = vadd.f32 %v2905, %v2848
    %v2907 = vrot.slane %v2906, 4
    %v2908 = vadd.f32 %v2906, %v2907
    %v2909 = vrot.slane %v2908, 2
    %v2910 = vadd.f32 %v2908, %v2909
    %v2911 = vrot.slane %v2910, 1
    %v2912 = vadd.f32 %v2910, %v2911
    %v2913 = vadd.f32 %v2825, %v2833
    %v2914 = vadd.f32 %v2913, %v2841
    %v2915 = vadd.f32 %v2914, %v2849
    %v2916 = vrot.slane %v2915, 4
    %v2917 = vadd.f32 %v2915, %v2916
    %v2918 = vrot.slane %v2917, 2
    %v2919 = vadd.f32 %v2917, %v2918
    %v2920 = vrot.slane %v2919, 1
    %v2921 = vadd.f32 %v2919, %v2920
    %v2922 = vadd.f32 %v2858, %v2894
    %v2923 = vadd.f32 %v2867, %v2903
    %v2924 = vadd.f32 %v2876, %v2912
    %v2925 = vadd.f32 %v2885, %v2921
    %v2926 = vadd.f32 %v2922, %v2924
    %v2927 = vadd.f32 %v2923, %v2925
    %v2928 = vadd.f32 %v2924, %v2922
    %v2929 = vadd.f32 %v2925, %v2923
    %v2930 = vsel %vm876, %v2929, %v2927
    %v2931 = vsel %vm877, %v2926, %v2928
    %v2932 = vsel %vm878, %v2927, %v2929
    %v2933 = vsel %vm879, %v2928, %v2926
    %v2934 = vsel %vm880, %v2929, %v2927
    %v2935 = vsel %vm881, %v2926, %v2928
    %v2936 = vsel %vm882, %v2927, %v2929
    %v2937 = vsel %vm883, %v2928, %v2926
    %v2938 = vadd.f32 %v2926, %v2930
    %v2939 = vadd.f32 %v2927, %v2931
    %v2940 = vadd.f32 %v2928, %v2932
    %v2941 = vadd.f32 %v2929, %v2933
    %v2942 = vadd.f32 %v2926, %v2934
    %v2943 = vadd.f32 %v2927, %v2935
    %v2944 = vadd.f32 %v2928, %v2936
    %v2945 = vadd.f32 %v2929, %v2937
    %2946 = vrot.lane.b32.xlu0 %v2938, 16
    %v2947 = vpop.permute.xlu0 %2946
    %2948 = vrot.lane.b32.xlu0 %v2939, 16
    %v2949 = vpop.permute.xlu0 %2948
    %2950 = vrot.lane.b32.xlu0 %v2940, 16
    %v2951 = vpop.permute.xlu0 %2950
    %2952 = vrot.lane.b32.xlu0 %v2941, 16
    %v2953 = vpop.permute.xlu0 %2952
    %2954 = vrot.lane.b32.xlu0 %v2942, 16
    %v2955 = vpop.permute.xlu0 %2954
    %2956 = vrot.lane.b32.xlu0 %v2943, 16
    %v2957 = vpop.permute.xlu0 %2956
    %2958 = vrot.lane.b32.xlu0 %v2944, 16
    %v2959 = vpop.permute.xlu0 %2958
    %2960 = vrot.lane.b32.xlu0 %v2945, 16
    %v2961 = vpop.permute.xlu0 %2960
    %v2962 = vsel %vm802, %v2959, %v2961
    %v2963 = vsel %vm802, %v2957, %v2959
    %v2964 = vsel %vm802, %v2955, %v2957
    %v2965 = vsel %vm802, %v2953, %v2955
    %v2966 = vsel %vm802, %v2951, %v2953
    %v2967 = vsel %vm802, %v2949, %v2951
    %v2968 = vsel %vm802, %v2947, %v2949
    %v2969 = vsel %vm802, %v2961, %v2947
    %2970 = vrot.lane.b32.xlu0 %v2938, 112
    %v2971 = vpop.permute.xlu0 %2970
    %2972 = vrot.lane.b32.xlu0 %v2939, 112
    %v2973 = vpop.permute.xlu0 %2972
    %2974 = vrot.lane.b32.xlu0 %v2940, 112
    %v2975 = vpop.permute.xlu0 %2974
    %2976 = vrot.lane.b32.xlu0 %v2941, 112
    %v2977 = vpop.permute.xlu0 %2976
    %2978 = vrot.lane.b32.xlu0 %v2942, 112
    %v2979 = vpop.permute.xlu0 %2978
    %2980 = vrot.lane.b32.xlu0 %v2943, 112
    %v2981 = vpop.permute.xlu0 %2980
    %2982 = vrot.lane.b32.xlu0 %v2944, 112
    %v2983 = vpop.permute.xlu0 %2982
    %2984 = vrot.lane.b32.xlu0 %v2945, 112
    %v2985 = vpop.permute.xlu0 %2984
    %v2986 = vsel %vm1508, %v2983, %v2985
    %v2987 = vsel %vm1508, %v2981, %v2983
    %v2988 = vsel %vm1508, %v2979, %v2981
    %v2989 = vsel %vm1508, %v2977, %v2979
    %v2990 = vsel %vm1508, %v2975, %v2977
    %v2991 = vsel %vm1508, %v2973, %v2975
    %v2992 = vsel %vm1508, %v2971, %v2973
    %v2993 = vsel %vm1508, %v2985, %v2971
    %v2994 = vsel %vm819, %v2969, %v2992
    %v2995 = vsel %vm820, %v2968, %v2991
    %v2996 = vsel %vm821, %v2967, %v2990
    %v2997 = vsel %vm822, %v2966, %v2989
    %v2998 = vsel %vm823, %v2965, %v2988
    %v2999 = vsel %vm824, %v2964, %v2987
    %v3000 = vsel %vm825, %v2963, %v2986
    %v3001 = vsel %vm826, %v2962, %v2993
    %v3002 = vadd.f32 %v2938, %v2994
    %v3003 = vadd.f32 %v2939, %v2995
    %v3004 = vadd.f32 %v2940, %v2996
    %v3005 = vadd.f32 %v2941, %v2997
    %v3006 = vadd.f32 %v2942, %v2998
    %v3007 = vadd.f32 %v2943, %v2999
    %v3008 = vadd.f32 %v2944, %v3000
    %v3009 = vadd.f32 %v2945, %v3001
    %3010 = vrot.lane.b32.xlu0 %v3002, 8
    %v3011 = vpop.permute.xlu0 %3010
    %3012 = vrot.lane.b32.xlu0 %v3003, 8
    %v3013 = vpop.permute.xlu0 %3012
    %3014 = vrot.lane.b32.xlu0 %v3004, 8
    %v3015 = vpop.permute.xlu0 %3014
    %3016 = vrot.lane.b32.xlu0 %v3005, 8
    %v3017 = vpop.permute.xlu0 %3016
    %3018 = vrot.lane.b32.xlu0 %v3006, 8
    %v3019 = vpop.permute.xlu0 %3018
    %3020 = vrot.lane.b32.xlu0 %v3007, 8
    %v3021 = vpop.permute.xlu0 %3020
    %3022 = vrot.lane.b32.xlu0 %v3008, 8
    %v3023 = vpop.permute.xlu0 %3022
    %3024 = vrot.lane.b32.xlu0 %v3009, 8
    %v3025 = vpop.permute.xlu0 %3024
    %v3026 = vsel %vm761, %v3023, %v3025
    %v3027 = vsel %vm761, %v3021, %v3023
    %v3028 = vsel %vm761, %v3019, %v3021
    %v3029 = vsel %vm761, %v3017, %v3019
    %v3030 = vsel %vm761, %v3015, %v3017
    %v3031 = vsel %vm761, %v3013, %v3015
    %v3032 = vsel %vm761, %v3011, %v3013
    %v3033 = vsel %vm761, %v3025, %v3011
    %3034 = vrot.lane.b32.xlu0 %v3002, 120
    %v3035 = vpop.permute.xlu0 %3034
    %3036 = vrot.lane.b32.xlu0 %v3003, 120
    %v3037 = vpop.permute.xlu0 %3036
    %3038 = vrot.lane.b32.xlu0 %v3004, 120
    %v3039 = vpop.permute.xlu0 %3038
    %3040 = vrot.lane.b32.xlu0 %v3005, 120
    %v3041 = vpop.permute.xlu0 %3040
    %3042 = vrot.lane.b32.xlu0 %v3006, 120
    %v3043 = vpop.permute.xlu0 %3042
    %3044 = vrot.lane.b32.xlu0 %v3007, 120
    %v3045 = vpop.permute.xlu0 %3044
    %3046 = vrot.lane.b32.xlu0 %v3008, 120
    %v3047 = vpop.permute.xlu0 %3046
    %3048 = vrot.lane.b32.xlu0 %v3009, 120
    %v3049 = vpop.permute.xlu0 %3048
    %v3050 = vsel %vm2223, %v3047, %v3049
    %v3051 = vsel %vm2223, %v3045, %v3047
    %v3052 = vsel %vm2223, %v3043, %v3045
    %v3053 = vsel %vm2223, %v3041, %v3043
    %v3054 = vsel %vm2223, %v3039, %v3041
    %v3055 = vsel %vm2223, %v3037, %v3039
    %v3056 = vsel %vm2223, %v3035, %v3037
    %v3057 = vsel %vm2223, %v3049, %v3035
    %v3058 = vsel %vm778, %v3033, %v3056
    %v3059 = vsel %vm779, %v3032, %v3055
    %v3060 = vsel %vm780, %v3031, %v3054
    %v3061 = vsel %vm781, %v3030, %v3053
    %v3062 = vsel %vm782, %v3029, %v3052
    %v3063 = vsel %vm783, %v3028, %v3051
    %v3064 = vsel %vm784, %v3027, %v3050
    %v3065 = vsel %vm785, %v3026, %v3057
    %v3066 = vadd.f32 %v3002, %v3058
    %v3067 = vadd.f32 %v3003, %v3059
    %v3068 = vadd.f32 %v3004, %v3060
    %v3069 = vadd.f32 %v3005, %v3061
    %v3070 = vadd.f32 %v3006, %v3062
    %v3071 = vadd.f32 %v3007, %v3063
    %v3072 = vadd.f32 %v3008, %v3064
    %v3073 = vadd.f32 %v3009, %v3065
    %3074 = vrot.lane.b32.xlu0 %v3066, 4
    %v3075 = vpop.permute.xlu0 %3074
    %3076 = vrot.lane.b32.xlu0 %v3067, 4
    %v3077 = vpop.permute.xlu0 %3076
    %3078 = vrot.lane.b32.xlu0 %v3068, 4
    %v3079 = vpop.permute.xlu0 %3078
    %3080 = vrot.lane.b32.xlu0 %v3069, 4
    %v3081 = vpop.permute.xlu0 %3080
    %3082 = vrot.lane.b32.xlu0 %v3070, 4
    %v3083 = vpop.permute.xlu0 %3082
    %3084 = vrot.lane.b32.xlu0 %v3071, 4
    %v3085 = vpop.permute.xlu0 %3084
    %3086 = vrot.lane.b32.xlu0 %v3072, 4
    %v3087 = vpop.permute.xlu0 %3086
    %3088 = vrot.lane.b32.xlu0 %v3073, 4
    %v3089 = vpop.permute.xlu0 %3088
    %v3090 = vsel %vm720, %v3087, %v3089
    %v3091 = vsel %vm720, %v3085, %v3087
    %v3092 = vsel %vm720, %v3083, %v3085
    %v3093 = vsel %vm720, %v3081, %v3083
    %v3094 = vsel %vm720, %v3079, %v3081
    %v3095 = vsel %vm720, %v3077, %v3079
    %v3096 = vsel %vm720, %v3075, %v3077
    %v3097 = vsel %vm720, %v3089, %v3075
    %3098 = vrot.lane.b32.xlu0 %v3066, 124
    %v3099 = vpop.permute.xlu0 %3098
    %3100 = vrot.lane.b32.xlu0 %v3067, 124
    %v3101 = vpop.permute.xlu0 %3100
    %3102 = vrot.lane.b32.xlu0 %v3068, 124
    %v3103 = vpop.permute.xlu0 %3102
    %3104 = vrot.lane.b32.xlu0 %v3069, 124
    %v3105 = vpop.permute.xlu0 %3104
    %3106 = vrot.lane.b32.xlu0 %v3070, 124
    %v3107 = vpop.permute.xlu0 %3106
    %3108 = vrot.lane.b32.xlu0 %v3071, 124
    %v3109 = vpop.permute.xlu0 %3108
    %3110 = vrot.lane.b32.xlu0 %v3072, 124
    %v3111 = vpop.permute.xlu0 %3110
    %3112 = vrot.lane.b32.xlu0 %v3073, 124
    %v3113 = vpop.permute.xlu0 %3112
    %vm3114 = vcmp.lt.s32.totalorder %v655, 124
    %v3115 = vsel %vm3114, %v3111, %v3113
    %v3116 = vsel %vm3114, %v3109, %v3111
    %v3117 = vsel %vm3114, %v3107, %v3109
    %v3118 = vsel %vm3114, %v3105, %v3107
    %v3119 = vsel %vm3114, %v3103, %v3105
    %v3120 = vsel %vm3114, %v3101, %v3103
    %v3121 = vsel %vm3114, %v3099, %v3101
    %v3122 = vsel %vm3114, %v3113, %v3099
    %v3123 = vsel %vm737, %v3097, %v3121
    %v3124 = vsel %vm738, %v3096, %v3120
    %v3125 = vsel %vm739, %v3095, %v3119
    %v3126 = vsel %vm740, %v3094, %v3118
    %v3127 = vsel %vm741, %v3093, %v3117
    %v3128 = vsel %vm742, %v3092, %v3116
    %v3129 = vsel %vm743, %v3091, %v3115
    %v3130 = vsel %vm744, %v3090, %v3122
    %v3131 = vadd.f32 %v3066, %v3123
    %v3132 = vadd.f32 %v3067, %v3124
    %v3133 = vadd.f32 %v3068, %v3125
    %v3134 = vadd.f32 %v3069, %v3126
    %v3135 = vadd.f32 %v3070, %v3127
    %v3136 = vadd.f32 %v3071, %v3128
    %v3137 = vadd.f32 %v3072, %v3129
    %v3138 = vadd.f32 %v3073, %v3130
    %v3139 = vmul.f32 %v3131, 0.00048828125
    %v3140 = vmul.f32 %v3132, 0.00048828125
    %v3141 = vmul.f32 %v3133, 0.00048828125
    %v3142 = vmul.f32 %v3134, 0.00048828125
    %v3143 = vmul.f32 %v3135, 0.00048828125
    %v3144 = vmul.f32 %v3136, 0.00048828125
    %v3145 = vmul.f32 %v3137, 0.00048828125
    %v3146 = vmul.f32 %v3138, 0.00048828125
    %v3147 = vlaneseq
    %v3148 = vshrl.u32 %v3147, 7
    %v3149 = vsub.s32 0, %v3148
    %v3150 = vrot.slane %v3139, %v3149
    %v3151 = vlaneseq
    %v3152 = vshrl.u32 %v3151, 7
    %v3153 = vsub.s32 0, %v3152
    %v3154 = vrot.slane %v3140, %v3153
    %v3155 = vlaneseq
    %v3156 = vshrl.u32 %v3155, 7
    %v3157 = vsub.s32 0, %v3156
    %v3158 = vrot.slane %v3141, %v3157
    %v3159 = vlaneseq
    %v3160 = vshrl.u32 %v3159, 7
    %v3161 = vsub.s32 0, %v3160
    %v3162 = vrot.slane %v3142, %v3161
    %v3163 = vlaneseq
    %v3164 = vshrl.u32 %v3163, 7
    %v3165 = vsub.s32 0, %v3164
    %v3166 = vrot.slane %v3143, %v3165
    %v3167 = vlaneseq
    %v3168 = vshrl.u32 %v3167, 7
    %v3169 = vsub.s32 0, %v3168
    %v3170 = vrot.slane %v3144, %v3169
    %v3171 = vlaneseq
    %v3172 = vshrl.u32 %v3171, 7
    %v3173 = vsub.s32 0, %v3172
    %v3174 = vrot.slane %v3145, %v3173
    %v3175 = vlaneseq
    %v3176 = vshrl.u32 %v3175, 7
    %v3177 = vsub.s32 0, %v3176
    %v3178 = vrot.slane %v3146, %v3177
    %v3179 = vsub.f32 %v2818, %v3150
    %v3180 = vsub.f32 %v2819, %v3154
    %v3181 = vsub.f32 %v2820, %v3158
    %v3182 = vsub.f32 %v2821, %v3162
    %v3183 = vsub.f32 %v2822, %v3166
    %v3184 = vsub.f32 %v2823, %v3170
    %v3185 = vsub.f32 %v2824, %v3174
    %v3186 = vsub.f32 %v2825, %v3178
    %v3187 = vsub.f32 %v2826, %v3150
    %v3188 = vsub.f32 %v2827, %v3154
    %v3189 = vsub.f32 %v2828, %v3158
    %v3190 = vsub.f32 %v2829, %v3162
    %v3191 = vsub.f32 %v2830, %v3166
    %v3192 = vsub.f32 %v2831, %v3170
    %v3193 = vsub.f32 %v2832, %v3174
    %v3194 = vsub.f32 %v2833, %v3178
    %v3195 = vsub.f32 %v2834, %v3150
    %v3196 = vsub.f32 %v2835, %v3154
    %v3197 = vsub.f32 %v2836, %v3158
    %v3198 = vsub.f32 %v2837, %v3162
    %v3199 = vsub.f32 %v2838, %v3166
    %v3200 = vsub.f32 %v2839, %v3170
    %v3201 = vsub.f32 %v2840, %v3174
    %v3202 = vsub.f32 %v2841, %v3178
    %v3203 = vsub.f32 %v2842, %v3150
    %v3204 = vsub.f32 %v2843, %v3154
    %v3205 = vsub.f32 %v2844, %v3158
    %v3206 = vsub.f32 %v2845, %v3162
    %v3207 = vsub.f32 %v2846, %v3166
    %v3208 = vsub.f32 %v2847, %v3170
    %v3209 = vsub.f32 %v2848, %v3174
    %v3210 = vsub.f32 %v2849, %v3178
    %v3211 = vmul.f32 %v3179, %v3179
    %v3212 = vmul.f32 %v3180, %v3180
    %v3213 = vmul.f32 %v3181, %v3181
    %v3214 = vmul.f32 %v3182, %v3182
    %v3215 = vmul.f32 %v3183, %v3183
    %v3216 = vmul.f32 %v3184, %v3184
    %v3217 = vmul.f32 %v3185, %v3185
    %v3218 = vmul.f32 %v3186, %v3186
    %v3219 = vmul.f32 %v3187, %v3187
    %v3220 = vmul.f32 %v3188, %v3188
    %v3221 = vmul.f32 %v3189, %v3189
    %v3222 = vmul.f32 %v3190, %v3190
    %v3223 = vmul.f32 %v3191, %v3191
    %v3224 = vmul.f32 %v3192, %v3192
    %v3225 = vmul.f32 %v3193, %v3193
    %v3226 = vmul.f32 %v3194, %v3194
    %v3227 = vmul.f32 %v3195, %v3195
    %v3228 = vmul.f32 %v3196, %v3196
    %v3229 = vmul.f32 %v3197, %v3197
    %v3230 = vmul.f32 %v3198, %v3198
    %v3231 = vmul.f32 %v3199, %v3199
    %v3232 = vmul.f32 %v3200, %v3200
    %v3233 = vmul.f32 %v3201, %v3201
    %v3234 = vmul.f32 %v3202, %v3202
    %v3235 = vmul.f32 %v3203, %v3203
    %v3236 = vmul.f32 %v3204, %v3204
    %v3237 = vmul.f32 %v3205, %v3205
    %v3238 = vmul.f32 %v3206, %v3206
    %v3239 = vmul.f32 %v3207, %v3207
    %v3240 = vmul.f32 %v3208, %v3208
    %v3241 = vmul.f32 %v3209, %v3209
    %v3242 = vmul.f32 %v3210, %v3210
    %v3243 = vadd.f32 %v3211, %v3219
    %v3244 = vadd.f32 %v3243, %v3227
    %v3245 = vadd.f32 %v3244, %v3235
    %v3246 = vrot.slane %v3245, 4
    %v3247 = vadd.f32 %v3245, %v3246
    %v3248 = vrot.slane %v3247, 2
    %v3249 = vadd.f32 %v3247, %v3248
    %v3250 = vrot.slane %v3249, 1
    %v3251 = vadd.f32 %v3249, %v3250
    %v3252 = vadd.f32 %v3212, %v3220
    %v3253 = vadd.f32 %v3252, %v3228
    %v3254 = vadd.f32 %v3253, %v3236
    %v3255 = vrot.slane %v3254, 4
    %v3256 = vadd.f32 %v3254, %v3255
    %v3257 = vrot.slane %v3256, 2
    %v3258 = vadd.f32 %v3256, %v3257
    %v3259 = vrot.slane %v3258, 1
    %v3260 = vadd.f32 %v3258, %v3259
    %v3261 = vadd.f32 %v3213, %v3221
    %v3262 = vadd.f32 %v3261, %v3229
    %v3263 = vadd.f32 %v3262, %v3237
    %v3264 = vrot.slane %v3263, 4
    %v3265 = vadd.f32 %v3263, %v3264
    %v3266 = vrot.slane %v3265, 2
    %v3267 = vadd.f32 %v3265, %v3266
    %v3268 = vrot.slane %v3267, 1
    %v3269 = vadd.f32 %v3267, %v3268
    %v3270 = vadd.f32 %v3214, %v3222
    %v3271 = vadd.f32 %v3270, %v3230
    %v3272 = vadd.f32 %v3271, %v3238
    %v3273 = vrot.slane %v3272, 4
    %v3274 = vadd.f32 %v3272, %v3273
    %v3275 = vrot.slane %v3274, 2
    %v3276 = vadd.f32 %v3274, %v3275
    %v3277 = vrot.slane %v3276, 1
    %v3278 = vadd.f32 %v3276, %v3277
    %v3279 = vadd.f32 %v3215, %v3223
    %v3280 = vadd.f32 %v3279, %v3231
    %v3281 = vadd.f32 %v3280, %v3239
    %v3282 = vrot.slane %v3281, 4
    %v3283 = vadd.f32 %v3281, %v3282
    %v3284 = vrot.slane %v3283, 2
    %v3285 = vadd.f32 %v3283, %v3284
    %v3286 = vrot.slane %v3285, 1
    %v3287 = vadd.f32 %v3285, %v3286
    %v3288 = vadd.f32 %v3216, %v3224
    %v3289 = vadd.f32 %v3288, %v3232
    %v3290 = vadd.f32 %v3289, %v3240
    %v3291 = vrot.slane %v3290, 4
    %v3292 = vadd.f32 %v3290, %v3291
    %v3293 = vrot.slane %v3292, 2
    %v3294 = vadd.f32 %v3292, %v3293
    %v3295 = vrot.slane %v3294, 1
    %v3296 = vadd.f32 %v3294, %v3295
    %v3297 = vadd.f32 %v3217, %v3225
    %v3298 = vadd.f32 %v3297, %v3233
    %v3299 = vadd.f32 %v3298, %v3241
    %v3300 = vrot.slane %v3299, 4
    %v3301 = vadd.f32 %v3299, %v3300
    %v3302 = vrot.slane %v3301, 2
    %v3303 = vadd.f32 %v3301, %v3302
    %v3304 = vrot.slane %v3303, 1
    %v3305 = vadd.f32 %v3303, %v3304
    %v3306 = vadd.f32 %v3218, %v3226
    %v3307 = vadd.f32 %v3306, %v3234
    %v3308 = vadd.f32 %v3307, %v3242
    %v3309 = vrot.slane %v3308, 4
    %v3310 = vadd.f32 %v3308, %v3309
    %v3311 = vrot.slane %v3310, 2
    %v3312 = vadd.f32 %v3310, %v3311
    %v3313 = vrot.slane %v3312, 1
    %v3314 = vadd.f32 %v3312, %v3313
    %v3315 = vadd.f32 %v3251, %v3287
    %v3316 = vadd.f32 %v3260, %v3296
    %v3317 = vadd.f32 %v3269, %v3305
    %v3318 = vadd.f32 %v3278, %v3314
    %v3319 = vadd.f32 %v3315, %v3317
    %v3320 = vadd.f32 %v3316, %v3318
    %v3321 = vadd.f32 %v3317, %v3315
    %v3322 = vadd.f32 %v3318, %v3316
    %v3323 = vsel %vm876, %v3322, %v3320
    %v3324 = vsel %vm877, %v3319, %v3321
    %v3325 = vsel %vm878, %v3320, %v3322
    %v3326 = vsel %vm879, %v3321, %v3319
    %v3327 = vsel %vm880, %v3322, %v3320
    %v3328 = vsel %vm881, %v3319, %v3321
    %v3329 = vsel %vm882, %v3320, %v3322
    %v3330 = vsel %vm883, %v3321, %v3319
    %v3331 = vadd.f32 %v3319, %v3323
    %v3332 = vadd.f32 %v3320, %v3324
    %v3333 = vadd.f32 %v3321, %v3325
    %v3334 = vadd.f32 %v3322, %v3326
    %v3335 = vadd.f32 %v3319, %v3327
    %v3336 = vadd.f32 %v3320, %v3328
    %v3337 = vadd.f32 %v3321, %v3329
    %v3338 = vadd.f32 %v3322, %v3330
    %3339 = vrot.lane.b32.xlu0 %v3331, 16
    %v3340 = vpop.permute.xlu0 %3339
    %3341 = vrot.lane.b32.xlu0 %v3332, 16
    %v3342 = vpop.permute.xlu0 %3341
    %3343 = vrot.lane.b32.xlu0 %v3333, 16
    %v3344 = vpop.permute.xlu0 %3343
    %3345 = vrot.lane.b32.xlu0 %v3334, 16
    %v3346 = vpop.permute.xlu0 %3345
    %3347 = vrot.lane.b32.xlu0 %v3335, 16
    %v3348 = vpop.permute.xlu0 %3347
    %3349 = vrot.lane.b32.xlu0 %v3336, 16
    %v3350 = vpop.permute.xlu0 %3349
    %3351 = vrot.lane.b32.xlu0 %v3337, 16
    %v3352 = vpop.permute.xlu0 %3351
    %3353 = vrot.lane.b32.xlu0 %v3338, 16
    %v3354 = vpop.permute.xlu0 %3353
    %v3355 = vsel %vm802, %v3352, %v3354
    %v3356 = vsel %vm802, %v3350, %v3352
    %v3357 = vsel %vm802, %v3348, %v3350
    %v3358 = vsel %vm802, %v3346, %v3348
    %v3359 = vsel %vm802, %v3344, %v3346
    %v3360 = vsel %vm802, %v3342, %v3344
    %v3361 = vsel %vm802, %v3340, %v3342
    %v3362 = vsel %vm802, %v3354, %v3340
    %3363 = vrot.lane.b32.xlu0 %v3331, 112
    %v3364 = vpop.permute.xlu0 %3363
    %3365 = vrot.lane.b32.xlu0 %v3332, 112
    %v3366 = vpop.permute.xlu0 %3365
    %3367 = vrot.lane.b32.xlu0 %v3333, 112
    %v3368 = vpop.permute.xlu0 %3367
    %3369 = vrot.lane.b32.xlu0 %v3334, 112
    %v3370 = vpop.permute.xlu0 %3369
    %3371 = vrot.lane.b32.xlu0 %v3335, 112
    %v3372 = vpop.permute.xlu0 %3371
    %3373 = vrot.lane.b32.xlu0 %v3336, 112
    %v3374 = vpop.permute.xlu0 %3373
    %3375 = vrot.lane.b32.xlu0 %v3337, 112
    %v3376 = vpop.permute.xlu0 %3375
    %3377 = vrot.lane.b32.xlu0 %v3338, 112
    %v3378 = vpop.permute.xlu0 %3377
    %v3379 = vsel %vm1508, %v3376, %v3378
    %v3380 = vsel %vm1508, %v3374, %v3376
    %v3381 = vsel %vm1508, %v3372, %v3374
    %v3382 = vsel %vm1508, %v3370, %v3372
    %v3383 = vsel %vm1508, %v3368, %v3370
    %v3384 = vsel %vm1508, %v3366, %v3368
    %v3385 = vsel %vm1508, %v3364, %v3366
    %v3386 = vsel %vm1508, %v3378, %v3364
    %v3387 = vsel %vm819, %v3362, %v3385
    %v3388 = vsel %vm820, %v3361, %v3384
    %v3389 = vsel %vm821, %v3360, %v3383
    %v3390 = vsel %vm822, %v3359, %v3382
    %v3391 = vsel %vm823, %v3358, %v3381
    %v3392 = vsel %vm824, %v3357, %v3380
    %v3393 = vsel %vm825, %v3356, %v3379
    %v3394 = vsel %vm826, %v3355, %v3386
    %v3395 = vadd.f32 %v3331, %v3387
    %v3396 = vadd.f32 %v3332, %v3388
    %v3397 = vadd.f32 %v3333, %v3389
    %v3398 = vadd.f32 %v3334, %v3390
    %v3399 = vadd.f32 %v3335, %v3391
    %v3400 = vadd.f32 %v3336, %v3392
    %v3401 = vadd.f32 %v3337, %v3393
    %v3402 = vadd.f32 %v3338, %v3394
    %3403 = vrot.lane.b32.xlu0 %v3395, 8
    %v3404 = vpop.permute.xlu0 %3403
    %3405 = vrot.lane.b32.xlu0 %v3396, 8
    %v3406 = vpop.permute.xlu0 %3405
    %3407 = vrot.lane.b32.xlu0 %v3397, 8
    %v3408 = vpop.permute.xlu0 %3407
    %3409 = vrot.lane.b32.xlu0 %v3398, 8
    %v3410 = vpop.permute.xlu0 %3409
    %3411 = vrot.lane.b32.xlu0 %v3399, 8
    %v3412 = vpop.permute.xlu0 %3411
    %3413 = vrot.lane.b32.xlu0 %v3400, 8
    %v3414 = vpop.permute.xlu0 %3413
    %3415 = vrot.lane.b32.xlu0 %v3401, 8
    %v3416 = vpop.permute.xlu0 %3415
    %3417 = vrot.lane.b32.xlu0 %v3402, 8
    %v3418 = vpop.permute.xlu0 %3417
    %v3419 = vsel %vm761, %v3416, %v3418
    %v3420 = vsel %vm761, %v3414, %v3416
    %v3421 = vsel %vm761, %v3412, %v3414
    %v3422 = vsel %vm761, %v3410, %v3412
    %v3423 = vsel %vm761, %v3408, %v3410
    %v3424 = vsel %vm761, %v3406, %v3408
    %v3425 = vsel %vm761, %v3404, %v3406
    %v3426 = vsel %vm761, %v3418, %v3404
    %3427 = vrot.lane.b32.xlu0 %v3395, 120
    %v3428 = vpop.permute.xlu0 %3427
    %3429 = vrot.lane.b32.xlu0 %v3396, 120
    %v3430 = vpop.permute.xlu0 %3429
    %3431 = vrot.lane.b32.xlu0 %v3397, 120
    %v3432 = vpop.permute.xlu0 %3431
    %3433 = vrot.lane.b32.xlu0 %v3398, 120
    %v3434 = vpop.permute.xlu0 %3433
    %3435 = vrot.lane.b32.xlu0 %v3399, 120
    %v3436 = vpop.permute.xlu0 %3435
    %3437 = vrot.lane.b32.xlu0 %v3400, 120
    %v3438 = vpop.permute.xlu0 %3437
    %3439 = vrot.lane.b32.xlu0 %v3401, 120
    %v3440 = vpop.permute.xlu0 %3439
    %3441 = vrot.lane.b32.xlu0 %v3402, 120
    %v3442 = vpop.permute.xlu0 %3441
    %v3443 = vsel %vm2223, %v3440, %v3442
    %v3444 = vsel %vm2223, %v3438, %v3440
    %v3445 = vsel %vm2223, %v3436, %v3438
    %v3446 = vsel %vm2223, %v3434, %v3436
    %v3447 = vsel %vm2223, %v3432, %v3434
    %v3448 = vsel %vm2223, %v3430, %v3432
    %v3449 = vsel %vm2223, %v3428, %v3430
    %v3450 = vsel %vm2223, %v3442, %v3428
    %v3451 = vsel %vm778, %v3426, %v3449
    %v3452 = vsel %vm779, %v3425, %v3448
    %v3453 = vsel %vm780, %v3424, %v3447
    %v3454 = vsel %vm781, %v3423, %v3446
    %v3455 = vsel %vm782, %v3422, %v3445
    %v3456 = vsel %vm783, %v3421, %v3444
    %v3457 = vsel %vm784, %v3420, %v3443
    %v3458 = vsel %vm785, %v3419, %v3450
    %v3459 = vadd.f32 %v3395, %v3451
    %v3460 = vadd.f32 %v3396, %v3452
    %v3461 = vadd.f32 %v3397, %v3453
    %v3462 = vadd.f32 %v3398, %v3454
    %v3463 = vadd.f32 %v3399, %v3455
    %v3464 = vadd.f32 %v3400, %v3456
    %v3465 = vadd.f32 %v3401, %v3457
    %v3466 = vadd.f32 %v3402, %v3458
    %3467 = vrot.lane.b32.xlu0 %v3459, 4
    %v3468 = vpop.permute.xlu0 %3467
    %3469 = vrot.lane.b32.xlu0 %v3460, 4
    %v3470 = vpop.permute.xlu0 %3469
    %3471 = vrot.lane.b32.xlu0 %v3461, 4
    %v3472 = vpop.permute.xlu0 %3471
    %3473 = vrot.lane.b32.xlu0 %v3462, 4
    %v3474 = vpop.permute.xlu0 %3473
    %3475 = vrot.lane.b32.xlu0 %v3463, 4
    %v3476 = vpop.permute.xlu0 %3475
    %3477 = vrot.lane.b32.xlu0 %v3464, 4
    %v3478 = vpop.permute.xlu0 %3477
    %3479 = vrot.lane.b32.xlu0 %v3465, 4
    %v3480 = vpop.permute.xlu0 %3479
    %3481 = vrot.lane.b32.xlu0 %v3466, 4
    %v3482 = vpop.permute.xlu0 %3481
    %v3483 = vsel %vm720, %v3480, %v3482
    %v3484 = vsel %vm720, %v3478, %v3480
    %v3485 = vsel %vm720, %v3476, %v3478
    %v3486 = vsel %vm720, %v3474, %v3476
    %v3487 = vsel %vm720, %v3472, %v3474
    %v3488 = vsel %vm720, %v3470, %v3472
    %v3489 = vsel %vm720, %v3468, %v3470
    %v3490 = vsel %vm720, %v3482, %v3468
    %3491 = vrot.lane.b32.xlu0 %v3459, 124
    %v3492 = vpop.permute.xlu0 %3491
    %3493 = vrot.lane.b32.xlu0 %v3460, 124
    %v3494 = vpop.permute.xlu0 %3493
    %3495 = vrot.lane.b32.xlu0 %v3461, 124
    %v3496 = vpop.permute.xlu0 %3495
    %3497 = vrot.lane.b32.xlu0 %v3462, 124
    %v3498 = vpop.permute.xlu0 %3497
    %3499 = vrot.lane.b32.xlu0 %v3463, 124
    %v3500 = vpop.permute.xlu0 %3499
    %3501 = vrot.lane.b32.xlu0 %v3464, 124
    %v3502 = vpop.permute.xlu0 %3501
    %3503 = vrot.lane.b32.xlu0 %v3465, 124
    %v3504 = vpop.permute.xlu0 %3503
    %3505 = vrot.lane.b32.xlu0 %v3466, 124
    %v3506 = vpop.permute.xlu0 %3505
    %v3507 = vsel %vm3114, %v3504, %v3506
    %v3508 = vsel %vm3114, %v3502, %v3504
    %v3509 = vsel %vm3114, %v3500, %v3502
    %v3510 = vsel %vm3114, %v3498, %v3500
    %v3511 = vsel %vm3114, %v3496, %v3498
    %v3512 = vsel %vm3114, %v3494, %v3496
    %v3513 = vsel %vm3114, %v3492, %v3494
    %v3514 = vsel %vm3114, %v3506, %v3492
    %v3515 = vsel %vm737, %v3490, %v3513
    %v3516 = vsel %vm738, %v3489, %v3512
    %v3517 = vsel %vm739, %v3488, %v3511
    %v3518 = vsel %vm740, %v3487, %v3510
    %v3519 = vsel %vm741, %v3486, %v3509
    %v3520 = vsel %vm742, %v3485, %v3508
    %v3521 = vsel %vm743, %v3484, %v3507
    %v3522 = vsel %vm744, %v3483, %v3514
    %v3523 = vadd.f32 %v3459, %v3515
    %v3524 = vadd.f32 %v3460, %v3516
    %v3525 = vadd.f32 %v3461, %v3517
    %v3526 = vadd.f32 %v3462, %v3518
    %v3527 = vadd.f32 %v3463, %v3519
    %v3528 = vadd.f32 %v3464, %v3520
    %v3529 = vadd.f32 %v3465, %v3521
    %v3530 = vadd.f32 %v3466, %v3522
    %v3531 = vmul.f32 %v3523, 0.00048828125
    %v3532 = vmul.f32 %v3524, 0.00048828125
    %v3533 = vmul.f32 %v3525, 0.00048828125
    %v3534 = vmul.f32 %v3526, 0.00048828125
    %v3535 = vmul.f32 %v3527, 0.00048828125
    %v3536 = vmul.f32 %v3528, 0.00048828125
    %v3537 = vmul.f32 %v3529, 0.00048828125
    %v3538 = vmul.f32 %v3530, 0.00048828125
    %v3539 = vadd.f32 %v3531, 1e-05
    %v3540 = vadd.f32 %v3532, 1e-05
    %v3541 = vadd.f32 %v3533, 1e-05
    %v3542 = vadd.f32 %v3534, 1e-05
    %v3543 = vadd.f32 %v3535, 1e-05
    %v3544 = vadd.f32 %v3536, 1e-05
    %v3545 = vadd.f32 %v3537, 1e-05
    %v3546 = vadd.f32 %v3538, 1e-05
    %v3547 = vrsqrt.pop %v3539
    %v3548 = vrsqrt.pop %v3540
    %v3549 = vrsqrt.pop %v3541
    %v3550 = vrsqrt.pop %v3542
    %v3551 = vrsqrt.pop %v3543
    %v3552 = vrsqrt.pop %v3544
    %v3553 = vrsqrt.pop %v3545
    %v3554 = vrsqrt.pop %v3546
    %s3555 = scalar_lea.vmem [#allocation2], 3
    %v3556 = vld [vmem:[%s3555] ss:$8 sm:$0xf]
    %v3557 = vld [vmem:[%s3555] ss:$8 sm:$0xf0]
    %v3558 = vor.u32 %v3556, %v3557
    %v3560 = vlaneseq
    %v3561 = vshrl.u32 %v3560, 7
    %v3562 = vsub.s32 0, %v3561
    %v3563 = vrot.slane %v3558, %v3562
    %v3564 = vlaneseq
    %v3565 = vshrl.u32 %v3564, 7
    %v3566 = vsub.s32 1, %v3565
    %v3567 = vrot.slane %v3558, %v3566
    %v3568 = vlaneseq
    %v3569 = vshrl.u32 %v3568, 7
    %v3570 = vsub.s32 2, %v3569
    %v3571 = vrot.slane %v3558, %v3570
    %v3572 = vlaneseq
    %v3573 = vshrl.u32 %v3572, 7
    %v3574 = vsub.s32 3, %v3573
    %v3575 = vrot.slane %v3558, %v3574
    %v3576 = vlaneseq
    %v3577 = vshrl.u32 %v3576, 7
    %v3578 = vsub.s32 4, %v3577
    %v3579 = vrot.slane %v3558, %v3578
    %v3580 = vlaneseq
    %v3581 = vshrl.u32 %v3580, 7
    %v3582 = vsub.s32 5, %v3581
    %v3583 = vrot.slane %v3558, %v3582
    %v3584 = vlaneseq
    %v3585 = vshrl.u32 %v3584, 7
    %v3586 = vsub.s32 6, %v3585
    %v3587 = vrot.slane %v3558, %v3586
    %v3588 = vlaneseq
    %v3589 = vshrl.u32 %v3588, 7
    %v3590 = vsub.s32 7, %v3589
    %v3591 = vrot.slane %v3558, %v3590
    %v3600 = vmul.f32 %v3547, %v3563
    %v3601 = vmul.f32 %v3548, %v3567
    %v3602 = vmul.f32 %v3549, %v3571
    %v3603 = vmul.f32 %v3550, %v3575
    %v3604 = vmul.f32 %v3551, %v3579
    %v3605 = vmul.f32 %v3552, %v3583
    %v3606 = vmul.f32 %v3553, %v3587
    %v3607 = vmul.f32 %v3554, %v3591
    %v3608 = vlaneseq
    %v3609 = vshrl.u32 %v3608, 7
    %v3610 = vsub.s32 0, %v3609
    %v3611 = vrot.slane %v3600, %v3610
    %v3612 = vlaneseq
    %v3613 = vshrl.u32 %v3612, 7
    %v3614 = vsub.s32 0, %v3613
    %v3615 = vrot.slane %v3601, %v3614
    %v3616 = vlaneseq
    %v3617 = vshrl.u32 %v3616, 7
    %v3618 = vsub.s32 0, %v3617
    %v3619 = vrot.slane %v3602, %v3618
    %v3620 = vlaneseq
    %v3621 = vshrl.u32 %v3620, 7
    %v3622 = vsub.s32 0, %v3621
    %v3623 = vrot.slane %v3603, %v3622
    %v3624 = vlaneseq
    %v3625 = vshrl.u32 %v3624, 7
    %v3626 = vsub.s32 0, %v3625
    %v3627 = vrot.slane %v3604, %v3626
    %v3628 = vlaneseq
    %v3629 = vshrl.u32 %v3628, 7
    %v3630 = vsub.s32 0, %v3629
    %v3631 = vrot.slane %v3605, %v3630
    %v3632 = vlaneseq
    %v3633 = vshrl.u32 %v3632, 7
    %v3634 = vsub.s32 0, %v3633
    %v3635 = vrot.slane %v3606, %v3634
    %v3636 = vlaneseq
    %v3637 = vshrl.u32 %v3636, 7
    %v3638 = vsub.s32 0, %v3637
    %v3639 = vrot.slane %v3607, %v3638
    %v3640 = vmul.f32 %v3179, %v3611
    %v3641 = vmul.f32 %v3180, %v3615
    %v3642 = vmul.f32 %v3181, %v3619
    %v3643 = vmul.f32 %v3182, %v3623
    %v3644 = vmul.f32 %v3183, %v3627
    %v3645 = vmul.f32 %v3184, %v3631
    %v3646 = vmul.f32 %v3185, %v3635
    %v3647 = vmul.f32 %v3186, %v3639
    %v3648 = vmul.f32 %v3187, %v3611
    %v3649 = vmul.f32 %v3188, %v3615
    %v3650 = vmul.f32 %v3189, %v3619
    %v3651 = vmul.f32 %v3190, %v3623
    %v3652 = vmul.f32 %v3191, %v3627
    %v3653 = vmul.f32 %v3192, %v3631
    %v3654 = vmul.f32 %v3193, %v3635
    %v3655 = vmul.f32 %v3194, %v3639
    %v3656 = vmul.f32 %v3195, %v3611
    %v3657 = vmul.f32 %v3196, %v3615
    %v3658 = vmul.f32 %v3197, %v3619
    %v3659 = vmul.f32 %v3198, %v3623
    %v3660 = vmul.f32 %v3199, %v3627
    %v3661 = vmul.f32 %v3200, %v3631
    %v3662 = vmul.f32 %v3201, %v3635
    %v3663 = vmul.f32 %v3202, %v3639
    %v3664 = vmul.f32 %v3203, %v3611
    %v3665 = vmul.f32 %v3204, %v3615
    %v3666 = vmul.f32 %v3205, %v3619
    %v3667 = vmul.f32 %v3206, %v3623
    %v3668 = vmul.f32 %v3207, %v3627
    %v3669 = vmul.f32 %v3208, %v3631
    %v3670 = vmul.f32 %v3209, %v3635
    %v3671 = vmul.f32 %v3210, %v3639
    %s3672 = scalar_lea.vmem [#allocation4], 3
    %v3673 = vld [vmem:[%s3672] ss:$8 sm:$0xf]
    %v3674 = vld [vmem:[%s3672] ss:$8 sm:$0xf0]
    %v3675 = vor.u32 %v3673, %v3674
    %v3677 = vlaneseq
    %v3678 = vshrl.u32 %v3677, 7
    %v3679 = vsub.s32 0, %v3678
    %v3680 = vrot.slane %v3675, %v3679
    %v3681 = vlaneseq
    %v3682 = vshrl.u32 %v3681, 7
    %v3683 = vsub.s32 1, %v3682
    %v3684 = vrot.slane %v3675, %v3683
    %v3685 = vlaneseq
    %v3686 = vshrl.u32 %v3685, 7
    %v3687 = vsub.s32 2, %v3686
    %v3688 = vrot.slane %v3675, %v3687
    %v3689 = vlaneseq
    %v3690 = vshrl.u32 %v3689, 7
    %v3691 = vsub.s32 3, %v3690
    %v3692 = vrot.slane %v3675, %v3691
    %v3693 = vlaneseq
    %v3694 = vshrl.u32 %v3693, 7
    %v3695 = vsub.s32 4, %v3694
    %v3696 = vrot.slane %v3675, %v3695
    %v3697 = vlaneseq
    %v3698 = vshrl.u32 %v3697, 7
    %v3699 = vsub.s32 5, %v3698
    %v3700 = vrot.slane %v3675, %v3699
    %v3701 = vlaneseq
    %v3702 = vshrl.u32 %v3701, 7
    %v3703 = vsub.s32 6, %v3702
    %v3704 = vrot.slane %v3675, %v3703
    %v3705 = vlaneseq
    %v3706 = vshrl.u32 %v3705, 7
    %v3707 = vsub.s32 7, %v3706
    %v3708 = vrot.slane %v3675, %v3707
    %v3717 = vadd.f32 %v3640, %v3680
    %v3718 = vadd.f32 %v3641, %v3684
    %v3719 = vadd.f32 %v3642, %v3688
    %v3720 = vadd.f32 %v3643, %v3692
    %v3721 = vadd.f32 %v3644, %v3696
    %v3722 = vadd.f32 %v3645, %v3700
    %v3723 = vadd.f32 %v3646, %v3704
    %v3724 = vadd.f32 %v3647, %v3708
    %v3725 = vadd.f32 %v3648, %v3680
    %v3726 = vadd.f32 %v3649, %v3684
    %v3727 = vadd.f32 %v3650, %v3688
    %v3728 = vadd.f32 %v3651, %v3692
    %v3729 = vadd.f32 %v3652, %v3696
    %v3730 = vadd.f32 %v3653, %v3700
    %v3731 = vadd.f32 %v3654, %v3704
    %v3732 = vadd.f32 %v3655, %v3708
    %v3733 = vadd.f32 %v3656, %v3680
    %v3734 = vadd.f32 %v3657, %v3684
    %v3735 = vadd.f32 %v3658, %v3688
    %v3736 = vadd.f32 %v3659, %v3692
    %v3737 = vadd.f32 %v3660, %v3696
    %v3738 = vadd.f32 %v3661, %v3700
    %v3739 = vadd.f32 %v3662, %v3704
    %v3740 = vadd.f32 %v3663, %v3708
    %v3741 = vadd.f32 %v3664, %v3680
    %v3742 = vadd.f32 %v3665, %v3684
    %v3743 = vadd.f32 %v3666, %v3688
    %v3744 = vadd.f32 %v3667, %v3692
    %v3745 = vadd.f32 %v3668, %v3696
    %v3746 = vadd.f32 %v3669, %v3700
    %v3747 = vadd.f32 %v3670, %v3704
    %v3748 = vadd.f32 %v3671, %v3708
    %vm3749 = vcmp.ge.f32.partialorder %v3717, 0.0
    %vm3750 = vcmp.ge.f32.partialorder %v3718, 0.0
    %vm3751 = vcmp.ge.f32.partialorder %v3719, 0.0
    %vm3752 = vcmp.ge.f32.partialorder %v3720, 0.0
    %vm3753 = vcmp.ge.f32.partialorder %v3721, 0.0
    %vm3754 = vcmp.ge.f32.partialorder %v3722, 0.0
    %vm3755 = vcmp.ge.f32.partialorder %v3723, 0.0
    %vm3756 = vcmp.ge.f32.partialorder %v3724, 0.0
    %vm3757 = vcmp.ge.f32.partialorder %v3725, 0.0
    %vm3758 = vcmp.ge.f32.partialorder %v3726, 0.0
    %vm3759 = vcmp.ge.f32.partialorder %v3727, 0.0
    %vm3760 = vcmp.ge.f32.partialorder %v3728, 0.0
    %vm3761 = vcmp.ge.f32.partialorder %v3729, 0.0
    %vm3762 = vcmp.ge.f32.partialorder %v3730, 0.0
    %vm3763 = vcmp.ge.f32.partialorder %v3731, 0.0
    %vm3764 = vcmp.ge.f32.partialorder %v3732, 0.0
    %vm3765 = vcmp.ge.f32.partialorder %v3733, 0.0
    %vm3766 = vcmp.ge.f32.partialorder %v3734, 0.0
    %vm3767 = vcmp.ge.f32.partialorder %v3735, 0.0
    %vm3768 = vcmp.ge.f32.partialorder %v3736, 0.0
    %vm3769 = vcmp.ge.f32.partialorder %v3737, 0.0
    %vm3770 = vcmp.ge.f32.partialorder %v3738, 0.0
    %vm3771 = vcmp.ge.f32.partialorder %v3739, 0.0
    %vm3772 = vcmp.ge.f32.partialorder %v3740, 0.0
    %vm3773 = vcmp.ge.f32.partialorder %v3741, 0.0
    %vm3774 = vcmp.ge.f32.partialorder %v3742, 0.0
    %vm3775 = vcmp.ge.f32.partialorder %v3743, 0.0
    %vm3776 = vcmp.ge.f32.partialorder %v3744, 0.0
    %vm3777 = vcmp.ge.f32.partialorder %v3745, 0.0
    %vm3778 = vcmp.ge.f32.partialorder %v3746, 0.0
    %vm3779 = vcmp.ge.f32.partialorder %v3747, 0.0
    %vm3780 = vcmp.ge.f32.partialorder %v3748, 0.0
    %v3781 = vmul.f32 %v3717, 0.01
    %v3782 = vmul.f32 %v3718, 0.01
    %v3783 = vmul.f32 %v3719, 0.01
    %v3784 = vmul.f32 %v3720, 0.01
    %v3785 = vmul.f32 %v3721, 0.01
    %v3786 = vmul.f32 %v3722, 0.01
    %v3787 = vmul.f32 %v3723, 0.01
    %v3788 = vmul.f32 %v3724, 0.01
    %v3789 = vmul.f32 %v3725, 0.01
    %v3790 = vmul.f32 %v3726, 0.01
    %v3791 = vmul.f32 %v3727, 0.01
    %v3792 = vmul.f32 %v3728, 0.01
    %v3793 = vmul.f32 %v3729, 0.01
    %v3794 = vmul.f32 %v3730, 0.01
    %v3795 = vmul.f32 %v3731, 0.01
    %v3796 = vmul.f32 %v3732, 0.01
    %v3797 = vmul.f32 %v3733, 0.01
    %v3798 = vmul.f32 %v3734, 0.01
    %v3799 = vmul.f32 %v3735, 0.01
    %v3800 = vmul.f32 %v3736, 0.01
    %v3801 = vmul.f32 %v3737, 0.01
    %v3802 = vmul.f32 %v3738, 0.01
    %v3803 = vmul.f32 %v3739, 0.01
    %v3804 = vmul.f32 %v3740, 0.01
    %v3805 = vmul.f32 %v3741, 0.01
    %v3806 = vmul.f32 %v3742, 0.01
    %v3807 = vmul.f32 %v3743, 0.01
    %v3808 = vmul.f32 %v3744, 0.01
    %v3809 = vmul.f32 %v3745, 0.01
    %v3810 = vmul.f32 %v3746, 0.01
    %v3811 = vmul.f32 %v3747, 0.01
    %v3812 = vmul.f32 %v3748, 0.01
    %v3813 = vsel %vm3749, %v3717, %v3781
    %v3814 = vsel %vm3750, %v3718, %v3782
    %v3815 = vsel %vm3751, %v3719, %v3783
    %v3816 = vsel %vm3752, %v3720, %v3784
    %v3817 = vsel %vm3753, %v3721, %v3785
    %v3818 = vsel %vm3754, %v3722, %v3786
    %v3819 = vsel %vm3755, %v3723, %v3787
    %v3820 = vsel %vm3756, %v3724, %v3788
    %v3821 = vsel %vm3757, %v3725, %v3789
    %v3822 = vsel %vm3758, %v3726, %v3790
    %v3823 = vsel %vm3759, %v3727, %v3791
    %v3824 = vsel %vm3760, %v3728, %v3792
    %v3825 = vsel %vm3761, %v3729, %v3793
    %v3826 = vsel %vm3762, %v3730, %v3794
    %v3827 = vsel %vm3763, %v3731, %v3795
    %v3828 = vsel %vm3764, %v3732, %v3796
    %v3829 = vsel %vm3765, %v3733, %v3797
    %v3830 = vsel %vm3766, %v3734, %v3798
    %v3831 = vsel %vm3767, %v3735, %v3799
    %v3832 = vsel %vm3768, %v3736, %v3800
    %v3833 = vsel %vm3769, %v3737, %v3801
    %v3834 = vsel %vm3770, %v3738, %v3802
    %v3835 = vsel %vm3771, %v3739, %v3803
    %v3836 = vsel %vm3772, %v3740, %v3804
    %v3837 = vsel %vm3773, %v3741, %v3805
    %v3838 = vsel %vm3774, %v3742, %v3806
    %v3839 = vsel %vm3775, %v3743, %v3807
    %v3840 = vsel %vm3776, %v3744, %v3808
    %v3841 = vsel %vm3777, %v3745, %v3809
    %v3842 = vsel %vm3778, %v3746, %v3810
    %v3843 = vsel %vm3779, %v3747, %v3811
    %v3844 = vsel %vm3780, %v3748, %v3812
    %v3845 = vadd.f32 %v3813, %v3821
    %v3846 = vadd.f32 %v3845, %v3829
    %v3847 = vadd.f32 %v3846, %v3837
    %v3848 = vrot.slane %v3847, 4
    %v3849 = vadd.f32 %v3847, %v3848
    %v3850 = vrot.slane %v3849, 2
    %v3851 = vadd.f32 %v3849, %v3850
    %v3852 = vrot.slane %v3851, 1
    %v3853 = vadd.f32 %v3851, %v3852
    %v3854 = vadd.f32 %v3814, %v3822
    %v3855 = vadd.f32 %v3854, %v3830
    %v3856 = vadd.f32 %v3855, %v3838
    %v3857 = vrot.slane %v3856, 4
    %v3858 = vadd.f32 %v3856, %v3857
    %v3859 = vrot.slane %v3858, 2
    %v3860 = vadd.f32 %v3858, %v3859
    %v3861 = vrot.slane %v3860, 1
    %v3862 = vadd.f32 %v3860, %v3861
    %v3863 = vadd.f32 %v3815, %v3823
    %v3864 = vadd.f32 %v3863, %v3831
    %v3865 = vadd.f32 %v3864, %v3839
    %v3866 = vrot.slane %v3865, 4
    %v3867 = vadd.f32 %v3865, %v3866
    %v3868 = vrot.slane %v3867, 2
    %v3869 = vadd.f32 %v3867, %v3868
    %v3870 = vrot.slane %v3869, 1
    %v3871 = vadd.f32 %v3869, %v3870
    %v3872 = vadd.f32 %v3816, %v3824
    %v3873 = vadd.f32 %v3872, %v3832
    %v3874 = vadd.f32 %v3873, %v3840
    %v3875 = vrot.slane %v3874, 4
    %v3876 = vadd.f32 %v3874, %v3875
    %v3877 = vrot.slane %v3876, 2
    %v3878 = vadd.f32 %v3876, %v3877
    %v3879 = vrot.slane %v3878, 1
    %v3880 = vadd.f32 %v3878, %v3879
    %v3881 = vadd.f32 %v3817, %v3825
    %v3882 = vadd.f32 %v3881, %v3833
    %v3883 = vadd.f32 %v3882, %v3841
    %v3884 = vrot.slane %v3883, 4
    %v3885 = vadd.f32 %v3883, %v3884
    %v3886 = vrot.slane %v3885, 2
    %v3887 = vadd.f32 %v3885, %v3886
    %v3888 = vrot.slane %v3887, 1
    %v3889 = vadd.f32 %v3887, %v3888
    %v3890 = vadd.f32 %v3818, %v3826
    %v3891 = vadd.f32 %v3890, %v3834
    %v3892 = vadd.f32 %v3891, %v3842
    %v3893 = vrot.slane %v3892, 4
    %v3894 = vadd.f32 %v3892, %v3893
    %v3895 = vrot.slane %v3894, 2
    %v3896 = vadd.f32 %v3894, %v3895
    %v3897 = vrot.slane %v3896, 1
    %v3898 = vadd.f32 %v3896, %v3897
    %v3899 = vadd.f32 %v3819, %v3827
    %v3900 = vadd.f32 %v3899, %v3835
    %v3901 = vadd.f32 %v3900, %v3843
    %v3902 = vrot.slane %v3901, 4
    %v3903 = vadd.f32 %v3901, %v3902
    %v3904 = vrot.slane %v3903, 2
    %v3905 = vadd.f32 %v3903, %v3904
    %v3906 = vrot.slane %v3905, 1
    %v3907 = vadd.f32 %v3905, %v3906
    %v3908 = vadd.f32 %v3820, %v3828
    %v3909 = vadd.f32 %v3908, %v3836
    %v3910 = vadd.f32 %v3909, %v3844
    %v3911 = vrot.slane %v3910, 4
    %v3912 = vadd.f32 %v3910, %v3911
    %v3913 = vrot.slane %v3912, 2
    %v3914 = vadd.f32 %v3912, %v3913
    %v3915 = vrot.slane %v3914, 1
    %v3916 = vadd.f32 %v3914, %v3915
    %v3917 = vadd.f32 %v3853, %v3889
    %v3918 = vadd.f32 %v3862, %v3898
    %v3919 = vadd.f32 %v3871, %v3907
    %v3920 = vadd.f32 %v3880, %v3916
    %v3921 = vadd.f32 %v3917, %v3919
    %v3922 = vadd.f32 %v3918, %v3920
    %v3923 = vadd.f32 %v3919, %v3917
    %v3924 = vadd.f32 %v3920, %v3918
    %v3925 = vsel %vm876, %v3924, %v3922
    %v3926 = vsel %vm877, %v3921, %v3923
    %v3927 = vsel %vm878, %v3922, %v3924
    %v3928 = vsel %vm879, %v3923, %v3921
    %v3929 = vsel %vm880, %v3924, %v3922
    %v3930 = vsel %vm881, %v3921, %v3923
    %v3931 = vsel %vm882, %v3922, %v3924
    %v3932 = vsel %vm883, %v3923, %v3921
    %v3933 = vadd.f32 %v3921, %v3925
    %v3934 = vadd.f32 %v3922, %v3926
    %v3935 = vadd.f32 %v3923, %v3927
    %v3936 = vadd.f32 %v3924, %v3928
    %v3937 = vadd.f32 %v3921, %v3929
    %v3938 = vadd.f32 %v3922, %v3930
    %v3939 = vadd.f32 %v3923, %v3931
    %v3940 = vadd.f32 %v3924, %v3932
    %3941 = vrot.lane.b32.xlu0 %v3933, 64
    %v3942 = vpop.permute.xlu0 %3941
    %3943 = vrot.lane.b32.xlu0 %v3934, 64
    %v3944 = vpop.permute.xlu0 %3943
    %3945 = vrot.lane.b32.xlu0 %v3935, 64
    %v3946 = vpop.permute.xlu0 %3945
    %3947 = vrot.lane.b32.xlu0 %v3936, 64
    %v3948 = vpop.permute.xlu0 %3947
    %3949 = vrot.lane.b32.xlu0 %v3937, 64
    %v3950 = vpop.permute.xlu0 %3949
    %3951 = vrot.lane.b32.xlu0 %v3938, 64
    %v3952 = vpop.permute.xlu0 %3951
    %3953 = vrot.lane.b32.xlu0 %v3939, 64
    %v3954 = vpop.permute.xlu0 %3953
    %3955 = vrot.lane.b32.xlu0 %v3940, 64
    %v3956 = vpop.permute.xlu0 %3955
    %v3957 = vsel %vm843, %v3954, %v3956
    %v3958 = vsel %vm843, %v3952, %v3954
    %v3959 = vsel %vm843, %v3950, %v3952
    %v3960 = vsel %vm843, %v3948, %v3950
    %v3961 = vsel %vm843, %v3946, %v3948
    %v3962 = vsel %vm843, %v3944, %v3946
    %v3963 = vsel %vm843, %v3942, %v3944
    %v3964 = vsel %vm843, %v3956, %v3942
    %v3965 = vsel %vm860, %v3964, %v3963
    %v3966 = vsel %vm861, %v3963, %v3962
    %v3967 = vsel %vm862, %v3962, %v3961
    %v3968 = vsel %vm863, %v3961, %v3960
    %v3969 = vsel %vm864, %v3960, %v3959
    %v3970 = vsel %vm865, %v3959, %v3958
    %v3971 = vsel %vm866, %v3958, %v3957
    %v3972 = vsel %vm867, %v3957, %v3964
    %v3973 = vadd.f32 %v3933, %v3965
    %v3974 = vadd.f32 %v3934, %v3966
    %v3975 = vadd.f32 %v3935, %v3967
    %v3976 = vadd.f32 %v3936, %v3968
    %v3977 = vadd.f32 %v3937, %v3969
    %v3978 = vadd.f32 %v3938, %v3970
    %v3979 = vadd.f32 %v3939, %v3971
    %v3980 = vadd.f32 %v3940, %v3972
    %3981 = vrot.lane.b32.xlu0 %v3973, 16
    %v3982 = vpop.permute.xlu0 %3981
    %3983 = vrot.lane.b32.xlu0 %v3974, 16
    %v3984 = vpop.permute.xlu0 %3983
    %3985 = vrot.lane.b32.xlu0 %v3975, 16
    %v3986 = vpop.permute.xlu0 %3985
    %3987 = vrot.lane.b32.xlu0 %v3976, 16
    %v3988 = vpop.permute.xlu0 %3987
    %3989 = vrot.lane.b32.xlu0 %v3977, 16
    %v3990 = vpop.permute.xlu0 %3989
    %3991 = vrot.lane.b32.xlu0 %v3978, 16
    %v3992 = vpop.permute.xlu0 %3991
    %3993 = vrot.lane.b32.xlu0 %v3979, 16
    %v3994 = vpop.permute.xlu0 %3993
    %3995 = vrot.lane.b32.xlu0 %v3980, 16
    %v3996 = vpop.permute.xlu0 %3995
    %v3997 = vsel %vm802, %v3994, %v3996
    %v3998 = vsel %vm802, %v3992, %v3994
    %v3999 = vsel %vm802, %v3990, %v3992
    %v4000 = vsel %vm802, %v3988, %v3990
    %v4001 = vsel %vm802, %v3986, %v3988
    %v4002 = vsel %vm802, %v3984, %v3986
    %v4003 = vsel %vm802, %v3982, %v3984
    %v4004 = vsel %vm802, %v3996, %v3982
    %4005 = vrot.lane.b32.xlu0 %v3973, 112
    %v4006 = vpop.permute.xlu0 %4005
    %4007 = vrot.lane.b32.xlu0 %v3974, 112
    %v4008 = vpop.permute.xlu0 %4007
    %4009 = vrot.lane.b32.xlu0 %v3975, 112
    %v4010 = vpop.permute.xlu0 %4009
    %4011 = vrot.lane.b32.xlu0 %v3976, 112
    %v4012 = vpop.permute.xlu0 %4011
    %4013 = vrot.lane.b32.xlu0 %v3977, 112
    %v4014 = vpop.permute.xlu0 %4013
    %4015 = vrot.lane.b32.xlu0 %v3978, 112
    %v4016 = vpop.permute.xlu0 %4015
    %4017 = vrot.lane.b32.xlu0 %v3979, 112
    %v4018 = vpop.permute.xlu0 %4017
    %4019 = vrot.lane.b32.xlu0 %v3980, 112
    %v4020 = vpop.permute.xlu0 %4019
    %v4021 = vsel %vm1508, %v4018, %v4020
    %v4022 = vsel %vm1508, %v4016, %v4018
    %v4023 = vsel %vm1508, %v4014, %v4016
    %v4024 = vsel %vm1508, %v4012, %v4014
    %v4025 = vsel %vm1508, %v4010, %v4012
    %v4026 = vsel %vm1508, %v4008, %v4010
    %v4027 = vsel %vm1508, %v4006, %v4008
    %v4028 = vsel %vm1508, %v4020, %v4006
    %v4029 = vsel %vm819, %v4004, %v4027
    %v4030 = vsel %vm820, %v4003, %v4026
    %v4031 = vsel %vm821, %v4002, %v4025
    %v4032 = vsel %vm822, %v4001, %v4024
    %v4033 = vsel %vm823, %v4000, %v4023
    %v4034 = vsel %vm824, %v3999, %v4022
    %v4035 = vsel %vm825, %v3998, %v4021
    %v4036 = vsel %vm826, %v3997, %v4028
    %v4037 = vadd.f32 %v3973, %v4029
    %v4038 = vadd.f32 %v3974, %v4030
    %v4039 = vadd.f32 %v3975, %v4031
    %v4040 = vadd.f32 %v3976, %v4032
    %v4041 = vadd.f32 %v3977, %v4033
    %v4042 = vadd.f32 %v3978, %v4034
    %v4043 = vadd.f32 %v3979, %v4035
    %v4044 = vadd.f32 %v3980, %v4036
    %4045 = vrot.lane.b32.xlu0 %v4037, 8
    %v4046 = vpop.permute.xlu0 %4045
    %4047 = vrot.lane.b32.xlu0 %v4038, 8
    %v4048 = vpop.permute.xlu0 %4047
    %4049 = vrot.lane.b32.xlu0 %v4039, 8
    %v4050 = vpop.permute.xlu0 %4049
    %4051 = vrot.lane.b32.xlu0 %v4040, 8
    %v4052 = vpop.permute.xlu0 %4051
    %4053 = vrot.lane.b32.xlu0 %v4041, 8
    %v4054 = vpop.permute.xlu0 %4053
    %4055 = vrot.lane.b32.xlu0 %v4042, 8
    %v4056 = vpop.permute.xlu0 %4055
    %4057 = vrot.lane.b32.xlu0 %v4043, 8
    %v4058 = vpop.permute.xlu0 %4057
    %4059 = vrot.lane.b32.xlu0 %v4044, 8
    %v4060 = vpop.permute.xlu0 %4059
    %v4061 = vsel %vm761, %v4058, %v4060
    %v4062 = vsel %vm761, %v4056, %v4058
    %v4063 = vsel %vm761, %v4054, %v4056
    %v4064 = vsel %vm761, %v4052, %v4054
    %v4065 = vsel %vm761, %v4050, %v4052
    %v4066 = vsel %vm761, %v4048, %v4050
    %v4067 = vsel %vm761, %v4046, %v4048
    %v4068 = vsel %vm761, %v4060, %v4046
    %4069 = vrot.lane.b32.xlu0 %v4037, 120
    %v4070 = vpop.permute.xlu0 %4069
    %4071 = vrot.lane.b32.xlu0 %v4038, 120
    %v4072 = vpop.permute.xlu0 %4071
    %4073 = vrot.lane.b32.xlu0 %v4039, 120
    %v4074 = vpop.permute.xlu0 %4073
    %4075 = vrot.lane.b32.xlu0 %v4040, 120
    %v4076 = vpop.permute.xlu0 %4075
    %4077 = vrot.lane.b32.xlu0 %v4041, 120
    %v4078 = vpop.permute.xlu0 %4077
    %4079 = vrot.lane.b32.xlu0 %v4042, 120
    %v4080 = vpop.permute.xlu0 %4079
    %4081 = vrot.lane.b32.xlu0 %v4043, 120
    %v4082 = vpop.permute.xlu0 %4081
    %4083 = vrot.lane.b32.xlu0 %v4044, 120
    %v4084 = vpop.permute.xlu0 %4083
    %v4085 = vsel %vm2223, %v4082, %v4084
    %v4086 = vsel %vm2223, %v4080, %v4082
    %v4087 = vsel %vm2223, %v4078, %v4080
    %v4088 = vsel %vm2223, %v4076, %v4078
    %v4089 = vsel %vm2223, %v4074, %v4076
    %v4090 = vsel %vm2223, %v4072, %v4074
    %v4091 = vsel %vm2223, %v4070, %v4072
    %v4092 = vsel %vm2223, %v4084, %v4070
    %v4093 = vsel %vm778, %v4068, %v4091
    %v4094 = vsel %vm779, %v4067, %v4090
    %v4095 = vsel %vm780, %v4066, %v4089
    %v4096 = vsel %vm781, %v4065, %v4088
    %v4097 = vsel %vm782, %v4064, %v4087
    %v4098 = vsel %vm783, %v4063, %v4086
    %v4099 = vsel %vm784, %v4062, %v4085
    %v4100 = vsel %vm785, %v4061, %v4092
    %v4101 = vadd.f32 %v4037, %v4093
    %v4102 = vadd.f32 %v4038, %v4094
    %v4103 = vadd.f32 %v4039, %v4095
    %v4104 = vadd.f32 %v4040, %v4096
    %v4105 = vadd.f32 %v4041, %v4097
    %v4106 = vadd.f32 %v4042, %v4098
    %v4107 = vadd.f32 %v4043, %v4099
    %v4108 = vadd.f32 %v4044, %v4100
    %4109 = vrot.lane.b32.xlu0 %v4101, 4
    %v4110 = vpop.permute.xlu0 %4109
    %4111 = vrot.lane.b32.xlu0 %v4102, 4
    %v4112 = vpop.permute.xlu0 %4111
    %4113 = vrot.lane.b32.xlu0 %v4103, 4
    %v4114 = vpop.permute.xlu0 %4113
    %4115 = vrot.lane.b32.xlu0 %v4104, 4
    %v4116 = vpop.permute.xlu0 %4115
    %4117 = vrot.lane.b32.xlu0 %v4105, 4
    %v4118 = vpop.permute.xlu0 %4117
    %4119 = vrot.lane.b32.xlu0 %v4106, 4
    %v4120 = vpop.permute.xlu0 %4119
    %4121 = vrot.lane.b32.xlu0 %v4107, 4
    %v4122 = vpop.permute.xlu0 %4121
    %4123 = vrot.lane.b32.xlu0 %v4108, 4
    %v4124 = vpop.permute.xlu0 %4123
    %v4125 = vsel %vm720, %v4122, %v4124
    %v4126 = vsel %vm720, %v4120, %v4122
    %v4127 = vsel %vm720, %v4118, %v4120
    %v4128 = vsel %vm720, %v4116, %v4118
    %v4129 = vsel %vm720, %v4114, %v4116
    %v4130 = vsel %vm720, %v4112, %v4114
    %v4131 = vsel %vm720, %v4110, %v4112
    %v4132 = vsel %vm720, %v4124, %v4110
    %4133 = vrot.lane.b32.xlu0 %v4101, 124
    %v4134 = vpop.permute.xlu0 %4133
    %4135 = vrot.lane.b32.xlu0 %v4102, 124
    %v4136 = vpop.permute.xlu0 %4135
    %4137 = vrot.lane.b32.xlu0 %v4103, 124
    %v4138 = vpop.permute.xlu0 %4137
    %4139 = vrot.lane.b32.xlu0 %v4104, 124
    %v4140 = vpop.permute.xlu0 %4139
    %4141 = vrot.lane.b32.xlu0 %v4105, 124
    %v4142 = vpop.permute.xlu0 %4141
    %4143 = vrot.lane.b32.xlu0 %v4106, 124
    %v4144 = vpop.permute.xlu0 %4143
    %4145 = vrot.lane.b32.xlu0 %v4107, 124
    %v4146 = vpop.permute.xlu0 %4145
    %4147 = vrot.lane.b32.xlu0 %v4108, 124
    %v4148 = vpop.permute.xlu0 %4147
    %v4149 = vsel %vm3114, %v4146, %v4148
    %v4150 = vsel %vm3114, %v4144, %v4146
    %v4151 = vsel %vm3114, %v4142, %v4144
    %v4152 = vsel %vm3114, %v4140, %v4142
    %v4153 = vsel %vm3114, %v4138, %v4140
    %v4154 = vsel %vm3114, %v4136, %v4138
    %v4155 = vsel %vm3114, %v4134, %v4136
    %v4156 = vsel %vm3114, %v4148, %v4134
    %v4157 = vsel %vm737, %v4132, %v4155
    %v4158 = vsel %vm738, %v4131, %v4154
    %v4159 = vsel %vm739, %v4130, %v4153
    %v4160 = vsel %vm740, %v4129, %v4152
    %v4161 = vsel %vm741, %v4128, %v4151
    %v4162 = vsel %vm742, %v4127, %v4150
    %v4163 = vsel %vm743, %v4126, %v4149
    %v4164 = vsel %vm744, %v4125, %v4156
    %v4165 = vadd.f32 %v4101, %v4157
    %v4166 = vadd.f32 %v4102, %v4158
    %v4167 = vadd.f32 %v4103, %v4159
    %v4168 = vadd.f32 %v4104, %v4160
    %v4169 = vadd.f32 %v4105, %v4161
    %v4170 = vadd.f32 %v4106, %v4162
    %v4171 = vadd.f32 %v4107, %v4163
    %v4172 = vadd.f32 %v4108, %v4164
    %4173 = vrot.lane.b32.xlu0 %v4165, 2
    %v4174 = vpop.permute.xlu0 %4173
    %4175 = vrot.lane.b32.xlu0 %v4166, 2
    %v4176 = vpop.permute.xlu0 %4175
    %4177 = vrot.lane.b32.xlu0 %v4167, 2
    %v4178 = vpop.permute.xlu0 %4177
    %4179 = vrot.lane.b32.xlu0 %v4168, 2
    %v4180 = vpop.permute.xlu0 %4179
    %4181 = vrot.lane.b32.xlu0 %v4169, 2
    %v4182 = vpop.permute.xlu0 %4181
    %4183 = vrot.lane.b32.xlu0 %v4170, 2
    %v4184 = vpop.permute.xlu0 %4183
    %4185 = vrot.lane.b32.xlu0 %v4171, 2
    %v4186 = vpop.permute.xlu0 %4185
    %4187 = vrot.lane.b32.xlu0 %v4172, 2
    %v4188 = vpop.permute.xlu0 %4187
    %v4189 = vsel %vm679, %v4186, %v4188
    %v4190 = vsel %vm679, %v4184, %v4186
    %v4191 = vsel %vm679, %v4182, %v4184
    %v4192 = vsel %vm679, %v4180, %v4182
    %v4193 = vsel %vm679, %v4178, %v4180
    %v4194 = vsel %vm679, %v4176, %v4178
    %v4195 = vsel %vm679, %v4174, %v4176
    %v4196 = vsel %vm679, %v4188, %v4174
    %4197 = vrot.lane.b32.xlu0 %v4165, 126
    %v4198 = vpop.permute.xlu0 %4197
    %4199 = vrot.lane.b32.xlu0 %v4166, 126
    %v4200 = vpop.permute.xlu0 %4199
    %4201 = vrot.lane.b32.xlu0 %v4167, 126
    %v4202 = vpop.permute.xlu0 %4201
    %4203 = vrot.lane.b32.xlu0 %v4168, 126
    %v4204 = vpop.permute.xlu0 %4203
    %4205 = vrot.lane.b32.xlu0 %v4169, 126
    %v4206 = vpop.permute.xlu0 %4205
    %4207 = vrot.lane.b32.xlu0 %v4170, 126
    %v4208 = vpop.permute.xlu0 %4207
    %4209 = vrot.lane.b32.xlu0 %v4171, 126
    %v4210 = vpop.permute.xlu0 %4209
    %4211 = vrot.lane.b32.xlu0 %v4172, 126
    %v4212 = vpop.permute.xlu0 %4211
    %vm4213 = vcmp.lt.s32.totalorder %v655, 126
    %v4214 = vsel %vm4213, %v4210, %v4212
    %v4215 = vsel %vm4213, %v4208, %v4210
    %v4216 = vsel %vm4213, %v4206, %v4208
    %v4217 = vsel %vm4213, %v4204, %v4206
    %v4218 = vsel %vm4213, %v4202, %v4204
    %v4219 = vsel %vm4213, %v4200, %v4202
    %v4220 = vsel %vm4213, %v4198, %v4200
    %v4221 = vsel %vm4213, %v4212, %v4198
    %v4222 = vsel %vm696, %v4196, %v4220
    %v4223 = vsel %vm697, %v4195, %v4219
    %v4224 = vsel %vm698, %v4194, %v4218
    %v4225 = vsel %vm699, %v4193, %v4217
    %v4226 = vsel %vm700, %v4192, %v4216
    %v4227 = vsel %vm701, %v4191, %v4215
    %v4228 = vsel %vm702, %v4190, %v4214
    %v4229 = vsel %vm703, %v4189, %v4221
    %v4230 = vadd.f32 %v4165, %v4222
    %v4231 = vadd.f32 %v4166, %v4223
    %v4232 = vadd.f32 %v4167, %v4224
    %v4233 = vadd.f32 %v4168, %v4225
    %v4234 = vadd.f32 %v4169, %v4226
    %v4235 = vadd.f32 %v4170, %v4227
    %v4236 = vadd.f32 %v4171, %v4228
    %v4237 = vadd.f32 %v4172, %v4229
    %v4238 = vmul.f32 %v4230, 0.00012207031
    %v4239 = vmul.f32 %v4231, 0.00012207031
    %v4240 = vmul.f32 %v4232, 0.00012207031
    %v4241 = vmul.f32 %v4233, 0.00012207031
    %v4242 = vmul.f32 %v4234, 0.00012207031
    %v4243 = vmul.f32 %v4235, 0.00012207031
    %v4244 = vmul.f32 %v4236, 0.00012207031
    %v4245 = vmul.f32 %v4237, 0.00012207031
    %v4246 = vlaneseq
    %v4247 = vshrl.u32 %v4246, 7
    %v4248 = vsub.s32 0, %v4247
    %v4249 = vrot.slane %v4238, %v4248
    %v4250 = vlaneseq
    %v4251 = vshrl.u32 %v4250, 7
    %v4252 = vsub.s32 0, %v4251
    %v4253 = vrot.slane %v4239, %v4252
    %v4254 = vlaneseq
    %v4255 = vshrl.u32 %v4254, 7
    %v4256 = vsub.s32 0, %v4255
    %v4257 = vrot.slane %v4240, %v4256
    %v4258 = vlaneseq
    %v4259 = vshrl.u32 %v4258, 7
    %v4260 = vsub.s32 0, %v4259
    %v4261 = vrot.slane %v4241, %v4260
    %v4262 = vlaneseq
    %v4263 = vshrl.u32 %v4262, 7
    %v4264 = vsub.s32 0, %v4263
    %v4265 = vrot.slane %v4242, %v4264
    %v4266 = vlaneseq
    %v4267 = vshrl.u32 %v4266, 7
    %v4268 = vsub.s32 0, %v4267
    %v4269 = vrot.slane %v4243, %v4268
    %v4270 = vlaneseq
    %v4271 = vshrl.u32 %v4270, 7
    %v4272 = vsub.s32 0, %v4271
    %v4273 = vrot.slane %v4244, %v4272
    %v4274 = vlaneseq
    %v4275 = vshrl.u32 %v4274, 7
    %v4276 = vsub.s32 0, %v4275
    %v4277 = vrot.slane %v4245, %v4276
    %v4278 = vsub.f32 %v3813, %v4249
    %v4279 = vsub.f32 %v3814, %v4253
    %v4280 = vsub.f32 %v3815, %v4257
    %v4281 = vsub.f32 %v3816, %v4261
    %v4282 = vsub.f32 %v3817, %v4265
    %v4283 = vsub.f32 %v3818, %v4269
    %v4284 = vsub.f32 %v3819, %v4273
    %v4285 = vsub.f32 %v3820, %v4277
    %v4286 = vsub.f32 %v3821, %v4249
    %v4287 = vsub.f32 %v3822, %v4253
    %v4288 = vsub.f32 %v3823, %v4257
    %v4289 = vsub.f32 %v3824, %v4261
    %v4290 = vsub.f32 %v3825, %v4265
    %v4291 = vsub.f32 %v3826, %v4269
    %v4292 = vsub.f32 %v3827, %v4273
    %v4293 = vsub.f32 %v3828, %v4277
    %v4294 = vsub.f32 %v3829, %v4249
    %v4295 = vsub.f32 %v3830, %v4253
    %v4296 = vsub.f32 %v3831, %v4257
    %v4297 = vsub.f32 %v3832, %v4261
    %v4298 = vsub.f32 %v3833, %v4265
    %v4299 = vsub.f32 %v3834, %v4269
    %v4300 = vsub.f32 %v3835, %v4273
    %v4301 = vsub.f32 %v3836, %v4277
    %v4302 = vsub.f32 %v3837, %v4249
    %v4303 = vsub.f32 %v3838, %v4253
    %v4304 = vsub.f32 %v3839, %v4257
    %v4305 = vsub.f32 %v3840, %v4261
    %v4306 = vsub.f32 %v3841, %v4265
    %v4307 = vsub.f32 %v3842, %v4269
    %v4308 = vsub.f32 %v3843, %v4273
    %v4309 = vsub.f32 %v3844, %v4277
    %v4310 = vmul.f32 %v4278, %v4278
    %v4311 = vmul.f32 %v4279, %v4279
    %v4312 = vmul.f32 %v4280, %v4280
    %v4313 = vmul.f32 %v4281, %v4281
    %v4314 = vmul.f32 %v4282, %v4282
    %v4315 = vmul.f32 %v4283, %v4283
    %v4316 = vmul.f32 %v4284, %v4284
    %v4317 = vmul.f32 %v4285, %v4285
    %v4318 = vmul.f32 %v4286, %v4286
    %v4319 = vmul.f32 %v4287, %v4287
    %v4320 = vmul.f32 %v4288, %v4288
    %v4321 = vmul.f32 %v4289, %v4289
    %v4322 = vmul.f32 %v4290, %v4290
    %v4323 = vmul.f32 %v4291, %v4291
    %v4324 = vmul.f32 %v4292, %v4292
    %v4325 = vmul.f32 %v4293, %v4293
    %v4326 = vmul.f32 %v4294, %v4294
    %v4327 = vmul.f32 %v4295, %v4295
    %v4328 = vmul.f32 %v4296, %v4296
    %v4329 = vmul.f32 %v4297, %v4297
    %v4330 = vmul.f32 %v4298, %v4298
    %v4331 = vmul.f32 %v4299, %v4299
    %v4332 = vmul.f32 %v4300, %v4300
    %v4333 = vmul.f32 %v4301, %v4301
    %v4334 = vmul.f32 %v4302, %v4302
    %v4335 = vmul.f32 %v4303, %v4303
    %v4336 = vmul.f32 %v4304, %v4304
    %v4337 = vmul.f32 %v4305, %v4305
    %v4338 = vmul.f32 %v4306, %v4306
    %v4339 = vmul.f32 %v4307, %v4307
    %v4340 = vmul.f32 %v4308, %v4308
    %v4341 = vmul.f32 %v4309, %v4309
    %v4342 = vadd.f32 %v4310, %v4318
    %v4343 = vadd.f32 %v4342, %v4326
    %v4344 = vadd.f32 %v4343, %v4334
    %v4345 = vrot.slane %v4344, 4
    %v4346 = vadd.f32 %v4344, %v4345
    %v4347 = vrot.slane %v4346, 2
    %v4348 = vadd.f32 %v4346, %v4347
    %v4349 = vrot.slane %v4348, 1
    %v4350 = vadd.f32 %v4348, %v4349
    %v4351 = vadd.f32 %v4311, %v4319
    %v4352 = vadd.f32 %v4351, %v4327
    %v4353 = vadd.f32 %v4352, %v4335
    %v4354 = vrot.slane %v4353, 4
    %v4355 = vadd.f32 %v4353, %v4354
    %v4356 = vrot.slane %v4355, 2
    %v4357 = vadd.f32 %v4355, %v4356
    %v4358 = vrot.slane %v4357, 1
    %v4359 = vadd.f32 %v4357, %v4358
    %v4360 = vadd.f32 %v4312, %v4320
    %v4361 = vadd.f32 %v4360, %v4328
    %v4362 = vadd.f32 %v4361, %v4336
    %v4363 = vrot.slane %v4362, 4
    %v4364 = vadd.f32 %v4362, %v4363
    %v4365 = vrot.slane %v4364, 2
    %v4366 = vadd.f32 %v4364, %v4365
    %v4367 = vrot.slane %v4366, 1
    %v4368 = vadd.f32 %v4366, %v4367
    %v4369 = vadd.f32 %v4313, %v4321
    %v4370 = vadd.f32 %v4369, %v4329
    %v4371 = vadd.f32 %v4370, %v4337
    %v4372 = vrot.slane %v4371, 4
    %v4373 = vadd.f32 %v4371, %v4372
    %v4374 = vrot.slane %v4373, 2
    %v4375 = vadd.f32 %v4373, %v4374
    %v4376 = vrot.slane %v4375, 1
    %v4377 = vadd.f32 %v4375, %v4376
    %v4378 = vadd.f32 %v4314, %v4322
    %v4379 = vadd.f32 %v4378, %v4330
    %v4380 = vadd.f32 %v4379, %v4338
    %v4381 = vrot.slane %v4380, 4
    %v4382 = vadd.f32 %v4380, %v4381
    %v4383 = vrot.slane %v4382, 2
    %v4384 = vadd.f32 %v4382, %v4383
    %v4385 = vrot.slane %v4384, 1
    %v4386 = vadd.f32 %v4384, %v4385
    %v4387 = vadd.f32 %v4315, %v4323
    %v4388 = vadd.f32 %v4387, %v4331
    %v4389 = vadd.f32 %v4388, %v4339
    %v4390 = vrot.slane %v4389, 4
    %v4391 = vadd.f32 %v4389, %v4390
    %v4392 = vrot.slane %v4391, 2
    %v4393 = vadd.f32 %v4391, %v4392
    %v4394 = vrot.slane %v4393, 1
    %v4395 = vadd.f32 %v4393, %v4394
    %v4396 = vadd.f32 %v4316, %v4324
    %v4397 = vadd.f32 %v4396, %v4332
    %v4398 = vadd.f32 %v4397, %v4340
    %v4399 = vrot.slane %v4398, 4
    %v4400 = vadd.f32 %v4398, %v4399
    %v4401 = vrot.slane %v4400, 2
    %v4402 = vadd.f32 %v4400, %v4401
    %v4403 = vrot.slane %v4402, 1
    %v4404 = vadd.f32 %v4402, %v4403
    %v4405 = vadd.f32 %v4317, %v4325
    %v4406 = vadd.f32 %v4405, %v4333
    %v4407 = vadd.f32 %v4406, %v4341
    %v4408 = vrot.slane %v4407, 4
    %v4409 = vadd.f32 %v4407, %v4408
    %v4410 = vrot.slane %v4409, 2
    %v4411 = vadd.f32 %v4409, %v4410
    %v4412 = vrot.slane %v4411, 1
    %v4413 = vadd.f32 %v4411, %v4412
    %v4414 = vadd.f32 %v4350, %v4386
    %v4415 = vadd.f32 %v4359, %v4395
    %v4416 = vadd.f32 %v4368, %v4404
    %v4417 = vadd.f32 %v4377, %v4413
    %v4418 = vadd.f32 %v4414, %v4416
    %v4419 = vadd.f32 %v4415, %v4417
    %v4420 = vadd.f32 %v4416, %v4414
    %v4421 = vadd.f32 %v4417, %v4415
    %v4422 = vsel %vm876, %v4421, %v4419
    %v4423 = vsel %vm877, %v4418, %v4420
    %v4424 = vsel %vm878, %v4419, %v4421
    %v4425 = vsel %vm879, %v4420, %v4418
    %v4426 = vsel %vm880, %v4421, %v4419
    %v4427 = vsel %vm881, %v4418, %v4420
    %v4428 = vsel %vm882, %v4419, %v4421
    %v4429 = vsel %vm883, %v4420, %v4418
    %v4430 = vadd.f32 %v4418, %v4422
    %v4431 = vadd.f32 %v4419, %v4423
    %v4432 = vadd.f32 %v4420, %v4424
    %v4433 = vadd.f32 %v4421, %v4425
    %v4434 = vadd.f32 %v4418, %v4426
    %v4435 = vadd.f32 %v4419, %v4427
    %v4436 = vadd.f32 %v4420, %v4428
    %v4437 = vadd.f32 %v4421, %v4429
    %4438 = vrot.lane.b32.xlu0 %v4430, 64
    %v4439 = vpop.permute.xlu0 %4438
    %4440 = vrot.lane.b32.xlu0 %v4431, 64
    %v4441 = vpop.permute.xlu0 %4440
    %4442 = vrot.lane.b32.xlu0 %v4432, 64
    %v4443 = vpop.permute.xlu0 %4442
    %4444 = vrot.lane.b32.xlu0 %v4433, 64
    %v4445 = vpop.permute.xlu0 %4444
    %4446 = vrot.lane.b32.xlu0 %v4434, 64
    %v4447 = vpop.permute.xlu0 %4446
    %4448 = vrot.lane.b32.xlu0 %v4435, 64
    %v4449 = vpop.permute.xlu0 %4448
    %4450 = vrot.lane.b32.xlu0 %v4436, 64
    %v4451 = vpop.permute.xlu0 %4450
    %4452 = vrot.lane.b32.xlu0 %v4437, 64
    %v4453 = vpop.permute.xlu0 %4452
    %v4454 = vsel %vm843, %v4451, %v4453
    %v4455 = vsel %vm843, %v4449, %v4451
    %v4456 = vsel %vm843, %v4447, %v4449
    %v4457 = vsel %vm843, %v4445, %v4447
    %v4458 = vsel %vm843, %v4443, %v4445
    %v4459 = vsel %vm843, %v4441, %v4443
    %v4460 = vsel %vm843, %v4439, %v4441
    %v4461 = vsel %vm843, %v4453, %v4439
    %v4462 = vsel %vm860, %v4461, %v4460
    %v4463 = vsel %vm861, %v4460, %v4459
    %v4464 = vsel %vm862, %v4459, %v4458
    %v4465 = vsel %vm863, %v4458, %v4457
    %v4466 = vsel %vm864, %v4457, %v4456
    %v4467 = vsel %vm865, %v4456, %v4455
    %v4468 = vsel %vm866, %v4455, %v4454
    %v4469 = vsel %vm867, %v4454, %v4461
    %v4470 = vadd.f32 %v4430, %v4462
    %v4471 = vadd.f32 %v4431, %v4463
    %v4472 = vadd.f32 %v4432, %v4464
    %v4473 = vadd.f32 %v4433, %v4465
    %v4474 = vadd.f32 %v4434, %v4466
    %v4475 = vadd.f32 %v4435, %v4467
    %v4476 = vadd.f32 %v4436, %v4468
    %v4477 = vadd.f32 %v4437, %v4469
    %4478 = vrot.lane.b32.xlu0 %v4470, 16
    %v4479 = vpop.permute.xlu0 %4478
    %4480 = vrot.lane.b32.xlu0 %v4471, 16
    %v4481 = vpop.permute.xlu0 %4480
    %4482 = vrot.lane.b32.xlu0 %v4472, 16
    %v4483 = vpop.permute.xlu0 %4482
    %4484 = vrot.lane.b32.xlu0 %v4473, 16
    %v4485 = vpop.permute.xlu0 %4484
    %4486 = vrot.lane.b32.xlu0 %v4474, 16
    %v4487 = vpop.permute.xlu0 %4486
    %4488 = vrot.lane.b32.xlu0 %v4475, 16
    %v4489 = vpop.permute.xlu0 %4488
    %4490 = vrot.lane.b32.xlu0 %v4476, 16
    %v4491 = vpop.permute.xlu0 %4490
    %4492 = vrot.lane.b32.xlu0 %v4477, 16
    %v4493 = vpop.permute.xlu0 %4492
    %v4494 = vsel %vm802, %v4491, %v4493
    %v4495 = vsel %vm802, %v4489, %v4491
    %v4496 = vsel %vm802, %v4487, %v4489
    %v4497 = vsel %vm802, %v4485, %v4487
    %v4498 = vsel %vm802, %v4483, %v4485
    %v4499 = vsel %vm802, %v4481, %v4483
    %v4500 = vsel %vm802, %v4479, %v4481
    %v4501 = vsel %vm802, %v4493, %v4479
    %4502 = vrot.lane.b32.xlu0 %v4470, 112
    %v4503 = vpop.permute.xlu0 %4502
    %4504 = vrot.lane.b32.xlu0 %v4471, 112
    %v4505 = vpop.permute.xlu0 %4504
    %4506 = vrot.lane.b32.xlu0 %v4472, 112
    %v4507 = vpop.permute.xlu0 %4506
    %4508 = vrot.lane.b32.xlu0 %v4473, 112
    %v4509 = vpop.permute.xlu0 %4508
    %4510 = vrot.lane.b32.xlu0 %v4474, 112
    %v4511 = vpop.permute.xlu0 %4510
    %4512 = vrot.lane.b32.xlu0 %v4475, 112
    %v4513 = vpop.permute.xlu0 %4512
    %4514 = vrot.lane.b32.xlu0 %v4476, 112
    %v4515 = vpop.permute.xlu0 %4514
    %4516 = vrot.lane.b32.xlu0 %v4477, 112
    %v4517 = vpop.permute.xlu0 %4516
    %v4518 = vsel %vm1508, %v4515, %v4517
    %v4519 = vsel %vm1508, %v4513, %v4515
    %v4520 = vsel %vm1508, %v4511, %v4513
    %v4521 = vsel %vm1508, %v4509, %v4511
    %v4522 = vsel %vm1508, %v4507, %v4509
    %v4523 = vsel %vm1508, %v4505, %v4507
    %v4524 = vsel %vm1508, %v4503, %v4505
    %v4525 = vsel %vm1508, %v4517, %v4503
    %v4526 = vsel %vm819, %v4501, %v4524
    %v4527 = vsel %vm820, %v4500, %v4523
    %v4528 = vsel %vm821, %v4499, %v4522
    %v4529 = vsel %vm822, %v4498, %v4521
    %v4530 = vsel %vm823, %v4497, %v4520
    %v4531 = vsel %vm824, %v4496, %v4519
    %v4532 = vsel %vm825, %v4495, %v4518
    %v4533 = vsel %vm826, %v4494, %v4525
    %v4534 = vadd.f32 %v4470, %v4526
    %v4535 = vadd.f32 %v4471, %v4527
    %v4536 = vadd.f32 %v4472, %v4528
    %v4537 = vadd.f32 %v4473, %v4529
    %v4538 = vadd.f32 %v4474, %v4530
    %v4539 = vadd.f32 %v4475, %v4531
    %v4540 = vadd.f32 %v4476, %v4532
    %v4541 = vadd.f32 %v4477, %v4533
    %4542 = vrot.lane.b32.xlu0 %v4534, 8
    %v4543 = vpop.permute.xlu0 %4542
    %4544 = vrot.lane.b32.xlu0 %v4535, 8
    %v4545 = vpop.permute.xlu0 %4544
    %4546 = vrot.lane.b32.xlu0 %v4536, 8
    %v4547 = vpop.permute.xlu0 %4546
    %4548 = vrot.lane.b32.xlu0 %v4537, 8
    %v4549 = vpop.permute.xlu0 %4548
    %4550 = vrot.lane.b32.xlu0 %v4538, 8
    %v4551 = vpop.permute.xlu0 %4550
    %4552 = vrot.lane.b32.xlu0 %v4539, 8
    %v4553 = vpop.permute.xlu0 %4552
    %4554 = vrot.lane.b32.xlu0 %v4540, 8
    %v4555 = vpop.permute.xlu0 %4554
    %4556 = vrot.lane.b32.xlu0 %v4541, 8
    %v4557 = vpop.permute.xlu0 %4556
    %v4558 = vsel %vm761, %v4555, %v4557
    %v4559 = vsel %vm761, %v4553, %v4555
    %v4560 = vsel %vm761, %v4551, %v4553
    %v4561 = vsel %vm761, %v4549, %v4551
    %v4562 = vsel %vm761, %v4547, %v4549
    %v4563 = vsel %vm761, %v4545, %v4547
    %v4564 = vsel %vm761, %v4543, %v4545
    %v4565 = vsel %vm761, %v4557, %v4543
    %4566 = vrot.lane.b32.xlu0 %v4534, 120
    %v4567 = vpop.permute.xlu0 %4566
    %4568 = vrot.lane.b32.xlu0 %v4535, 120
    %v4569 = vpop.permute.xlu0 %4568
    %4570 = vrot.lane.b32.xlu0 %v4536, 120
    %v4571 = vpop.permute.xlu0 %4570
    %4572 = vrot.lane.b32.xlu0 %v4537, 120
    %v4573 = vpop.permute.xlu0 %4572
    %4574 = vrot.lane.b32.xlu0 %v4538, 120
    %v4575 = vpop.permute.xlu0 %4574
    %4576 = vrot.lane.b32.xlu0 %v4539, 120
    %v4577 = vpop.permute.xlu0 %4576
    %4578 = vrot.lane.b32.xlu0 %v4540, 120
    %v4579 = vpop.permute.xlu0 %4578
    %4580 = vrot.lane.b32.xlu0 %v4541, 120
    %v4581 = vpop.permute.xlu0 %4580
    %v4582 = vsel %vm2223, %v4579, %v4581
    %v4583 = vsel %vm2223, %v4577, %v4579
    %v4584 = vsel %vm2223, %v4575, %v4577
    %v4585 = vsel %vm2223, %v4573, %v4575
    %v4586 = vsel %vm2223, %v4571, %v4573
    %v4587 = vsel %vm2223, %v4569, %v4571
    %v4588 = vsel %vm2223, %v4567, %v4569
    %v4589 = vsel %vm2223, %v4581, %v4567
    %v4590 = vsel %vm778, %v4565, %v4588
    %v4591 = vsel %vm779, %v4564, %v4587
    %v4592 = vsel %vm780, %v4563, %v4586
    %v4593 = vsel %vm781, %v4562, %v4585
    %v4594 = vsel %vm782, %v4561, %v4584
    %v4595 = vsel %vm783, %v4560, %v4583
    %v4596 = vsel %vm784, %v4559, %v4582
    %v4597 = vsel %vm785, %v4558, %v4589
    %v4598 = vadd.f32 %v4534, %v4590
    %v4599 = vadd.f32 %v4535, %v4591
    %v4600 = vadd.f32 %v4536, %v4592
    %v4601 = vadd.f32 %v4537, %v4593
    %v4602 = vadd.f32 %v4538, %v4594
    %v4603 = vadd.f32 %v4539, %v4595
    %v4604 = vadd.f32 %v4540, %v4596
    %v4605 = vadd.f32 %v4541, %v4597
    %4606 = vrot.lane.b32.xlu0 %v4598, 4
    %v4607 = vpop.permute.xlu0 %4606
    %4608 = vrot.lane.b32.xlu0 %v4599, 4
    %v4609 = vpop.permute.xlu0 %4608
    %4610 = vrot.lane.b32.xlu0 %v4600, 4
    %v4611 = vpop.permute.xlu0 %4610
    %4612 = vrot.lane.b32.xlu0 %v4601, 4
    %v4613 = vpop.permute.xlu0 %4612
    %4614 = vrot.lane.b32.xlu0 %v4602, 4
    %v4615 = vpop.permute.xlu0 %4614
    %4616 = vrot.lane.b32.xlu0 %v4603, 4
    %v4617 = vpop.permute.xlu0 %4616
    %4618 = vrot.lane.b32.xlu0 %v4604, 4
    %v4619 = vpop.permute.xlu0 %4618
    %4620 = vrot.lane.b32.xlu0 %v4605, 4
    %v4621 = vpop.permute.xlu0 %4620
    %v4622 = vsel %vm720, %v4619, %v4621
    %v4623 = vsel %vm720, %v4617, %v4619
    %v4624 = vsel %vm720, %v4615, %v4617
    %v4625 = vsel %vm720, %v4613, %v4615
    %v4626 = vsel %vm720, %v4611, %v4613
    %v4627 = vsel %vm720, %v4609, %v4611
    %v4628 = vsel %vm720, %v4607, %v4609
    %v4629 = vsel %vm720, %v4621, %v4607
    %4630 = vrot.lane.b32.xlu0 %v4598, 124
    %v4631 = vpop.permute.xlu0 %4630
    %4632 = vrot.lane.b32.xlu0 %v4599, 124
    %v4633 = vpop.permute.xlu0 %4632
    %4634 = vrot.lane.b32.xlu0 %v4600, 124
    %v4635 = vpop.permute.xlu0 %4634
    %4636 = vrot.lane.b32.xlu0 %v4601, 124
    %v4637 = vpop.permute.xlu0 %4636
    %4638 = vrot.lane.b32.xlu0 %v4602, 124
    %v4639 = vpop.permute.xlu0 %4638
    %4640 = vrot.lane.b32.xlu0 %v4603, 124
    %v4641 = vpop.permute.xlu0 %4640
    %4642 = vrot.lane.b32.xlu0 %v4604, 124
    %v4643 = vpop.permute.xlu0 %4642
    %4644 = vrot.lane.b32.xlu0 %v4605, 124
    %v4645 = vpop.permute.xlu0 %4644
    %v4646 = vsel %vm3114, %v4643, %v4645
    %v4647 = vsel %vm3114, %v4641, %v4643
    %v4648 = vsel %vm3114, %v4639, %v4641
    %v4649 = vsel %vm3114, %v4637, %v4639
    %v4650 = vsel %vm3114, %v4635, %v4637
    %v4651 = vsel %vm3114, %v4633, %v4635
    %v4652 = vsel %vm3114, %v4631, %v4633
    %v4653 = vsel %vm3114, %v4645, %v4631
    %v4654 = vsel %vm737, %v4629, %v4652
    %v4655 = vsel %vm738, %v4628, %v4651
    %v4656 = vsel %vm739, %v4627, %v4650
    %v4657 = vsel %vm740, %v4626, %v4649
    %v4658 = vsel %vm741, %v4625, %v4648
    %v4659 = vsel %vm742, %v4624, %v4647
    %v4660 = vsel %vm743, %v4623, %v4646
    %v4661 = vsel %vm744, %v4622, %v4653
    %v4662 = vadd.f32 %v4598, %v4654
    %v4663 = vadd.f32 %v4599, %v4655
    %v4664 = vadd.f32 %v4600, %v4656
    %v4665 = vadd.f32 %v4601, %v4657
    %v4666 = vadd.f32 %v4602, %v4658
    %v4667 = vadd.f32 %v4603, %v4659
    %v4668 = vadd.f32 %v4604, %v4660
    %v4669 = vadd.f32 %v4605, %v4661
    %4670 = vrot.lane.b32.xlu0 %v4662, 2
    %v4671 = vpop.permute.xlu0 %4670
    %4672 = vrot.lane.b32.xlu0 %v4663, 2
    %v4673 = vpop.permute.xlu0 %4672
    %4674 = vrot.lane.b32.xlu0 %v4664, 2
    %v4675 = vpop.permute.xlu0 %4674
    %4676 = vrot.lane.b32.xlu0 %v4665, 2
    %v4677 = vpop.permute.xlu0 %4676
    %4678 = vrot.lane.b32.xlu0 %v4666, 2
    %v4679 = vpop.permute.xlu0 %4678
    %4680 = vrot.lane.b32.xlu0 %v4667, 2
    %v4681 = vpop.permute.xlu0 %4680
    %4682 = vrot.lane.b32.xlu0 %v4668, 2
    %v4683 = vpop.permute.xlu0 %4682
    %4684 = vrot.lane.b32.xlu0 %v4669, 2
    %v4685 = vpop.permute.xlu0 %4684
    %v4686 = vsel %vm679, %v4683, %v4685
    %v4687 = vsel %vm679, %v4681, %v4683
    %v4688 = vsel %vm679, %v4679, %v4681
    %v4689 = vsel %vm679, %v4677, %v4679
    %v4690 = vsel %vm679, %v4675, %v4677
    %v4691 = vsel %vm679, %v4673, %v4675
    %v4692 = vsel %vm679, %v4671, %v4673
    %v4693 = vsel %vm679, %v4685, %v4671
    %4694 = vrot.lane.b32.xlu0 %v4662, 126
    %v4695 = vpop.permute.xlu0 %4694
    %4696 = vrot.lane.b32.xlu0 %v4663, 126
    %v4697 = vpop.permute.xlu0 %4696
    %4698 = vrot.lane.b32.xlu0 %v4664, 126
    %v4699 = vpop.permute.xlu0 %4698
    %4700 = vrot.lane.b32.xlu0 %v4665, 126
    %v4701 = vpop.permute.xlu0 %4700
    %4702 = vrot.lane.b32.xlu0 %v4666, 126
    %v4703 = vpop.permute.xlu0 %4702
    %4704 = vrot.lane.b32.xlu0 %v4667, 126
    %v4705 = vpop.permute.xlu0 %4704
    %4706 = vrot.lane.b32.xlu0 %v4668, 126
    %v4707 = vpop.permute.xlu0 %4706
    %4708 = vrot.lane.b32.xlu0 %v4669, 126
    %v4709 = vpop.permute.xlu0 %4708
    %v4710 = vsel %vm4213, %v4707, %v4709
    %v4711 = vsel %vm4213, %v4705, %v4707
    %v4712 = vsel %vm4213, %v4703, %v4705
    %v4713 = vsel %vm4213, %v4701, %v4703
    %v4714 = vsel %vm4213, %v4699, %v4701
    %v4715 = vsel %vm4213, %v4697, %v4699
    %v4716 = vsel %vm4213, %v4695, %v4697
    %v4717 = vsel %vm4213, %v4709, %v4695
    %v4718 = vsel %vm696, %v4693, %v4716
    %v4719 = vsel %vm697, %v4692, %v4715
    %v4720 = vsel %vm698, %v4691, %v4714
    %v4721 = vsel %vm699, %v4690, %v4713
    %v4722 = vsel %vm700, %v4689, %v4712
    %v4723 = vsel %vm701, %v4688, %v4711
    %v4724 = vsel %vm702, %v4687, %v4710
    %v4725 = vsel %vm703, %v4686, %v4717
    %v4726 = vadd.f32 %v4662, %v4718
    %v4727 = vadd.f32 %v4663, %v4719
    %v4728 = vadd.f32 %v4664, %v4720
    %v4729 = vadd.f32 %v4665, %v4721
    %v4730 = vadd.f32 %v4666, %v4722
    %v4731 = vadd.f32 %v4667, %v4723
    %v4732 = vadd.f32 %v4668, %v4724
    %v4733 = vadd.f32 %v4669, %v4725
    %v4734 = vmul.f32 %v4726, 0.00012207031
    %v4735 = vmul.f32 %v4727, 0.00012207031
    %v4736 = vmul.f32 %v4728, 0.00012207031
    %v4737 = vmul.f32 %v4729, 0.00012207031
    %v4738 = vmul.f32 %v4730, 0.00012207031
    %v4739 = vmul.f32 %v4731, 0.00012207031
    %v4740 = vmul.f32 %v4732, 0.00012207031
    %v4741 = vmul.f32 %v4733, 0.00012207031
    %v4742 = vadd.f32 %v4734, 1e-05
    %v4743 = vadd.f32 %v4735, 1e-05
    %v4744 = vadd.f32 %v4736, 1e-05
    %v4745 = vadd.f32 %v4737, 1e-05
    %v4746 = vadd.f32 %v4738, 1e-05
    %v4747 = vadd.f32 %v4739, 1e-05
    %v4748 = vadd.f32 %v4740, 1e-05
    %v4749 = vadd.f32 %v4741, 1e-05
    %v4750 = vrsqrt.pop %v4742
    %v4751 = vrsqrt.pop %v4743
    %v4752 = vrsqrt.pop %v4744
    %v4753 = vrsqrt.pop %v4745
    %v4754 = vrsqrt.pop %v4746
    %v4755 = vrsqrt.pop %v4747
    %v4756 = vrsqrt.pop %v4748
    %v4757 = vrsqrt.pop %v4749
    %s4758 = scalar_lea.vmem [#allocation2], 4
    %v4759 = vld [vmem:[%s4758] ss:$8 sm:$0xf]
    %v4760 = vld [vmem:[%s4758] ss:$8 sm:$0xf0]
    %v4761 = vor.u32 %v4759, %v4760
    %v4763 = vlaneseq
    %v4764 = vshrl.u32 %v4763, 7
    %v4765 = vsub.s32 0, %v4764
    %v4766 = vrot.slane %v4761, %v4765
    %v4767 = vlaneseq
    %v4768 = vshrl.u32 %v4767, 7
    %v4769 = vsub.s32 1, %v4768
    %v4770 = vrot.slane %v4761, %v4769
    %v4771 = vlaneseq
    %v4772 = vshrl.u32 %v4771, 7
    %v4773 = vsub.s32 2, %v4772
    %v4774 = vrot.slane %v4761, %v4773
    %v4775 = vlaneseq
    %v4776 = vshrl.u32 %v4775, 7
    %v4777 = vsub.s32 3, %v4776
    %v4778 = vrot.slane %v4761, %v4777
    %v4779 = vlaneseq
    %v4780 = vshrl.u32 %v4779, 7
    %v4781 = vsub.s32 4, %v4780
    %v4782 = vrot.slane %v4761, %v4781
    %v4783 = vlaneseq
    %v4784 = vshrl.u32 %v4783, 7
    %v4785 = vsub.s32 5, %v4784
    %v4786 = vrot.slane %v4761, %v4785
    %v4787 = vlaneseq
    %v4788 = vshrl.u32 %v4787, 7
    %v4789 = vsub.s32 6, %v4788
    %v4790 = vrot.slane %v4761, %v4789
    %v4791 = vlaneseq
    %v4792 = vshrl.u32 %v4791, 7
    %v4793 = vsub.s32 7, %v4792
    %v4794 = vrot.slane %v4761, %v4793
    %v4803 = vmul.f32 %v4750, %v4766
    %v4804 = vmul.f32 %v4751, %v4770
    %v4805 = vmul.f32 %v4752, %v4774
    %v4806 = vmul.f32 %v4753, %v4778
    %v4807 = vmul.f32 %v4754, %v4782
    %v4808 = vmul.f32 %v4755, %v4786
    %v4809 = vmul.f32 %v4756, %v4790
    %v4810 = vmul.f32 %v4757, %v4794
    %v4811 = vlaneseq
    %v4812 = vshrl.u32 %v4811, 7
    %v4813 = vsub.s32 0, %v4812
    %v4814 = vrot.slane %v4803, %v4813
    %v4815 = vlaneseq
    %v4816 = vshrl.u32 %v4815, 7
    %v4817 = vsub.s32 0, %v4816
    %v4818 = vrot.slane %v4804, %v4817
    %v4819 = vlaneseq
    %v4820 = vshrl.u32 %v4819, 7
    %v4821 = vsub.s32 0, %v4820
    %v4822 = vrot.slane %v4805, %v4821
    %v4823 = vlaneseq
    %v4824 = vshrl.u32 %v4823, 7
    %v4825 = vsub.s32 0, %v4824
    %v4826 = vrot.slane %v4806, %v4825
    %v4827 = vlaneseq
    %v4828 = vshrl.u32 %v4827, 7
    %v4829 = vsub.s32 0, %v4828
    %v4830 = vrot.slane %v4807, %v4829
    %v4831 = vlaneseq
    %v4832 = vshrl.u32 %v4831, 7
    %v4833 = vsub.s32 0, %v4832
    %v4834 = vrot.slane %v4808, %v4833
    %v4835 = vlaneseq
    %v4836 = vshrl.u32 %v4835, 7
    %v4837 = vsub.s32 0, %v4836
    %v4838 = vrot.slane %v4809, %v4837
    %v4839 = vlaneseq
    %v4840 = vshrl.u32 %v4839, 7
    %v4841 = vsub.s32 0, %v4840
    %v4842 = vrot.slane %v4810, %v4841
    %v4843 = vmul.f32 %v4278, %v4814
    %v4844 = vmul.f32 %v4279, %v4818
    %v4845 = vmul.f32 %v4280, %v4822
    %v4846 = vmul.f32 %v4281, %v4826
    %v4847 = vmul.f32 %v4282, %v4830
    %v4848 = vmul.f32 %v4283, %v4834
    %v4849 = vmul.f32 %v4284, %v4838
    %v4850 = vmul.f32 %v4285, %v4842
    %v4851 = vmul.f32 %v4286, %v4814
    %v4852 = vmul.f32 %v4287, %v4818
    %v4853 = vmul.f32 %v4288, %v4822
    %v4854 = vmul.f32 %v4289, %v4826
    %v4855 = vmul.f32 %v4290, %v4830
    %v4856 = vmul.f32 %v4291, %v4834
    %v4857 = vmul.f32 %v4292, %v4838
    %v4858 = vmul.f32 %v4293, %v4842
    %v4859 = vmul.f32 %v4294, %v4814
    %v4860 = vmul.f32 %v4295, %v4818
    %v4861 = vmul.f32 %v4296, %v4822
    %v4862 = vmul.f32 %v4297, %v4826
    %v4863 = vmul.f32 %v4298, %v4830
    %v4864 = vmul.f32 %v4299, %v4834
    %v4865 = vmul.f32 %v4300, %v4838
    %v4866 = vmul.f32 %v4301, %v4842
    %v4867 = vmul.f32 %v4302, %v4814
    %v4868 = vmul.f32 %v4303, %v4818
    %v4869 = vmul.f32 %v4304, %v4822
    %v4870 = vmul.f32 %v4305, %v4826
    %v4871 = vmul.f32 %v4306, %v4830
    %v4872 = vmul.f32 %v4307, %v4834
    %v4873 = vmul.f32 %v4308, %v4838
    %v4874 = vmul.f32 %v4309, %v4842
    %s4875 = scalar_lea.vmem [#allocation4], 4
    %v4876 = vld [vmem:[%s4875] ss:$8 sm:$0xf]
    %v4877 = vld [vmem:[%s4875] ss:$8 sm:$0xf0]
    %v4878 = vor.u32 %v4876, %v4877
    %v4880 = vlaneseq
    %v4881 = vshrl.u32 %v4880, 7
    %v4882 = vsub.s32 0, %v4881
    %v4883 = vrot.slane %v4878, %v4882
    %v4884 = vlaneseq
    %v4885 = vshrl.u32 %v4884, 7
    %v4886 = vsub.s32 1, %v4885
    %v4887 = vrot.slane %v4878, %v4886
    %v4888 = vlaneseq
    %v4889 = vshrl.u32 %v4888, 7
    %v4890 = vsub.s32 2, %v4889
    %v4891 = vrot.slane %v4878, %v4890
    %v4892 = vlaneseq
    %v4893 = vshrl.u32 %v4892, 7
    %v4894 = vsub.s32 3, %v4893
    %v4895 = vrot.slane %v4878, %v4894
    %v4896 = vlaneseq
    %v4897 = vshrl.u32 %v4896, 7
    %v4898 = vsub.s32 4, %v4897
    %v4899 = vrot.slane %v4878, %v4898
    %v4900 = vlaneseq
    %v4901 = vshrl.u32 %v4900, 7
    %v4902 = vsub.s32 5, %v4901
    %v4903 = vrot.slane %v4878, %v4902
    %v4904 = vlaneseq
    %v4905 = vshrl.u32 %v4904, 7
    %v4906 = vsub.s32 6, %v4905
    %v4907 = vrot.slane %v4878, %v4906
    %v4908 = vlaneseq
    %v4909 = vshrl.u32 %v4908, 7
    %v4910 = vsub.s32 7, %v4909
    %v4911 = vrot.slane %v4878, %v4910
    %v4920 = vadd.f32 %v4843, %v4883
    %v4921 = vadd.f32 %v4844, %v4887
    %v4922 = vadd.f32 %v4845, %v4891
    %v4923 = vadd.f32 %v4846, %v4895
    %v4924 = vadd.f32 %v4847, %v4899
    %v4925 = vadd.f32 %v4848, %v4903
    %v4926 = vadd.f32 %v4849, %v4907
    %v4927 = vadd.f32 %v4850, %v4911
    %v4928 = vadd.f32 %v4851, %v4883
    %v4929 = vadd.f32 %v4852, %v4887
    %v4930 = vadd.f32 %v4853, %v4891
    %v4931 = vadd.f32 %v4854, %v4895
    %v4932 = vadd.f32 %v4855, %v4899
    %v4933 = vadd.f32 %v4856, %v4903
    %v4934 = vadd.f32 %v4857, %v4907
    %v4935 = vadd.f32 %v4858, %v4911
    %v4936 = vadd.f32 %v4859, %v4883
    %v4937 = vadd.f32 %v4860, %v4887
    %v4938 = vadd.f32 %v4861, %v4891
    %v4939 = vadd.f32 %v4862, %v4895
    %v4940 = vadd.f32 %v4863, %v4899
    %v4941 = vadd.f32 %v4864, %v4903
    %v4942 = vadd.f32 %v4865, %v4907
    %v4943 = vadd.f32 %v4866, %v4911
    %v4944 = vadd.f32 %v4867, %v4883
    %v4945 = vadd.f32 %v4868, %v4887
    %v4946 = vadd.f32 %v4869, %v4891
    %v4947 = vadd.f32 %v4870, %v4895
    %v4948 = vadd.f32 %v4871, %v4899
    %v4949 = vadd.f32 %v4872, %v4903
    %v4950 = vadd.f32 %v4873, %v4907
    %v4951 = vadd.f32 %v4874, %v4911
    %vm4952 = vcmp.ge.f32.partialorder %v4920, 0.0
    %vm4953 = vcmp.ge.f32.partialorder %v4921, 0.0
    %vm4954 = vcmp.ge.f32.partialorder %v4922, 0.0
    %vm4955 = vcmp.ge.f32.partialorder %v4923, 0.0
    %vm4956 = vcmp.ge.f32.partialorder %v4924, 0.0
    %vm4957 = vcmp.ge.f32.partialorder %v4925, 0.0
    %vm4958 = vcmp.ge.f32.partialorder %v4926, 0.0
    %vm4959 = vcmp.ge.f32.partialorder %v4927, 0.0
    %vm4960 = vcmp.ge.f32.partialorder %v4928, 0.0
    %vm4961 = vcmp.ge.f32.partialorder %v4929, 0.0
    %vm4962 = vcmp.ge.f32.partialorder %v4930, 0.0
    %vm4963 = vcmp.ge.f32.partialorder %v4931, 0.0
    %vm4964 = vcmp.ge.f32.partialorder %v4932, 0.0
    %vm4965 = vcmp.ge.f32.partialorder %v4933, 0.0
    %vm4966 = vcmp.ge.f32.partialorder %v4934, 0.0
    %vm4967 = vcmp.ge.f32.partialorder %v4935, 0.0
    %vm4968 = vcmp.ge.f32.partialorder %v4936, 0.0
    %vm4969 = vcmp.ge.f32.partialorder %v4937, 0.0
    %vm4970 = vcmp.ge.f32.partialorder %v4938, 0.0
    %vm4971 = vcmp.ge.f32.partialorder %v4939, 0.0
    %vm4972 = vcmp.ge.f32.partialorder %v4940, 0.0
    %vm4973 = vcmp.ge.f32.partialorder %v4941, 0.0
    %vm4974 = vcmp.ge.f32.partialorder %v4942, 0.0
    %vm4975 = vcmp.ge.f32.partialorder %v4943, 0.0
    %vm4976 = vcmp.ge.f32.partialorder %v4944, 0.0
    %vm4977 = vcmp.ge.f32.partialorder %v4945, 0.0
    %vm4978 = vcmp.ge.f32.partialorder %v4946, 0.0
    %vm4979 = vcmp.ge.f32.partialorder %v4947, 0.0
    %vm4980 = vcmp.ge.f32.partialorder %v4948, 0.0
    %vm4981 = vcmp.ge.f32.partialorder %v4949, 0.0
    %vm4982 = vcmp.ge.f32.partialorder %v4950, 0.0
    %vm4983 = vcmp.ge.f32.partialorder %v4951, 0.0
    %v4984 = vmul.f32 %v4920, 0.01
    %v4985 = vmul.f32 %v4921, 0.01
    %v4986 = vmul.f32 %v4922, 0.01
    %v4987 = vmul.f32 %v4923, 0.01
    %v4988 = vmul.f32 %v4924, 0.01
    %v4989 = vmul.f32 %v4925, 0.01
    %v4990 = vmul.f32 %v4926, 0.01
    %v4991 = vmul.f32 %v4927, 0.01
    %v4992 = vmul.f32 %v4928, 0.01
    %v4993 = vmul.f32 %v4929, 0.01
    %v4994 = vmul.f32 %v4930, 0.01
    %v4995 = vmul.f32 %v4931, 0.01
    %v4996 = vmul.f32 %v4932, 0.01
    %v4997 = vmul.f32 %v4933, 0.01
    %v4998 = vmul.f32 %v4934, 0.01
    %v4999 = vmul.f32 %v4935, 0.01
    %v5000 = vmul.f32 %v4936, 0.01
    %v5001 = vmul.f32 %v4937, 0.01
    %v5002 = vmul.f32 %v4938, 0.01
    %v5003 = vmul.f32 %v4939, 0.01
    %v5004 = vmul.f32 %v4940, 0.01
    %v5005 = vmul.f32 %v4941, 0.01
    %v5006 = vmul.f32 %v4942, 0.01
    %v5007 = vmul.f32 %v4943, 0.01
    %v5008 = vmul.f32 %v4944, 0.01
    %v5009 = vmul.f32 %v4945, 0.01
    %v5010 = vmul.f32 %v4946, 0.01
    %v5011 = vmul.f32 %v4947, 0.01
    %v5012 = vmul.f32 %v4948, 0.01
    %v5013 = vmul.f32 %v4949, 0.01
    %v5014 = vmul.f32 %v4950, 0.01
    %v5015 = vmul.f32 %v4951, 0.01
    %v5016 = vsel %vm4952, %v4920, %v4984
    %v5017 = vsel %vm4953, %v4921, %v4985
    %v5018 = vsel %vm4954, %v4922, %v4986
    %v5019 = vsel %vm4955, %v4923, %v4987
    %v5020 = vsel %vm4956, %v4924, %v4988
    %v5021 = vsel %vm4957, %v4925, %v4989
    %v5022 = vsel %vm4958, %v4926, %v4990
    %v5023 = vsel %vm4959, %v4927, %v4991
    %v5024 = vsel %vm4960, %v4928, %v4992
    %v5025 = vsel %vm4961, %v4929, %v4993
    %v5026 = vsel %vm4962, %v4930, %v4994
    %v5027 = vsel %vm4963, %v4931, %v4995
    %v5028 = vsel %vm4964, %v4932, %v4996
    %v5029 = vsel %vm4965, %v4933, %v4997
    %v5030 = vsel %vm4966, %v4934, %v4998
    %v5031 = vsel %vm4967, %v4935, %v4999
    %v5032 = vsel %vm4968, %v4936, %v5000
    %v5033 = vsel %vm4969, %v4937, %v5001
    %v5034 = vsel %vm4970, %v4938, %v5002
    %v5035 = vsel %vm4971, %v4939, %v5003
    %v5036 = vsel %vm4972, %v4940, %v5004
    %v5037 = vsel %vm4973, %v4941, %v5005
    %v5038 = vsel %vm4974, %v4942, %v5006
    %v5039 = vsel %vm4975, %v4943, %v5007
    %v5040 = vsel %vm4976, %v4944, %v5008
    %v5041 = vsel %vm4977, %v4945, %v5009
    %v5042 = vsel %vm4978, %v4946, %v5010
    %v5043 = vsel %vm4979, %v4947, %v5011
    %v5044 = vsel %vm4980, %v4948, %v5012
    %v5045 = vsel %vm4981, %v4949, %v5013
    %v5046 = vsel %vm4982, %v4950, %v5014
    %v5047 = vsel %vm4983, %v4951, %v5015
    %v5048 = vtanh.pop %v5016
    %v5049 = vtanh.pop %v5017
    %v5050 = vtanh.pop %v5018
    %v5051 = vtanh.pop %v5019
    %v5052 = vtanh.pop %v5020
    %v5053 = vtanh.pop %v5021
    %v5054 = vtanh.pop %v5022
    %v5055 = vtanh.pop %v5023
    %v5056 = vtanh.pop %v5024
    %v5057 = vtanh.pop %v5025
    %v5058 = vtanh.pop %v5026
    %v5059 = vtanh.pop %v5027
    %v5060 = vtanh.pop %v5028
    %v5061 = vtanh.pop %v5029
    %v5062 = vtanh.pop %v5030
    %v5063 = vtanh.pop %v5031
    %v5064 = vtanh.pop %v5032
    %v5065 = vtanh.pop %v5033
    %v5066 = vtanh.pop %v5034
    %v5067 = vtanh.pop %v5035
    %v5068 = vtanh.pop %v5036
    %v5069 = vtanh.pop %v5037
    %v5070 = vtanh.pop %v5038
    %v5071 = vtanh.pop %v5039
    %v5072 = vtanh.pop %v5040
    %v5073 = vtanh.pop %v5041
    %v5074 = vtanh.pop %v5042
    %v5075 = vtanh.pop %v5043
    %v5076 = vtanh.pop %v5044
    %v5077 = vtanh.pop %v5045
    %v5078 = vtanh.pop %v5046
    %v5079 = vtanh.pop %v5047
    %5080 = vst [vmem:[%s4] sm:$0xff] %v5048
    %5081 = vst [vmem:[%s4 + $0x8] sm:$0xff] %v5049
    %5082 = vst [vmem:[%s4 + $0x10] sm:$0xff] %v5050
    %5083 = vst [vmem:[%s4 + $0x18] sm:$0xff] %v5051
    %5084 = vst [vmem:[%s4 + $0x20] sm:$0xff] %v5052
    %5085 = vst [vmem:[%s4 + $0x28] sm:$0xff] %v5053
    %5086 = vst [vmem:[%s4 + $0x30] sm:$0xff] %v5054
    %5087 = vst [vmem:[%s4 + $0x38] sm:$0xff] %v5055
    %5088 = vst [vmem:[%s4 + $0x40] sm:$0xff] %v5056
    %5089 = vst [vmem:[%s4 + $0x48] sm:$0xff] %v5057
    %5090 = vst [vmem:[%s4 + $0x50] sm:$0xff] %v5058
    %5091 = vst [vmem:[%s4 + $0x58] sm:$0xff] %v5059
    %5092 = vst [vmem:[%s4 + $0x60] sm:$0xff] %v5060
    %5093 = vst [vmem:[%s4 + $0x68] sm:$0xff] %v5061
    %5094 = vst [vmem:[%s4 + $0x70] sm:$0xff] %v5062
    %5095 = vst [vmem:[%s4 + $0x78] sm:$0xff] %v5063
    %5096 = vst [vmem:[%s4 + $0x80] sm:$0xff] %v5064
    %5097 = vst [vmem:[%s4 + $0x88] sm:$0xff] %v5065
    %5098 = vst [vmem:[%s4 + $0x90] sm:$0xff] %v5066
    %5099 = vst [vmem:[%s4 + $0x98] sm:$0xff] %v5067
    %5100 = vst [vmem:[%s4 + $0xa0] sm:$0xff] %v5068
    %5101 = vst [vmem:[%s4 + $0xa8] sm:$0xff] %v5069
    %5102 = vst [vmem:[%s4 + $0xb0] sm:$0xff] %v5070
    %5103 = vst [vmem:[%s4 + $0xb8] sm:$0xff] %v5071
    %5104 = vst [vmem:[%s4 + $0xc0] sm:$0xff] %v5072
    %5105 = vst [vmem:[%s4 + $0xc8] sm:$0xff] %v5073
    %5106 = vst [vmem:[%s4 + $0xd0] sm:$0xff] %v5074
    %5107 = vst [vmem:[%s4 + $0xd8] sm:$0xff] %v5075
    %5108 = vst [vmem:[%s4 + $0xe0] sm:$0xff] %v5076
    %5109 = vst [vmem:[%s4 + $0xe8] sm:$0xff] %v5077
    %5110 = vst [vmem:[%s4 + $0xf0] sm:$0xff] %v5078
    %5111 = vst [vmem:[%s4 + $0xf8] sm:$0xff] %v5079
    // Predicated region
    $region26: #{ps_generator_forward.1} parent=1 // pred_check
      _
    $region27: #{ps_generator_forward.1} parent=1 // pred_check_branch
      %5113 = sbr.rel (0) target = $region29
    $region28: #{ps_generator_forward.1} parent=1 // pred_region
      _
    $region29: #{ps_generator_forward.1} parent=1 // pred_fallthru
      _
    // Predicated region
    $region30: #{ps_generator_forward.1} parent=1 // pred_check
      _
    $region31: #{ps_generator_forward.1} parent=1 // pred_check_branch
      %5115 = sbr.rel (0) target = $region33
    $region32: #{ps_generator_forward.1} parent=1 // pred_region
      _
    $region33: #{ps_generator_forward.1} parent=1 // pred_fallthru
      _
    %5116 = vsyncpa [#allocation3], 1
    %5117 = vsyncpa [#allocation5], 1

</llo_original>
